<compile_context>
chip_gen: v6e
topology: v6e:2x2x1
jax: 0.10.0
libtpu: 0.0.40
codegen_flags: <defaults>
</compile_context>

<pallas_src>
import functools

import jax
import jax.numpy as jnp
import numpy as np
from jax.experimental import pallas as pl
from jax.experimental.pallas import tpu as pltpu


def _round_up(a, b):
    return ((a + b - 1) // b) * b


def _aux_head_kernel(x_ref, wp_ref, gamma_ref, beta_ref, w2_ref, w3_ref, b3_ref,
                     out_ref, sum_ref, sq_ref, *, bn_count, po2):
    """Grid = (2, num_batch_tiles).  Axis 0 is the pass: 0 = BN stats, 1 = head."""
    p = pl.program_id(0)
    b = pl.program_id(1)

    # --- ReLU -> AvgPool(5, s=2) -> Conv1x1(C->128), fused as one MXU matmul -----------
    # x_ref: (tile_n, C*H*W) f32 (NCHW flat order); wp_ref: (C*H*W, Po*Po*128) bf16.
    v = jnp.maximum(x_ref[...], 0.0)
    h1 = jnp.dot(v.astype(jnp.bfloat16), wp_ref[...],
                 preferred_element_type=jnp.float32)          # (tile_n, Po*Po*128) f32
    # column layout of h1: (oh, ow, channel)  ->  index (oh*Po + ow)*128 + k

    # --- pass 0: accumulate global (training-mode) BatchNorm statistics ----------------
    @pl.when((p == 0) & (b == 0))
    def _init_stats():
        sum_ref[...] = jnp.zeros_like(sum_ref)
        sq_ref[...] = jnp.zeros_like(sq_ref)
        # pass-0 output goes to a dedicated dummy block; make it deterministic once.
        out_ref[...] = jnp.zeros_like(out_ref)

    @pl.when(p == 0)
    def _accumulate():
        sum_ref[...] += jnp.sum(h1, axis=0, keepdims=True)            # (1, Po*Po*128)
        sq_ref[...] += jnp.sum(h1 * h1, axis=0, keepdims=True)

    # --- pass 1: BN + ReLU + Conv2x2(128->768) + ReLU + Linear --------------------------
    @pl.when(p == 1)
    def _head():
        inv_cnt = 1.0 / float(bn_count)
        s = sum_ref[...]
        q = sq_ref[...]
        # fold the Po*Po pooled positions into per-channel statistics (static unroll,
        # 128-lane-aligned slices only).
        mu = jnp.zeros((1, 128), jnp.float32)
        ex2 = jnp.zeros((1, 128), jnp.float32)
        for i in range(po2):
            mu = mu + s[:, i * 128:(i + 1) * 128]
            ex2 = ex2 + q[:, i * 128:(i + 1) * 128]
        mu = mu * inv_cnt
        var = jnp.maximum(ex2 * inv_cnt - mu * mu, 0.0)
        scale = gamma_ref[...] * jax.lax.rsqrt(var + 1e-5)            # (1, 128)
        shift = beta_ref[...] - mu * scale
        # broadcast per-channel scale/shift to h1's (oh, ow, k) column layout
        scale_w = jnp.concatenate([scale] * po2, axis=1)              # (1, Po*Po*128)
        shift_w = jnp.concatenate([shift] * po2, axis=1)

        hn = jnp.maximum(h1 * scale_w + shift_w, 0.0)                 # BN + ReLU

        # Conv2d(128, 768, 2) on the 2x2 map == matmul over the flattened (kh,kw,cin) patch
        h2 = jnp.dot(hn.astype(jnp.bfloat16), w2_ref[...],
                     preferred_element_type=jnp.float32)              # (tile_n, 768)
        h2 = jnp.maximum(h2, 0.0)

        logits = jnp.dot(h2.astype(jnp.bfloat16), w3_ref[...],
                         preferred_element_type=jnp.float32) + b3_ref[...]
        out_ref[...] = logits                                         # lane-dense store


def prepare_params(params, *, C, H, W):
    """One-time conversion of PyTorch-layout weights into kernel-friendly operands."""
    Po = (H - 5) // 2 + 1
    PoW = (W - 5) // 2 + 1
    assert Po == 2 and PoW == 2, \
        "Linear(768) requires a 2x2 pooled map (input spatial size must be 7 or 8)"

    # AvgPool(5, stride=2, pad=0) as a constant (H*W, Po*Po) matrix (1/25 per window).
    # count_include_pad is irrelevant (no padding).
    pool = np.zeros((H * W, Po * PoW), np.float32)
    for oh in range(Po):
        for ow in range(PoW):
            for dh in range(5):
                for dw in range(5):
                    pool[(oh * 2 + dh) * W + (ow * 2 + dw), oh * PoW + ow] = 1.0 / 25.0
    pool = jnp.asarray(pool)

    # Conv2d(C, 128, 1) weight (128, C, 1, 1) -> (C, 128)
    w1 = jnp.transpose(params["conv1_w"].reshape(128, C), (1, 0)).astype(jnp.float32)
    # Fuse pool-then-conv1 (both linear; the ReLU precedes the pool, so they commute):
    #   Wp[c*H*W + s, p*128 + k] = pool[s, p] * W1[c, k]
    wp = (pool[None, :, :, None] * w1[:, None, None, :])              # (C, H*W, Po*Po, 128)
    wp = wp.reshape(C * H * W, Po * PoW * 128).astype(jnp.bfloat16)

    gamma = params["bn_gamma"].reshape(1, 128).astype(jnp.float32)
    beta = params["bn_beta"].reshape(1, 128).astype(jnp.float32)

    # Conv2d(128, 768, 2) weight (768,128,2,2) -> (kh, kw, cin, cout) -> (512, 768)
    w2 = jnp.transpose(params["conv2_w"], (2, 3, 1, 0)).reshape(Po * PoW * 128, 768)
    w2 = w2.astype(jnp.bfloat16)

    # Linear(768, nc): pad the class dim to a multiple of 128 for a lane-dense final store.
    nc = params["fc_w"].shape[0]
    nc_pad = _round_up(max(nc, 1), 128)
    w3 = jnp.zeros((768, nc_pad), jnp.float32)
    w3 = w3.at[:, :nc].set(jnp.transpose(params["fc_w"], (1, 0))).astype(jnp.bfloat16)
    b3 = jnp.zeros((1, nc_pad), jnp.float32).at[:, :nc].set(params["fc_b"].reshape(1, nc))

    return dict(wp=wp, gamma=gamma, beta=beta, w2=w2, w3=w3, b3=b3,
                C=C, H=H, W=W, Po=Po, num_classes=nc, nc_pad=nc_pad)


def auxiliary_head_imagenet(x_nchw, prepped):
    """x_nchw: (N, C, H, W) float32, PyTorch layout."""
    C, H, W = prepped["C"], prepped["H"], prepped["W"]
    Po, nc, nc_pad = prepped["Po"], prepped["num_classes"], prepped["nc_pad"]
    N = x_nchw.shape[0]
    assert x_nchw.shape[1:] == (C, H, W), x_nchw.shape

    chw = C * H * W
    po2 = Po * Po

    # NCHW -> (N, C*H*W) is a free contiguous view; the fused pool+conv weight consumes
    # the NCHW flat order directly, so no NHWC transpose is needed anywhere.
    x2 = x_nchw.reshape(N, chw).astype(jnp.float32)

    # Batch tile: multiple of 8 sublanes and an MXU-friendly M.  Pad N with zero rows:
    # zero rows contribute exactly 0 to the BN sums, and we divide by the *true* count,
    # so padding does not change the batch statistics.
    tile_n = 256 if N >= 256 else 128
    n_pad = _round_up(N, tile_n)
    if n_pad != N:
        x2 = jnp.pad(x2, ((0, n_pad - N), (0, 0)))
    nbt = n_pad // tile_n

    kernel = functools.partial(_aux_head_kernel, bn_count=N * po2, po2=po2)

    # Output carries one extra "dummy" tile: pass 0 maps there, so every real output block
    # is written exactly once (by pass 1) and no block is revisited non-consecutively.
    out_rows = n_pad + tile_n

    const = lambda p, b: (0, 0)
    in_specs = [
        pl.BlockSpec((tile_n, chw), lambda p, b: (b, 0)),      # x tile (double-buffered)
        pl.BlockSpec((chw, po2 * 128), const),                 # fused pool+conv1 weight
        pl.BlockSpec((1, 128), const),                         # bn gamma
        pl.BlockSpec((1, 128), const),                         # bn beta
        pl.BlockSpec((po2 * 128, 768), const),                 # conv2 weight
        pl.BlockSpec((768, nc_pad), const),                    # fc weight (class-padded)
        pl.BlockSpec((1, nc_pad), const),                      # fc bias  (class-padded)
    ]
    out_spec = pl.BlockSpec((tile_n, nc_pad),
                            lambda p, b: (p * b + (1 - p) * nbt, 0))

    flops = (2 * n_pad * 2 * chw * po2 * 128          # fused pool+conv1 (runs both passes)
             + n_pad * 2 * po2 * 128 * 768            # conv2
             + n_pad * 2 * 768 * nc_pad)              # classifier
    bytes_accessed = (2 * n_pad * chw * 4             # x read in both passes
                      + prepped["wp"].size * 2 + prepped["w2"].size * 2
                      + prepped["w3"].size * 2 + 2 * 128 * 4 + nc_pad * 4
                      + out_rows * nc_pad * 4)

    out = pl.pallas_call(
        kernel,
        out_shape=jax.ShapeDtypeStruct((out_rows, nc_pad), jnp.float32),
        grid_spec=pltpu.PrefetchScalarGridSpec(
            num_scalar_prefetch=0,
            grid=(2, nbt),
            in_specs=in_specs,
            out_specs=out_spec,
            scratch_shapes=[pltpu.VMEM((1, po2 * 128), jnp.float32),   # sum  per channel*pos
                            pltpu.VMEM((1, po2 * 128), jnp.float32)],  # sumsq
        ),
        compiler_params=pltpu.CompilerParams(
            # Training-mode BN needs a global cross-tile reduction (pass 0), so both grid
            # axes are sequential.  See the TODO(synk) above for the "parallel" variant.
            dimension_semantics=("arbitrary", "arbitrary"),
            vmem_limit_bytes=32 * 1024 * 1024),
        cost_estimate=pl.CostEstimate(flops=flops, transcendentals=128,
                                      bytes_accessed=bytes_accessed),
    )(x2, prepped["wp"], prepped["gamma"], prepped["beta"],
      prepped["w2"], prepped["w3"], prepped["b3"])

    return out[:N, :nc]


def init_params(key, C, num_classes):
    k1, k2, k3, k4, k5, k6 = jax.random.split(key, 6)
    return {
        "conv1_w": 0.1 * jax.random.normal(k1, (128, C, 1, 1), jnp.float32),
        "bn_gamma": 1.0 + 0.1 * jax.random.normal(k2, (128,), jnp.float32),
        "bn_beta": 0.1 * jax.random.normal(k3, (128,), jnp.float32),
        "conv2_w": 0.05 * jax.random.normal(k4, (768, 128, 2, 2), jnp.float32),
        "fc_w": 0.05 * jax.random.normal(k5, (num_classes, 768), jnp.float32),
        "fc_b": 0.1 * jax.random.normal(k6, (num_classes,), jnp.float32),
    }


if __name__ == "__main__":
    N, C, H, W = 2, 4, 8, 8          # spatial 8 -> 2x2 pooled map -> flatten gives exactly 768
    num_classes = 10

    key = jax.random.PRNGKey(0)
    kx, kp = jax.random.split(key)
    x = jax.random.normal(kx, (N, C, H, W), jnp.float32)      # NCHW, like PyTorch
    params = init_params(kp, C, num_classes)

    prepped = prepare_params(params, C=C, H=H, W=W)           # one-time weight prep
    fwd = jax.jit(functools.partial(auxiliary_head_imagenet, prepped=prepped))

    logits = jax.block_until_ready(fwd(x))
    assert logits.shape == (N, num_classes), logits.shape
    assert bool(jnp.all(jnp.isfinite(logits)))
    print("KERNEL_OK")
</pallas_src>

<mosaic_0001>
module attributes {stable_mosaic.version = 11 : i64} {
  func.func @_aux_head_kernel(%arg0: i32, %arg1: i32, %arg2: memref<128x256xf32, #tpu.memory_space<vmem>>, %arg3: memref<256x512xbf16, #tpu.memory_space<vmem>>, %arg4: memref<1x128xf32, #tpu.memory_space<vmem>>, %arg5: memref<1x128xf32, #tpu.memory_space<vmem>>, %arg6: memref<512x768xbf16, #tpu.memory_space<vmem>>, %arg7: memref<768x128xbf16, #tpu.memory_space<vmem>>, %arg8: memref<1x128xf32, #tpu.memory_space<vmem>>, %arg9: memref<128x128xf32, #tpu.memory_space<vmem>>, %arg10: memref<1x512xf32, #tpu.memory_space<vmem>>, %arg11: memref<1x512xf32, #tpu.memory_space<vmem>>) attributes {dimension_semantics = [#tpu.dimension_semantics<arbitrary>, #tpu.dimension_semantics<arbitrary>], iteration_bounds = array<i64: 2, 1>, scalar_prefetch = 0 : i64, scratch_operands = 2 : i64, tpu.core_type = #tpu.core_type<tc>, window_params = [{transform_indices = @transform_0, window_bounds = array<i64: 128, 256>}, {pipeline_mode = #tpu.pipeline_mode<synchronous>, transform_indices = @transform_1, window_bounds = array<i64: 256, 512>}, {pipeline_mode = #tpu.pipeline_mode<synchronous>, transform_indices = @transform_2, window_bounds = array<i64: 1, 128>}, {pipeline_mode = #tpu.pipeline_mode<synchronous>, transform_indices = @transform_3, window_bounds = array<i64: 1, 128>}, {pipeline_mode = #tpu.pipeline_mode<synchronous>, transform_indices = @transform_4, window_bounds = array<i64: 512, 768>}, {pipeline_mode = #tpu.pipeline_mode<synchronous>, transform_indices = @transform_5, window_bounds = array<i64: 768, 128>}, {pipeline_mode = #tpu.pipeline_mode<synchronous>, transform_indices = @transform_6, window_bounds = array<i64: 1, 128>}, {transform_indices = @transform_7, window_bounds = array<i64: 128, 128>}]} {
    %c0 = arith.constant 0 : index
    %c0_0 = arith.constant 0 : index
    %0 = vector.load %arg2[%c0, %c0_0] : memref<128x256xf32, #tpu.memory_space<vmem>>, vector<128x256xf32>
    %cst = arith.constant 0.000000e+00 : f32
    %1 = vector.broadcast %cst : f32 to vector<128x256xf32>
    %2 = arith.maximumf %0, %1 : vector<128x256xf32>
    %3 = arith.truncf %2 : vector<128x256xf32> to vector<128x256xbf16>
    %c0_1 = arith.constant 0 : index
    %c0_2 = arith.constant 0 : index
    %4 = vector.load %arg3[%c0_1, %c0_2] : memref<256x512xbf16, #tpu.memory_space<vmem>>, vector<256x512xbf16>
    %cst_3 = arith.constant dense<0.000000e+00> : vector<128x512xf32>
    %5 = tpu.matmul %3, %4, %cst_3 {dimension_numbers = #tpu.dot_dimension_numbers<[1], [0], [0], [1], [0, 0, 1, 1], [], []>} : vector<128x256xbf16>, vector<256x512xbf16>, vector<128x512xf32> -> vector<128x512xf32>
    %c0_i32 = arith.constant 0 : i32
    %6 = arith.cmpi eq, %arg0, %c0_i32 : i32
    %c0_i32_4 = arith.constant 0 : i32
    %7 = arith.cmpi eq, %arg1, %c0_i32_4 : i32
    %8 = arith.andi %6, %7 : i1
    %9 = arith.extui %8 : i1 to i32
    %c0_i32_5 = arith.constant 0 : i32
    %10 = arith.cmpi ne, %9, %c0_i32_5 : i32
    scf.if %10 {
      %cst_9 = arith.constant 0.000000e+00 : f32
      %17 = vector.broadcast %cst_9 : f32 to vector<1x512xf32>
      %c0_10 = arith.constant 0 : index
      %c0_11 = arith.constant 0 : index
      %18 = vector.load %arg10[%c0_10, %c0_11] : memref<1x512xf32, #tpu.memory_space<vmem>>, vector<1x512xf32>
      tpu.vector_store %arg10[%c0_10, %c0_11], %17 {strides = array<i32>} : memref<1x512xf32, #tpu.memory_space<vmem>>, vector<1x512xf32>,
      %cst_12 = arith.constant 0.000000e+00 : f32
      %19 = vector.broadcast %cst_12 : f32 to vector<1x512xf32>
      %c0_13 = arith.constant 0 : index
      %c0_14 = arith.constant 0 : index
      %20 = vector.load %arg11[%c0_13, %c0_14] : memref<1x512xf32, #tpu.memory_space<vmem>>, vector<1x512xf32>
      tpu.vector_store %arg11[%c0_13, %c0_14], %19 {strides = array<i32>} : memref<1x512xf32, #tpu.memory_space<vmem>>, vector<1x512xf32>,
      %cst_15 = arith.constant 0.000000e+00 : f32
      %21 = vector.broadcast %cst_15 : f32 to vector<128x128xf32>
      %c0_16 = arith.constant 0 : index
      %c0_17 = arith.constant 0 : index
      %22 = vector.load %arg9[%c0_16, %c0_17] : memref<128x128xf32, #tpu.memory_space<vmem>>, vector<128x128xf32>
      tpu.vector_store %arg9[%c0_16, %c0_17], %21 {strides = array<i32>} : memref<128x128xf32, #tpu.memory_space<vmem>>, vector<128x128xf32>,
    } else {
    }
    %c0_i32_6 = arith.constant 0 : i32
    %11 = arith.cmpi eq, %arg0, %c0_i32_6 : i32
    %12 = arith.extui %11 : i1 to i32
    %c0_i32_7 = arith.constant 0 : i32
    %13 = arith.cmpi ne, %12, %c0_i32_7 : i32
    scf.if %13 {
      %c0_9 = arith.constant 0 : index
      %c0_10 = arith.constant 0 : index
      %17 = vector.load %arg10[%c0_9, %c0_10] : memref<1x512xf32, #tpu.memory_space<vmem>>, vector<1x512xf32>
      %cst_11 = arith.constant dense<0.000000e+00> : vector<512xf32>
      %18 = vector.multi_reduction <add>, %5, %cst_11 [0] : vector<128x512xf32> to vector<512xf32>
      %19 = vector.shape_cast %18 : vector<512xf32> to vector<1x512xf32>
      %20 = arith.addf %17, %19 : vector<1x512xf32>
      %c0_12 = arith.constant 0 : index
      %c0_13 = arith.constant 0 : index
      %21 = vector.load %arg10[%c0_12, %c0_13] : memref<1x512xf32, #tpu.memory_space<vmem>>, vector<1x512xf32>
      tpu.vector_store %arg10[%c0_12, %c0_13], %20 {strides = array<i32>} : memref<1x512xf32, #tpu.memory_space<vmem>>, vector<1x512xf32>,
      %c0_14 = arith.constant 0 : index
      %c0_15 = arith.constant 0 : index
      %22 = vector.load %arg11[%c0_14, %c0_15] : memref<1x512xf32, #tpu.memory_space<vmem>>, vector<1x512xf32>
      %23 = arith.mulf %5, %5 : vector<128x512xf32>
      %cst_16 = arith.constant dense<0.000000e+00> : vector<512xf32>
      %24 = vector.multi_reduction <add>, %23, %cst_16 [0] : vector<128x512xf32> to vector<512xf32>
      %25 = vector.shape_cast %24 : vector<512xf32> to vector<1x512xf32>
      %26 = arith.addf %22, %25 : vector<1x512xf32>
      %c0_17 = arith.constant 0 : index
      %c0_18 = arith.constant 0 : index
      %27 = vector.load %arg11[%c0_17, %c0_18] : memref<1x512xf32, #tpu.memory_space<vmem>>, vector<1x512xf32>
      tpu.vector_store %arg11[%c0_17, %c0_18], %26 {strides = array<i32>} : memref<1x512xf32, #tpu.memory_space<vmem>>, vector<1x512xf32>,
    } else {
    }
    %c1_i32 = arith.constant 1 : i32
    %14 = arith.cmpi eq, %arg0, %c1_i32 : i32
    %15 = arith.extui %14 : i1 to i32
    %c0_i32_8 = arith.constant 0 : i32
    %16 = arith.cmpi ne, %15, %c0_i32_8 : i32
    scf.if %16 {
      %c0_9 = arith.constant 0 : index
      %c0_10 = arith.constant 0 : index
      %17 = vector.load %arg10[%c0_9, %c0_10] : memref<1x512xf32, #tpu.memory_space<vmem>>, vector<1x512xf32>
      %c0_11 = arith.constant 0 : index
      %c0_12 = arith.constant 0 : index
      %18 = vector.load %arg11[%c0_11, %c0_12] : memref<1x512xf32, #tpu.memory_space<vmem>>, vector<1x512xf32>
      %cst_13 = arith.constant 0.000000e+00 : f32
      %19 = vector.broadcast %cst_13 : f32 to vector<1x128xf32>
      %cst_14 = arith.constant 0.000000e+00 : f32
      %20 = vector.broadcast %cst_14 : f32 to vector<1x128xf32>
      %21 = vector.extract_strided_slice %17 {offsets = [0, 0], sizes = [1, 128], strides = [1, 1]} : vector<1x512xf32> to vector<1x128xf32>
      %22 = arith.addf %19, %21 : vector<1x128xf32>
      %23 = vector.extract_strided_slice %18 {offsets = [0, 0], sizes = [1, 128], strides = [1, 1]} : vector<1x512xf32> to vector<1x128xf32>
      %24 = arith.addf %20, %23 : vector<1x128xf32>
      %25 = vector.extract_strided_slice %17 {offsets = [0, 128], sizes = [1, 128], strides = [1, 1]} : vector<1x512xf32> to vector<1x128xf32>
      %26 = arith.addf %22, %25 : vector<1x128xf32>
      %27 = vector.extract_strided_slice %18 {offsets = [0, 128], sizes = [1, 128], strides = [1, 1]} : vector<1x512xf32> to vector<1x128xf32>
      %28 = arith.addf %24, %27 : vector<1x128xf32>
      %29 = vector.extract_strided_slice %17 {offsets = [0, 256], sizes = [1, 128], strides = [1, 1]} : vector<1x512xf32> to vector<1x128xf32>
      %30 = arith.addf %26, %29 : vector<1x128xf32>
      %31 = vector.extract_strided_slice %18 {offsets = [0, 256], sizes = [1, 128], strides = [1, 1]} : vector<1x512xf32> to vector<1x128xf32>
      %32 = arith.addf %28, %31 : vector<1x128xf32>
      %33 = vector.extract_strided_slice %17 {offsets = [0, 384], sizes = [1, 128], strides = [1, 1]} : vector<1x512xf32> to vector<1x128xf32>
      %34 = arith.addf %30, %33 : vector<1x128xf32>
      %35 = vector.extract_strided_slice %18 {offsets = [0, 384], sizes = [1, 128], strides = [1, 1]} : vector<1x512xf32> to vector<1x128xf32>
      %36 = arith.addf %32, %35 : vector<1x128xf32>
      %cst_15 = arith.constant 1.250000e-01 : f32
      %37 = vector.broadcast %cst_15 : f32 to vector<1x128xf32>
      %38 = arith.mulf %34, %37 : vector<1x128xf32>
      %cst_16 = arith.constant 1.250000e-01 : f32
      %39 = vector.broadcast %cst_16 : f32 to vector<1x128xf32>
      %40 = arith.mulf %36, %39 : vector<1x128xf32>
      %41 = arith.mulf %38, %38 : vector<1x128xf32>
      %42 = arith.subf %40, %41 : vector<1x128xf32>
      %cst_17 = arith.constant 0.000000e+00 : f32
      %43 = vector.broadcast %cst_17 : f32 to vector<1x128xf32>
      %44 = arith.maximumf %42, %43 : vector<1x128xf32>
      %c0_18 = arith.constant 0 : index
      %c0_19 = arith.constant 0 : index
      %45 = vector.load %arg4[%c0_18, %c0_19] : memref<1x128xf32, #tpu.memory_space<vmem>>, vector<1x128xf32>
      %cst_20 = arith.constant 9.99999974E-6 : f32
      %46 = vector.broadcast %cst_20 : f32 to vector<1x128xf32>
      %47 = arith.addf %44, %46 : vector<1x128xf32>
      %48 = math.rsqrt %47 : vector<1x128xf32>
      %49 = arith.mulf %45, %48 : vector<1x128xf32>
      %c0_21 = arith.constant 0 : index
      %c0_22 = arith.constant 0 : index
      %50 = vector.load %arg5[%c0_21, %c0_22] : memref<1x128xf32, #tpu.memory_space<vmem>>, vector<1x128xf32>
      %51 = arith.mulf %38, %49 : vector<1x128xf32>
      %52 = arith.subf %50, %51 : vector<1x128xf32>
      %53 = tpu.concatenate %49, %49, %49, %49 in 1 : vector<1x128xf32>, vector<1x128xf32>, vector<1x128xf32>, vector<1x128xf32> -> vector<1x512xf32>
      %54 = tpu.concatenate %52, %52, %52, %52 in 1 : vector<1x128xf32>, vector<1x128xf32>, vector<1x128xf32>, vector<1x128xf32> -> vector<1x512xf32>
      %55 = vector.broadcast %53 : vector<1x512xf32> to vector<128x512xf32>
      %56 = arith.mulf %5, %55 : vector<128x512xf32>
      %57 = vector.broadcast %54 : vector<1x512xf32> to vector<128x512xf32>
      %58 = arith.addf %56, %57 : vector<128x512xf32>
      %cst_23 = arith.constant 0.000000e+00 : f32
      %59 = vector.broadcast %cst_23 : f32 to vector<128x512xf32>
      %60 = arith.maximumf %58, %59 : vector<128x512xf32>
      %61 = arith.truncf %60 : vector<128x512xf32> to vector<128x512xbf16>
      %c0_24 = arith.constant 0 : index
      %c0_25 = arith.constant 0 : index
      %62 = vector.load %arg6[%c0_24, %c0_25] : memref<512x768xbf16, #tpu.memory_space<vmem>>, vector<512x768xbf16>
      %cst_26 = arith.constant dense<0.000000e+00> : vector<128x768xf32>
      %63 = tpu.matmul %61, %62, %cst_26 {dimension_numbers = #tpu.dot_dimension_numbers<[1], [0], [0], [1], [0, 0, 1, 1], [], []>} : vector<128x512xbf16>, vector<512x768xbf16>, vector<128x768xf32> -> vector<128x768xf32>
      %cst_27 = arith.constant 0.000000e+00 : f32
      %64 = vector.broadcast %cst_27 : f32 to vector<128x768xf32>
      %65 = arith.maximumf %63, %64 : vector<128x768xf32>
      %66 = arith.truncf %65 : vector<128x768xf32> to vector<128x768xbf16>
      %c0_28 = arith.constant 0 : index
      %c0_29 = arith.constant 0 : index
      %67 = vector.load %arg7[%c0_28, %c0_29] : memref<768x128xbf16, #tpu.memory_space<vmem>>, vector<768x128xbf16>
      %cst_30 = arith.constant dense<0.000000e+00> : vector<128x128xf32>
      %68 = tpu.matmul %66, %67, %cst_30 {dimension_numbers = #tpu.dot_dimension_numbers<[1], [0], [0], [1], [0, 0, 1, 1], [], []>} : vector<128x768xbf16>, vector<768x128xbf16>, vector<128x128xf32> -> vector<128x128xf32>
      %c0_31 = arith.constant 0 : index
      %c0_32 = arith.constant 0 : index
      %69 = vector.load %arg8[%c0_31, %c0_32] : memref<1x128xf32, #tpu.memory_space<vmem>>, vector<1x128xf32>
      %70 = vector.broadcast %69 : vector<1x128xf32> to vector<128x128xf32>
      %71 = arith.addf %68, %70 : vector<128x128xf32>
      %c0_33 = arith.constant 0 : index
      %c0_34 = arith.constant 0 : index
      %72 = vector.load %arg9[%c0_33, %c0_34] : memref<128x128xf32, #tpu.memory_space<vmem>>, vector<128x128xf32>
      tpu.vector_store %arg9[%c0_33, %c0_34], %71 {strides = array<i32>} : memref<128x128xf32, #tpu.memory_space<vmem>>, vector<128x128xf32>,
    } else {
    }
    return
  }
  func.func @transform_0(%arg0: i32, %arg1: i32) -> (i32, i32) {
    %c0_i32 = arith.constant 0 : i32
    %c0_i32_0 = arith.constant 0 : i32
    return %arg1, %c0_i32 : i32, i32
  }
  func.func @transform_1(%arg0: i32, %arg1: i32) -> (i32, i32) {
    %c0_i32 = arith.constant 0 : i32
    %c0_i32_0 = arith.constant 0 : i32
    %c0_i32_1 = arith.constant 0 : i32
    return %c0_i32, %c0_i32_0 : i32, i32
  }
  func.func @transform_2(%arg0: i32, %arg1: i32) -> (i32, i32) {
    %c0_i32 = arith.constant 0 : i32
    %c0_i32_0 = arith.constant 0 : i32
    %c0_i32_1 = arith.constant 0 : i32
    return %c0_i32, %c0_i32_0 : i32, i32
  }
  func.func @transform_3(%arg0: i32, %arg1: i32) -> (i32, i32) {
    %c0_i32 = arith.constant 0 : i32
    %c0_i32_0 = arith.constant 0 : i32
    %c0_i32_1 = arith.constant 0 : i32
    return %c0_i32, %c0_i32_0 : i32, i32
  }
  func.func @transform_4(%arg0: i32, %arg1: i32) -> (i32, i32) {
    %c0_i32 = arith.constant 0 : i32
    %c0_i32_0 = arith.constant 0 : i32
    %c0_i32_1 = arith.constant 0 : i32
    return %c0_i32, %c0_i32_0 : i32, i32
  }
  func.func @transform_5(%arg0: i32, %arg1: i32) -> (i32, i32) {
    %c0_i32 = arith.constant 0 : i32
    %c0_i32_0 = arith.constant 0 : i32
    %c0_i32_1 = arith.constant 0 : i32
    return %c0_i32, %c0_i32_0 : i32, i32
  }
  func.func @transform_6(%arg0: i32, %arg1: i32) -> (i32, i32) {
    %c0_i32 = arith.constant 0 : i32
    %c0_i32_0 = arith.constant 0 : i32
    %c0_i32_1 = arith.constant 0 : i32
    return %c0_i32, %c0_i32_0 : i32, i32
  }
  func.func @transform_7(%arg0: i32, %arg1: i32) -> (i32, i32) {
    %0 = arith.muli %arg0, %arg1 : i32
    %c1_i32 = arith.constant 1 : i32
    %1 = arith.subi %c1_i32, %arg0 : i32
    %c1_i32_0 = arith.constant 1 : i32
    %2 = arith.muli %1, %c1_i32_0 : i32
    %3 = arith.addi %0, %2 : i32
    %c0_i32 = arith.constant 0 : i32
    %c0_i32_1 = arith.constant 0 : i32
    return %3, %c0_i32 : i32, i32
  }
}

</mosaic_0001>

<llo_original>
// kernel: auxiliary_head_imagenet.1
$region0: #{auxiliary_head_imagenet.1}
  #allocation0 [shape = 'u32[]', space=smem, size = 0x4, offset = 0x4, fixed_abs, tag = 'smem constant byte address 0x4 - core index']
  #allocation1 [shape = 'u32[144,128]{1,0:T(1,128)}', space=vmem, size = 0x12000, scoped, tag = 'internal scratch']
  #allocation2 [shape = 'f32[1,512]{1,0:T(1,128)}', space=vmem, size = 0x800, scoped, tag = 'scratch operand']
  #allocation3 [shape = 'f32[1,512]{1,0:T(1,128)}', space=vmem, size = 0x800, scoped, tag = 'scratch operand']
  %s0 = inlined_call_operand.vmem [shape: f32[128,256], index: 0, kind: input, shape index: {}]
  %s1 = inlined_call_operand.hbm [shape: bf16[256,512], index: 1, kind: input, shape index: {}]
  %s2 = inlined_call_operand.vmem [shape: f32[1,128], index: 2, kind: input, shape index: {}]
  %s3 = inlined_call_operand.vmem [shape: f32[1,128], index: 3, kind: input, shape index: {}]
  %s4 = inlined_call_operand.hbm [shape: bf16[512,768], index: 4, kind: input, shape index: {}]
  %s5 = inlined_call_operand.hbm [shape: bf16[768,128], index: 5, kind: input, shape index: {}]
  %s6 = inlined_call_operand.vmem [shape: f32[1,128], index: 6, kind: input, shape index: {}]
  %s7 = inlined_call_operand.vmem [shape: f32[256,128], index: 7, kind: output, shape index: {}]
  %s8 = sld [smem:[#allocation0]]
  $region85: #{auxiliary_head_imagenet.1} parent=0
    _
  %s10 = ssub.s32 1, %s8
  %s11 = scalar_select 0, %s10, %s8
  $region1: #{auxiliary_head_imagenet.1} parent=0
    #allocation4 [shape = 'u8[262144]{0}', space=vmem, size = 0x40000, scoped, tag = 'input window, operand 1, single buffered']
    #allocation5 [shape = 's32[2]{0}', space=sflag, size = 0x8, scoped, tag = 'scoped memory for auxiliary_head_imagenet.1']
    #allocation6 [shape = 'u8[786432]{0}', space=vmem, size = 0xc0000, scoped, tag = 'input window, operand 4, single buffered']
    #allocation7 [shape = 's32[1]{0}', space=sflag, size = 0x4, scoped, tag = 'scoped memory for auxiliary_head_imagenet.1']
    #allocation8 [shape = 'u8[196608]{0}', space=vmem, size = 0x30000, scoped, tag = 'input window, operand 5, single buffered']
    %12 = vsyncpa [#allocation5], 0
    %13 = vsyncpa [#allocation7], 0
    loop: start=0, step=1, limit=4
    $region2: #{auxiliary_head_imagenet.1} parent=1 // loop_pre_header
      _
    $region3: #{auxiliary_head_imagenet.1} parent=1 // loop_header
      %s15 = sphi 0, %s19
      %p16 = scmp.ge.s32.totalorder %s15, 4
      %s22 = sphi 0, %s34
      %s23 = sphi 0, %s30
      %s24 = sphi 0, %s22
      %s25 = sphi 0, %s23
      %s26 = sphi 0, %s24
      %s27 = sphi 0, %s25
      %s37 = sphi 0, %s39
      %s40 = sphi 0, %s37
      %s41 = sphi 0, %s40
      %s57 = sphi 0, %s41
      %s61 = sphi 0, %s61
      %s63 = sphi 0, %s61
      %s64 = sphi 0, %s63
      %s78 = sphi 0, %s64
      %s82 = sphi 0, %s82
      %s84 = sphi 0, %s82
      %s85 = sphi 0, %s84
      %s99 = sphi 0, %s85
      %s103 = sphi 0, %s103
      %s105 = sphi 0, %s103
      %s106 = sphi 0, %s105
      %s120 = sphi 0, %s106
      %s124 = sphi 0, %s124
      %s126 = sphi 0, %s124
      %s127 = sphi 0, %s126
      %s141 = sphi 0, %s127
      %s145 = sphi 0, %s145
      %s147 = sphi 0, %s145
      %s148 = sphi 0, %s147
      %s162 = sphi 0, %s148
      %s166 = sphi 0, %s166
      %s168 = sphi 0, %s166
      %s169 = sphi 0, %s168
      %s183 = sphi 0, %s169
      %s195 = sphi 0, %s197
      %s198 = sphi 0, %s195
      %s199 = sphi 0, %s198
      %s215 = sphi 0, %s199
    $region4: #{auxiliary_head_imagenet.1} parent=1 // loop_header_branch
      %18 = sbr.rel (%p16) target = $region8
    $region5: #{auxiliary_head_imagenet.1} parent=1 // loop_body
      %s20 = ssub.s32 %s15, 1
      %s21 = ssub.s32 %s15, 2
      %s28 = sadd.s32 1, %s23
      %p29 = scmp.ge.s32.totalorder %s28, 1
      %s30 = scalar_select %p29, 0, %s28
      %s31 = sadd.s32 1, %s22
      %s32 = scalar_select %p29, %s31, %s22
      %p33 = scmp.ge.s32.totalorder %s32, 2
      %s34 = scalar_select %p33, 0, %s32
      %s35 = ssub.s32 %s23, %s30
      %p36 = scmp.eq.s32.totalorder %s35, 0
      %s38 = sadd.s32 %s37, 1
      %s39 = scalar_select %p36, %s37, %s38
      %p42 = pneg %p36
      %p43 = scmp.eq.s32.totalorder %s15, 1
      %p44 = por %p42, %p43
      %p45 = scmp.ne.s32.totalorder %s37, %s40
      %p46 = scmp.eq.s32.totalorder %s15, 0
      %p47 = por %p45, %p46
      %p48 = scmp.ne.s32.totalorder %s37, %s40
      %p49 = scmp.eq.s32.totalorder %s20, 1
      %p50 = por %p48, %p49
      %p51 = scmp.ne.s32.totalorder %s40, %s41
      %p52 = scmp.eq.s32.totalorder %s20, 0
      %p53 = por %p51, %p52
      %p54 = scmp.ne.s32.totalorder %s40, %s41
      %p55 = scmp.eq.s32.totalorder %s21, 1
      %p56 = por %p54, %p55
      %p58 = scmp.ne.s32.totalorder %s41, %s57
      %p59 = scmp.eq.s32.totalorder %s21, 0
      %p60 = por %p58, %p59
      %s62 = sadd.s32 %s61, 1
      %p65 = scmp.eq.s32.totalorder %s15, 1
      %p66 = scmp.ne.s32.totalorder %s61, %s63
      %p67 = scmp.eq.s32.totalorder %s15, 0
      %p68 = por %p66, %p67
      %p69 = scmp.ne.s32.totalorder %s61, %s63
      %p70 = scmp.eq.s32.totalorder %s20, 1
      %p71 = por %p69, %p70
      %p72 = scmp.ne.s32.totalorder %s63, %s64
      %p73 = scmp.eq.s32.totalorder %s20, 0
      %p74 = por %p72, %p73
      %p75 = scmp.ne.s32.totalorder %s63, %s64
      %p76 = scmp.eq.s32.totalorder %s21, 1
      %p77 = por %p75, %p76
      %p79 = scmp.ne.s32.totalorder %s64, %s78
      %p80 = scmp.eq.s32.totalorder %s21, 0
      %p81 = por %p79, %p80
      %s83 = sadd.s32 %s82, 1
      %p86 = scmp.eq.s32.totalorder %s15, 1
      %p87 = scmp.ne.s32.totalorder %s82, %s84
      %p88 = scmp.eq.s32.totalorder %s15, 0
      %p89 = por %p87, %p88
      %p90 = scmp.ne.s32.totalorder %s82, %s84
      %p91 = scmp.eq.s32.totalorder %s20, 1
      %p92 = por %p90, %p91
      %p93 = scmp.ne.s32.totalorder %s84, %s85
      %p94 = scmp.eq.s32.totalorder %s20, 0
      %p95 = por %p93, %p94
      %p96 = scmp.ne.s32.totalorder %s84, %s85
      %p97 = scmp.eq.s32.totalorder %s21, 1
      %p98 = por %p96, %p97
      %p100 = scmp.ne.s32.totalorder %s85, %s99
      %p101 = scmp.eq.s32.totalorder %s21, 0
      %p102 = por %p100, %p101
      %s104 = sadd.s32 %s103, 1
      %p107 = scmp.eq.s32.totalorder %s15, 1
      %p108 = scmp.ne.s32.totalorder %s103, %s105
      %p109 = scmp.eq.s32.totalorder %s15, 0
      %p110 = por %p108, %p109
      %p111 = scmp.ne.s32.totalorder %s103, %s105
      %p112 = scmp.eq.s32.totalorder %s20, 1
      %p113 = por %p111, %p112
      %p114 = scmp.ne.s32.totalorder %s105, %s106
      %p115 = scmp.eq.s32.totalorder %s20, 0
      %p116 = por %p114, %p115
      %p117 = scmp.ne.s32.totalorder %s105, %s106
      %p118 = scmp.eq.s32.totalorder %s21, 1
      %p119 = por %p117, %p118
      %p121 = scmp.ne.s32.totalorder %s106, %s120
      %p122 = scmp.eq.s32.totalorder %s21, 0
      %p123 = por %p121, %p122
      %s125 = sadd.s32 %s124, 1
      %p128 = scmp.eq.s32.totalorder %s15, 1
      %p129 = scmp.ne.s32.totalorder %s124, %s126
      %p130 = scmp.eq.s32.totalorder %s15, 0
      %p131 = por %p129, %p130
      %p132 = scmp.ne.s32.totalorder %s124, %s126
      %p133 = scmp.eq.s32.totalorder %s20, 1
      %p134 = por %p132, %p133
      %p135 = scmp.ne.s32.totalorder %s126, %s127
      %p136 = scmp.eq.s32.totalorder %s20, 0
      %p137 = por %p135, %p136
      %p138 = scmp.ne.s32.totalorder %s126, %s127
      %p139 = scmp.eq.s32.totalorder %s21, 1
      %p140 = por %p138, %p139
      %p142 = scmp.ne.s32.totalorder %s127, %s141
      %p143 = scmp.eq.s32.totalorder %s21, 0
      %p144 = por %p142, %p143
      %s146 = sadd.s32 %s145, 1
      %p149 = scmp.eq.s32.totalorder %s15, 1
      %p150 = scmp.ne.s32.totalorder %s145, %s147
      %p151 = scmp.eq.s32.totalorder %s15, 0
      %p152 = por %p150, %p151
      %p153 = scmp.ne.s32.totalorder %s145, %s147
      %p154 = scmp.eq.s32.totalorder %s20, 1
      %p155 = por %p153, %p154
      %p156 = scmp.ne.s32.totalorder %s147, %s148
      %p157 = scmp.eq.s32.totalorder %s20, 0
      %p158 = por %p156, %p157
      %p159 = scmp.ne.s32.totalorder %s147, %s148
      %p160 = scmp.eq.s32.totalorder %s21, 1
      %p161 = por %p159, %p160
      %p163 = scmp.ne.s32.totalorder %s148, %s162
      %p164 = scmp.eq.s32.totalorder %s21, 0
      %p165 = por %p163, %p164
      %s167 = sadd.s32 %s166, 1
      %p170 = scmp.eq.s32.totalorder %s15, 1
      %p171 = scmp.ne.s32.totalorder %s166, %s168
      %p172 = scmp.eq.s32.totalorder %s15, 0
      %p173 = por %p171, %p172
      %p174 = scmp.ne.s32.totalorder %s166, %s168
      %p175 = scmp.eq.s32.totalorder %s20, 1
      %p176 = por %p174, %p175
      %p177 = scmp.ne.s32.totalorder %s168, %s169
      %p178 = scmp.eq.s32.totalorder %s20, 0
      %p179 = por %p177, %p178
      %p180 = scmp.ne.s32.totalorder %s168, %s169
      %p181 = scmp.eq.s32.totalorder %s21, 1
      %p182 = por %p180, %p181
      %p184 = scmp.ne.s32.totalorder %s169, %s183
      %p185 = scmp.eq.s32.totalorder %s21, 0
      %p186 = por %p184, %p185
      %s187 = smul.u32 %s22, %s23
      %s188 = ssub.s32 1, %s22
      %s189 = sadd.s32 %s187, %s188
      %s190 = smul.u32 %s34, %s30
      %s191 = ssub.s32 1, %s34
      %s192 = sadd.s32 %s190, %s191
      %s193 = ssub.s32 %s189, %s192
      %p194 = scmp.eq.s32.totalorder %s193, 0
      %s196 = sadd.s32 %s195, 1
      %s197 = scalar_select %p194, %s195, %s196
      %p200 = pneg %p194
      %p201 = scmp.eq.s32.totalorder %s15, 1
      %p202 = por %p200, %p201
      %p203 = scmp.ne.s32.totalorder %s195, %s198
      %p204 = scmp.eq.s32.totalorder %s15, 0
      %p205 = por %p203, %p204
      %p206 = scmp.ne.s32.totalorder %s195, %s198
      %p207 = scmp.eq.s32.totalorder %s20, 1
      %p208 = por %p206, %p207
      %p209 = scmp.ne.s32.totalorder %s198, %s199
      %p210 = scmp.eq.s32.totalorder %s20, 0
      %p211 = por %p209, %p210
      %p212 = scmp.ne.s32.totalorder %s198, %s199
      %p213 = scmp.eq.s32.totalorder %s21, 1
      %p214 = por %p212, %p213
      %p216 = scmp.ne.s32.totalorder %s199, %s215
      %p217 = scmp.eq.s32.totalorder %s21, 0
      %p218 = por %p216, %p217
      %p219 = scmp.le.s32.totalorder 1, %s15
      %p220 = scmp.lt.s32.totalorder %s15, 3
      %p221 = pnand %p219, %p220
      %p222 = pneg %p221
      // Predicated region
      $region9: #{auxiliary_head_imagenet.1} parent=5 // pred_check
        _
      $region10: #{auxiliary_head_imagenet.1} parent=5 // pred_check_branch
        %224 = sbr.rel (%p221) target = $region12
      $region11: #{auxiliary_head_imagenet.1} parent=5 // pred_region
        %s225 = ssub.s32 %s15, 1
        // Predicated region
        $region13: #{auxiliary_head_imagenet.1} parent=11 // pred_check
          %p226 = pneg %p53
        $region14: #{auxiliary_head_imagenet.1} parent=11 // pred_check_branch
          %228 = sbr.rel (%p226) target = $region16
        $region15: #{auxiliary_head_imagenet.1} parent=11 // pred_region
          %s229 = smul.u32 16, %s25
          %p230 = scmp.lt.s32.totalorder %s229, 15
          %s231 = scalar_select %p230, %s229, 15
          %s232 = smul.addr %s231, 2
          %s233 = smul.addr %s232, 8
          %s234 = scalar_lea.vmem %s0, %s233
          %s235 = smul.u32 16, %s25
        $region16: #{auxiliary_head_imagenet.1} parent=11 // pred_fallthru
          _
        // Predicated region
        $region17: #{auxiliary_head_imagenet.1} parent=11 // pred_check
          %p236 = pneg %p74
        $region18: #{auxiliary_head_imagenet.1} parent=11 // pred_check_branch
          %238 = sbr.rel (%p236) target = $region20
        $region19: #{auxiliary_head_imagenet.1} parent=11 // pred_region
          %s240 = ssub.s32 8192, 8192
          %241 = vsyncadd [#allocation5], %s240
          %s242 = sshll.u32 [#allocation4], 4
          %s243 = int_to_ptr.vmem [resolvable:$true] %s242
          %248 = dma.hbm_to_vmem [thread:$0]  %s1, 8192, %s243, [#allocation5], 256, 256, 16
        $region20: #{auxiliary_head_imagenet.1} parent=11 // pred_fallthru
          _
        // Predicated region
        $region21: #{auxiliary_head_imagenet.1} parent=11 // pred_check
          %p249 = pneg %p95
        $region22: #{auxiliary_head_imagenet.1} parent=11 // pred_check_branch
          %251 = sbr.rel (%p249) target = $region24
        $region23: #{auxiliary_head_imagenet.1} parent=11 // pred_region
          _
        $region24: #{auxiliary_head_imagenet.1} parent=11 // pred_fallthru
          _
        // Predicated region
        $region25: #{auxiliary_head_imagenet.1} parent=11 // pred_check
          %p252 = pneg %p116
        $region26: #{auxiliary_head_imagenet.1} parent=11 // pred_check_branch
          %254 = sbr.rel (%p252) target = $region28
        $region27: #{auxiliary_head_imagenet.1} parent=11 // pred_region
          _
        $region28: #{auxiliary_head_imagenet.1} parent=11 // pred_fallthru
          _
        // Predicated region
        $region29: #{auxiliary_head_imagenet.1} parent=11 // pred_check
          %p255 = pneg %p137
        $region30: #{auxiliary_head_imagenet.1} parent=11 // pred_check_branch
          %257 = sbr.rel (%p255) target = $region32
        $region31: #{auxiliary_head_imagenet.1} parent=11 // pred_region
          %s259 = ssub.s32 24576, 24576
          %260 = vsyncadd [#allocation7], %s259
          %s261 = sshll.u32 [#allocation6], 4
          %s262 = int_to_ptr.vmem [resolvable:$true] %s261
          %267 = dma.hbm_to_vmem [thread:$0]  %s4, 24576, %s262, [#allocation7], 384, 384, 24
        $region32: #{auxiliary_head_imagenet.1} parent=11 // pred_fallthru
          _
        // Predicated region
        $region33: #{auxiliary_head_imagenet.1} parent=11 // pred_check
          %p268 = pneg %p158
        $region34: #{auxiliary_head_imagenet.1} parent=11 // pred_check_branch
          %270 = sbr.rel (%p268) target = $region36
        $region35: #{auxiliary_head_imagenet.1} parent=11 // pred_region
          %s272 = ssub.s32 6144, 6144
          %273 = vsyncadd [#allocation7], %s272
          %s274 = sshll.u32 [#allocation8], 4
          %s275 = int_to_ptr.vmem [resolvable:$true] %s274
          %280 = dma.hbm_to_vmem [thread:$0]  %s5, 6144, %s275, [#allocation7], 64, 64, 4
        $region36: #{auxiliary_head_imagenet.1} parent=11 // pred_fallthru
          _
        // Predicated region
        $region37: #{auxiliary_head_imagenet.1} parent=11 // pred_check
          %p281 = pneg %p179
        $region38: #{auxiliary_head_imagenet.1} parent=11 // pred_check_branch
          %283 = sbr.rel (%p281) target = $region40
        $region39: #{auxiliary_head_imagenet.1} parent=11 // pred_region
          _
        $region40: #{auxiliary_head_imagenet.1} parent=11 // pred_fallthru
          _
      $region12: #{auxiliary_head_imagenet.1} parent=5 // pred_fallthru
        _
      %p284 = scmp.lt.s32.totalorder %s15, 2
      // Predicated region
      $region41: #{auxiliary_head_imagenet.1} parent=5 // pred_check
        %p285 = pneg %p284
      $region42: #{auxiliary_head_imagenet.1} parent=5 // pred_check_branch
        %287 = sbr.rel (%p285) target = $region44
      $region43: #{auxiliary_head_imagenet.1} parent=5 // pred_region
        _
      $region44: #{auxiliary_head_imagenet.1} parent=5 // pred_fallthru
        _
      %p288 = scmp.le.s32.totalorder 1, %s15
      %p289 = scmp.lt.s32.totalorder %s15, 3
      %p290 = pnand %p288, %p289
      %p291 = pneg %p290
      // Predicated region
      $region45: #{auxiliary_head_imagenet.1} parent=5 // pred_check
        _
      $region46: #{auxiliary_head_imagenet.1} parent=5 // pred_check_branch
        %293 = sbr.rel (%p290) target = $region48
      $region47: #{auxiliary_head_imagenet.1} parent=5 // pred_region
        %s294 = ssub.s32 %s15, 1
        // Predicated region
        $region49: #{auxiliary_head_imagenet.1} parent=47 // pred_check
          %p295 = pneg %p74
        $region50: #{auxiliary_head_imagenet.1} parent=47 // pred_check_branch
          %297 = sbr.rel (%p295) target = $region52
        $region51: #{auxiliary_head_imagenet.1} parent=47 // pred_region
          %298 = dma.done [#allocation5], 8192
        $region52: #{auxiliary_head_imagenet.1} parent=47 // pred_fallthru
          _
        // Predicated region
        $region53: #{auxiliary_head_imagenet.1} parent=47 // pred_check
          %p299 = pneg %p137
        $region54: #{auxiliary_head_imagenet.1} parent=47 // pred_check_branch
          %301 = sbr.rel (%p299) target = $region56
        $region55: #{auxiliary_head_imagenet.1} parent=47 // pred_region
          %302 = dma.done [#allocation7], 24576
        $region56: #{auxiliary_head_imagenet.1} parent=47 // pred_fallthru
          _
        // Predicated region
        $region57: #{auxiliary_head_imagenet.1} parent=47 // pred_check
          %p303 = pneg %p158
        $region58: #{auxiliary_head_imagenet.1} parent=47 // pred_check_branch
          %305 = sbr.rel (%p303) target = $region60
        $region59: #{auxiliary_head_imagenet.1} parent=47 // pred_region
          %306 = dma.done [#allocation7], 6144
        $region60: #{auxiliary_head_imagenet.1} parent=47 // pred_fallthru
          _
        %s307 = smul.u32 16, %s25
        %p308 = scmp.lt.s32.totalorder %s307, 15
        %s309 = scalar_select %p308, %s307, 15
        %s310 = smul.addr %s309, 2
        %s311 = smul.addr %s310, 8
        %s312 = scalar_lea.vmem %s0, %s311
        %p313 = pneg %p53
        %p314 = pneg %p50
        %p315 = pneg %p74
        %p316 = pneg %p71
        %p317 = pneg %p95
        %p318 = pneg %p92
        %p319 = pneg %p116
        %p320 = pneg %p113
        %p321 = pneg %p137
        %p322 = pneg %p134
        %p323 = pneg %p158
        %p324 = pneg %p155
        %p325 = pneg %p179
        %p326 = pneg %p176
        %p327 = pneg %p211
        %p328 = pneg %p208
        %s329 = smul.u32 %s24, %s25
        %s330 = ssub.s32 1, %s24
        %s331 = sadd.s32 %s329, %s330
        %s332 = smul.u32 16, %s331
        %p333 = scmp.lt.s32.totalorder %s332, 31
        %s334 = scalar_select %p333, %s332, 31
        %s335 = smul.addr %s334, 8
        %s336 = scalar_lea.vmem %s7, %s335
        %s337 = smul.u32 16, %s25
        %p338 = scmp.lt.s32.totalorder %s337, 15
        %s339 = scalar_select %p338, %s337, 15
        %s340 = smul.addr %s339, 2
        %s341 = smul.addr %s340, 8
        %s342 = scalar_lea.vmem %s0, %s341
        %s343 = smul.u32 16, %s25
        %s344 = smul.u32 %s24, %s25
        %s345 = ssub.s32 1, %s24
        %s346 = sadd.s32 %s344, %s345
        %s347 = smul.u32 16, %s346
        %p348 = scmp.lt.s32.totalorder %s347, 31
        %s349 = scalar_select %p348, %s347, 31
        %s350 = smul.addr %s349, 8
        %s351 = scalar_lea.vmem %s7, %s350
        %s352 = smul.u32 %s24, %s25
        %s353 = ssub.s32 1, %s24
        %s354 = sadd.s32 %s352, %s353
        %s355 = smul.u32 16, %s354
        %v357 = vld [vmem:[%s342] sm:$0xff]
        %v358 = vld [vmem:[%s342 + $0x8] sm:$0xff]
        %v359 = vld [vmem:[%s342 + $0x10] sm:$0xff]
        %v360 = vld [vmem:[%s342 + $0x18] sm:$0xff]
        %v361 = vld [vmem:[%s342 + $0x20] sm:$0xff]
        %v362 = vld [vmem:[%s342 + $0x28] sm:$0xff]
        %v363 = vld [vmem:[%s342 + $0x30] sm:$0xff]
        %v364 = vld [vmem:[%s342 + $0x38] sm:$0xff]
        %v365 = vld [vmem:[%s342 + $0x40] sm:$0xff]
        %v366 = vld [vmem:[%s342 + $0x48] sm:$0xff]
        %v367 = vld [vmem:[%s342 + $0x50] sm:$0xff]
        %v368 = vld [vmem:[%s342 + $0x58] sm:$0xff]
        %v369 = vld [vmem:[%s342 + $0x60] sm:$0xff]
        %v370 = vld [vmem:[%s342 + $0x68] sm:$0xff]
        %v371 = vld [vmem:[%s342 + $0x70] sm:$0xff]
        %v372 = vld [vmem:[%s342 + $0x78] sm:$0xff]
        %v373 = vld [vmem:[%s342 + $0x80] sm:$0xff]
        %v374 = vld [vmem:[%s342 + $0x88] sm:$0xff]
        %v375 = vld [vmem:[%s342 + $0x90] sm:$0xff]
        %v376 = vld [vmem:[%s342 + $0x98] sm:$0xff]
        %v377 = vld [vmem:[%s342 + $0xa0] sm:$0xff]
        %v378 = vld [vmem:[%s342 + $0xa8] sm:$0xff]
        %v379 = vld [vmem:[%s342 + $0xb0] sm:$0xff]
        %v380 = vld [vmem:[%s342 + $0xb8] sm:$0xff]
        %v381 = vld [vmem:[%s342 + $0xc0] sm:$0xff]
        %v382 = vld [vmem:[%s342 + $0xc8] sm:$0xff]
        %v383 = vld [vmem:[%s342 + $0xd0] sm:$0xff]
        %v384 = vld [vmem:[%s342 + $0xd8] sm:$0xff]
        %v385 = vld [vmem:[%s342 + $0xe0] sm:$0xff]
        %v386 = vld [vmem:[%s342 + $0xe8] sm:$0xff]
        %v387 = vld [vmem:[%s342 + $0xf0] sm:$0xff]
        %v388 = vld [vmem:[%s342 + $0xf8] sm:$0xff]
        %v389 = vmax.f32 %v357, 0.0
        %v390 = vmax.f32 %v358, 0.0
        %v391 = vmax.f32 %v359, 0.0
        %v392 = vmax.f32 %v360, 0.0
        %v393 = vmax.f32 %v361, 0.0
        %v394 = vmax.f32 %v362, 0.0
        %v395 = vmax.f32 %v363, 0.0
        %v396 = vmax.f32 %v364, 0.0
        %v397 = vmax.f32 %v365, 0.0
        %v398 = vmax.f32 %v366, 0.0
        %v399 = vmax.f32 %v367, 0.0
        %v400 = vmax.f32 %v368, 0.0
        %v401 = vmax.f32 %v369, 0.0
        %v402 = vmax.f32 %v370, 0.0
        %v403 = vmax.f32 %v371, 0.0
        %v404 = vmax.f32 %v372, 0.0
        %v405 = vmax.f32 %v373, 0.0
        %v406 = vmax.f32 %v374, 0.0
        %v407 = vmax.f32 %v375, 0.0
        %v408 = vmax.f32 %v376, 0.0
        %v409 = vmax.f32 %v377, 0.0
        %v410 = vmax.f32 %v378, 0.0
        %v411 = vmax.f32 %v379, 0.0
        %v412 = vmax.f32 %v380, 0.0
        %v413 = vmax.f32 %v381, 0.0
        %v414 = vmax.f32 %v382, 0.0
        %v415 = vmax.f32 %v383, 0.0
        %v416 = vmax.f32 %v384, 0.0
        %v417 = vmax.f32 %v385, 0.0
        %v418 = vmax.f32 %v386, 0.0
        %v419 = vmax.f32 %v387, 0.0
        %v420 = vmax.f32 %v388, 0.0
        %v421 = vpack.c.bf16 %v391, %v389
        %v422 = vpack.c.bf16 %v392, %v390
        %v423 = vpack.c.bf16 %v395, %v393
        %v424 = vpack.c.bf16 %v396, %v394
        %v425 = vpack.c.bf16 %v399, %v397
        %v426 = vpack.c.bf16 %v400, %v398
        %v427 = vpack.c.bf16 %v403, %v401
        %v428 = vpack.c.bf16 %v404, %v402
        %v429 = vpack.c.bf16 %v407, %v405
        %v430 = vpack.c.bf16 %v408, %v406
        %v431 = vpack.c.bf16 %v411, %v409
        %v432 = vpack.c.bf16 %v412, %v410
        %v433 = vpack.c.bf16 %v415, %v413
        %v434 = vpack.c.bf16 %v416, %v414
        %v435 = vpack.c.bf16 %v419, %v417
        %v436 = vpack.c.bf16 %v420, %v418
        %v437 = vld [vmem:[#allocation4] sm:$0xff]
        %v438 = vld [vmem:[#allocation4 + $0x8] sm:$0xff]
        %v439 = vld [vmem:[#allocation4 + $0x10] sm:$0xff]
        %v440 = vld [vmem:[#allocation4 + $0x18] sm:$0xff]
        %v441 = vld [vmem:[#allocation4 + $0x20] sm:$0xff]
        %v442 = vld [vmem:[#allocation4 + $0x28] sm:$0xff]
        %v443 = vld [vmem:[#allocation4 + $0x30] sm:$0xff]
        %v444 = vld [vmem:[#allocation4 + $0x38] sm:$0xff]
        %v445 = vld [vmem:[#allocation4 + $0x40] sm:$0xff]
        %v446 = vld [vmem:[#allocation4 + $0x48] sm:$0xff]
        %v447 = vld [vmem:[#allocation4 + $0x50] sm:$0xff]
        %v448 = vld [vmem:[#allocation4 + $0x58] sm:$0xff]
        %v449 = vld [vmem:[#allocation4 + $0x60] sm:$0xff]
        %v450 = vld [vmem:[#allocation4 + $0x68] sm:$0xff]
        %v451 = vld [vmem:[#allocation4 + $0x70] sm:$0xff]
        %v452 = vld [vmem:[#allocation4 + $0x78] sm:$0xff]
        %v453 = vld [vmem:[#allocation4 + $0x80] sm:$0xff]
        %v454 = vld [vmem:[#allocation4 + $0x88] sm:$0xff]
        %v455 = vld [vmem:[#allocation4 + $0x90] sm:$0xff]
        %v456 = vld [vmem:[#allocation4 + $0x98] sm:$0xff]
        %v457 = vld [vmem:[#allocation4 + $0xa0] sm:$0xff]
        %v458 = vld [vmem:[#allocation4 + $0xa8] sm:$0xff]
        %v459 = vld [vmem:[#allocation4 + $0xb0] sm:$0xff]
        %v460 = vld [vmem:[#allocation4 + $0xb8] sm:$0xff]
        %v461 = vld [vmem:[#allocation4 + $0xc0] sm:$0xff]
        %v462 = vld [vmem:[#allocation4 + $0xc8] sm:$0xff]
        %v463 = vld [vmem:[#allocation4 + $0xd0] sm:$0xff]
        %v464 = vld [vmem:[#allocation4 + $0xd8] sm:$0xff]
        %v465 = vld [vmem:[#allocation4 + $0xe0] sm:$0xff]
        %v466 = vld [vmem:[#allocation4 + $0xe8] sm:$0xff]
        %v467 = vld [vmem:[#allocation4 + $0xf0] sm:$0xff]
        %v468 = vld [vmem:[#allocation4 + $0xf8] sm:$0xff]
        %v469 = vld [vmem:[#allocation4 + $0x100] sm:$0xff]
        %v470 = vld [vmem:[#allocation4 + $0x108] sm:$0xff]
        %v471 = vld [vmem:[#allocation4 + $0x110] sm:$0xff]
        %v472 = vld [vmem:[#allocation4 + $0x118] sm:$0xff]
        %v473 = vld [vmem:[#allocation4 + $0x120] sm:$0xff]
        %v474 = vld [vmem:[#allocation4 + $0x128] sm:$0xff]
        %v475 = vld [vmem:[#allocation4 + $0x130] sm:$0xff]
        %v476 = vld [vmem:[#allocation4 + $0x138] sm:$0xff]
        %v477 = vld [vmem:[#allocation4 + $0x140] sm:$0xff]
        %v478 = vld [vmem:[#allocation4 + $0x148] sm:$0xff]
        %v479 = vld [vmem:[#allocation4 + $0x150] sm:$0xff]
        %v480 = vld [vmem:[#allocation4 + $0x158] sm:$0xff]
        %v481 = vld [vmem:[#allocation4 + $0x160] sm:$0xff]
        %v482 = vld [vmem:[#allocation4 + $0x168] sm:$0xff]
        %v483 = vld [vmem:[#allocation4 + $0x170] sm:$0xff]
        %v484 = vld [vmem:[#allocation4 + $0x178] sm:$0xff]
        %v485 = vld [vmem:[#allocation4 + $0x180] sm:$0xff]
        %v486 = vld [vmem:[#allocation4 + $0x188] sm:$0xff]
        %v487 = vld [vmem:[#allocation4 + $0x190] sm:$0xff]
        %v488 = vld [vmem:[#allocation4 + $0x198] sm:$0xff]
        %v489 = vld [vmem:[#allocation4 + $0x1a0] sm:$0xff]
        %v490 = vld [vmem:[#allocation4 + $0x1a8] sm:$0xff]
        %v491 = vld [vmem:[#allocation4 + $0x1b0] sm:$0xff]
        %v492 = vld [vmem:[#allocation4 + $0x1b8] sm:$0xff]
        %v493 = vld [vmem:[#allocation4 + $0x1c0] sm:$0xff]
        %v494 = vld [vmem:[#allocation4 + $0x1c8] sm:$0xff]
        %v495 = vld [vmem:[#allocation4 + $0x1d0] sm:$0xff]
        %v496 = vld [vmem:[#allocation4 + $0x1d8] sm:$0xff]
        %v497 = vld [vmem:[#allocation4 + $0x1e0] sm:$0xff]
        %v498 = vld [vmem:[#allocation4 + $0x1e8] sm:$0xff]
        %v499 = vld [vmem:[#allocation4 + $0x1f0] sm:$0xff]
        %v500 = vld [vmem:[#allocation4 + $0x1f8] sm:$0xff]
        %v565 = vunpack.c.l.b16 %v437
        %v566 = vunpack.c.h.b16 %v437
        %v567 = vunpack.c.l.b16 %v438
        %v568 = vunpack.c.h.b16 %v438
        %v569 = vunpack.c.l.b16 %v439
        %v570 = vunpack.c.h.b16 %v439
        %v571 = vunpack.c.l.b16 %v440
        %v572 = vunpack.c.h.b16 %v440
        %v573 = vunpack.c.l.b16 %v441
        %v574 = vunpack.c.h.b16 %v441
        %v575 = vunpack.c.l.b16 %v442
        %v576 = vunpack.c.h.b16 %v442
        %v577 = vunpack.c.l.b16 %v443
        %v578 = vunpack.c.h.b16 %v443
        %v579 = vunpack.c.l.b16 %v444
        %v580 = vunpack.c.h.b16 %v444
        %v581 = vunpack.c.l.b16 %v445
        %v582 = vunpack.c.h.b16 %v445
        %v583 = vunpack.c.l.b16 %v446
        %v584 = vunpack.c.h.b16 %v446
        %v585 = vunpack.c.l.b16 %v447
        %v586 = vunpack.c.h.b16 %v447
        %v587 = vunpack.c.l.b16 %v448
        %v588 = vunpack.c.h.b16 %v448
        %v589 = vunpack.c.l.b16 %v449
        %v590 = vunpack.c.h.b16 %v449
        %v591 = vunpack.c.l.b16 %v450
        %v592 = vunpack.c.h.b16 %v450
        %v593 = vunpack.c.l.b16 %v451
        %v594 = vunpack.c.h.b16 %v451
        %v595 = vunpack.c.l.b16 %v452
        %v596 = vunpack.c.h.b16 %v452
        %v597 = vunpack.c.l.b16 %v453
        %v598 = vunpack.c.h.b16 %v453
        %v599 = vunpack.c.l.b16 %v454
        %v600 = vunpack.c.h.b16 %v454
        %v601 = vunpack.c.l.b16 %v455
        %v602 = vunpack.c.h.b16 %v455
        %v603 = vunpack.c.l.b16 %v456
        %v604 = vunpack.c.h.b16 %v456
        %v605 = vunpack.c.l.b16 %v457
        %v606 = vunpack.c.h.b16 %v457
        %v607 = vunpack.c.l.b16 %v458
        %v608 = vunpack.c.h.b16 %v458
        %v609 = vunpack.c.l.b16 %v459
        %v610 = vunpack.c.h.b16 %v459
        %v611 = vunpack.c.l.b16 %v460
        %v612 = vunpack.c.h.b16 %v460
        %v613 = vunpack.c.l.b16 %v461
        %v614 = vunpack.c.h.b16 %v461
        %v615 = vunpack.c.l.b16 %v462
        %v616 = vunpack.c.h.b16 %v462
        %v617 = vunpack.c.l.b16 %v463
        %v618 = vunpack.c.h.b16 %v463
        %v619 = vunpack.c.l.b16 %v464
        %v620 = vunpack.c.h.b16 %v464
        %v621 = vunpack.c.l.b16 %v465
        %v622 = vunpack.c.h.b16 %v465
        %v623 = vunpack.c.l.b16 %v466
        %v624 = vunpack.c.h.b16 %v466
        %v625 = vunpack.c.l.b16 %v467
        %v626 = vunpack.c.h.b16 %v467
        %v627 = vunpack.c.l.b16 %v468
        %v628 = vunpack.c.h.b16 %v468
        %v629 = vunpack.c.l.b16 %v469
        %v630 = vunpack.c.h.b16 %v469
        %v631 = vunpack.c.l.b16 %v470
        %v632 = vunpack.c.h.b16 %v470
        %v633 = vunpack.c.l.b16 %v471
        %v634 = vunpack.c.h.b16 %v471
        %v635 = vunpack.c.l.b16 %v472
        %v636 = vunpack.c.h.b16 %v472
        %v637 = vunpack.c.l.b16 %v473
        %v638 = vunpack.c.h.b16 %v473
        %v639 = vunpack.c.l.b16 %v474
        %v640 = vunpack.c.h.b16 %v474
        %v641 = vunpack.c.l.b16 %v475
        %v642 = vunpack.c.h.b16 %v475
        %v643 = vunpack.c.l.b16 %v476
        %v644 = vunpack.c.h.b16 %v476
        %v645 = vunpack.c.l.b16 %v477
        %v646 = vunpack.c.h.b16 %v477
        %v647 = vunpack.c.l.b16 %v478
        %v648 = vunpack.c.h.b16 %v478
        %v649 = vunpack.c.l.b16 %v479
        %v650 = vunpack.c.h.b16 %v479
        %v651 = vunpack.c.l.b16 %v480
        %v652 = vunpack.c.h.b16 %v480
        %v653 = vunpack.c.l.b16 %v481
        %v654 = vunpack.c.h.b16 %v481
        %v655 = vunpack.c.l.b16 %v482
        %v656 = vunpack.c.h.b16 %v482
        %v657 = vunpack.c.l.b16 %v483
        %v658 = vunpack.c.h.b16 %v483
        %v659 = vunpack.c.l.b16 %v484
        %v660 = vunpack.c.h.b16 %v484
        %v661 = vunpack.c.l.b16 %v485
        %v662 = vunpack.c.h.b16 %v485
        %v663 = vunpack.c.l.b16 %v486
        %v664 = vunpack.c.h.b16 %v486
        %v665 = vunpack.c.l.b16 %v487
        %v666 = vunpack.c.h.b16 %v487
        %v667 = vunpack.c.l.b16 %v488
        %v668 = vunpack.c.h.b16 %v488
        %v669 = vunpack.c.l.b16 %v489
        %v670 = vunpack.c.h.b16 %v489
        %v671 = vunpack.c.l.b16 %v490
        %v672 = vunpack.c.h.b16 %v490
        %v673 = vunpack.c.l.b16 %v491
        %v674 = vunpack.c.h.b16 %v491
        %v675 = vunpack.c.l.b16 %v492
        %v676 = vunpack.c.h.b16 %v492
        %v677 = vunpack.c.l.b16 %v493
        %v678 = vunpack.c.h.b16 %v493
        %v679 = vunpack.c.l.b16 %v494
        %v680 = vunpack.c.h.b16 %v494
        %v681 = vunpack.c.l.b16 %v495
        %v682 = vunpack.c.h.b16 %v495
        %v683 = vunpack.c.l.b16 %v496
        %v684 = vunpack.c.h.b16 %v496
        %v685 = vunpack.c.l.b16 %v497
        %v686 = vunpack.c.h.b16 %v497
        %v687 = vunpack.c.l.b16 %v498
        %v688 = vunpack.c.h.b16 %v498
        %v689 = vunpack.c.l.b16 %v499
        %v690 = vunpack.c.h.b16 %v499
        %v691 = vunpack.c.l.b16 %v500
        %v692 = vunpack.c.h.b16 %v500
        %v693 = vpack.c.b16 %v569, %v565
        %v694 = vpack.c.b16 %v570, %v566
        %v695 = vpack.c.b16 %v571, %v567
        %v696 = vpack.c.b16 %v572, %v568
        %v697 = vpack.c.b16 %v577, %v573
        %v698 = vpack.c.b16 %v578, %v574
        %v699 = vpack.c.b16 %v579, %v575
        %v700 = vpack.c.b16 %v580, %v576
        %v701 = vpack.c.b16 %v585, %v581
        %v702 = vpack.c.b16 %v586, %v582
        %v703 = vpack.c.b16 %v587, %v583
        %v704 = vpack.c.b16 %v588, %v584
        %v705 = vpack.c.b16 %v593, %v589
        %v706 = vpack.c.b16 %v594, %v590
        %v707 = vpack.c.b16 %v595, %v591
        %v708 = vpack.c.b16 %v596, %v592
        %v709 = vpack.c.b16 %v601, %v597
        %v710 = vpack.c.b16 %v602, %v598
        %v711 = vpack.c.b16 %v603, %v599
        %v712 = vpack.c.b16 %v604, %v600
        %v713 = vpack.c.b16 %v609, %v605
        %v714 = vpack.c.b16 %v610, %v606
        %v715 = vpack.c.b16 %v611, %v607
        %v716 = vpack.c.b16 %v612, %v608
        %v717 = vpack.c.b16 %v617, %v613
        %v718 = vpack.c.b16 %v618, %v614
        %v719 = vpack.c.b16 %v619, %v615
        %v720 = vpack.c.b16 %v620, %v616
        %v721 = vpack.c.b16 %v625, %v621
        %v722 = vpack.c.b16 %v626, %v622
        %v723 = vpack.c.b16 %v627, %v623
        %v724 = vpack.c.b16 %v628, %v624
        %v725 = vpack.c.b16 %v633, %v629
        %v726 = vpack.c.b16 %v634, %v630
        %v727 = vpack.c.b16 %v635, %v631
        %v728 = vpack.c.b16 %v636, %v632
        %v729 = vpack.c.b16 %v641, %v637
        %v730 = vpack.c.b16 %v642, %v638
        %v731 = vpack.c.b16 %v643, %v639
        %v732 = vpack.c.b16 %v644, %v640
        %v733 = vpack.c.b16 %v649, %v645
        %v734 = vpack.c.b16 %v650, %v646
        %v735 = vpack.c.b16 %v651, %v647
        %v736 = vpack.c.b16 %v652, %v648
        %v737 = vpack.c.b16 %v657, %v653
        %v738 = vpack.c.b16 %v658, %v654
        %v739 = vpack.c.b16 %v659, %v655
        %v740 = vpack.c.b16 %v660, %v656
        %v741 = vpack.c.b16 %v665, %v661
        %v742 = vpack.c.b16 %v666, %v662
        %v743 = vpack.c.b16 %v667, %v663
        %v744 = vpack.c.b16 %v668, %v664
        %v745 = vpack.c.b16 %v673, %v669
        %v746 = vpack.c.b16 %v674, %v670
        %v747 = vpack.c.b16 %v675, %v671
        %v748 = vpack.c.b16 %v676, %v672
        %v749 = vpack.c.b16 %v681, %v677
        %v750 = vpack.c.b16 %v682, %v678
        %v751 = vpack.c.b16 %v683, %v679
        %v752 = vpack.c.b16 %v684, %v680
        %v753 = vpack.c.b16 %v689, %v685
        %v754 = vpack.c.b16 %v690, %v686
        %v755 = vpack.c.b16 %v691, %v687
        %v756 = vpack.c.b16 %v692, %v688
        %821 = vmatprep.subr.bf16.mxu0 %v722
        %822 = vmatpush1.bf16.msra.mxu0 %v721
        %823 = vmatprep.subr.bf16.mxu0 %v718
        %824 = vmatpush1.bf16.msra.mxu0 %v717
        %825 = vmatprep.subr.bf16.mxu0 %v714
        %826 = vmatpush1.bf16.msra.mxu0 %v713
        %827 = vmatprep.subr.bf16.mxu0 %v710
        %828 = vmatpush1.bf16.msra.mxu0 %v709
        %829 = vmatprep.subr.bf16.mxu0 %v706
        %830 = vmatpush1.bf16.msra.mxu0 %v705
        %831 = vmatprep.subr.bf16.mxu0 %v702
        %832 = vmatpush1.bf16.msra.mxu0 %v701
        %833 = vmatprep.subr.bf16.mxu0 %v698
        %834 = vmatpush1.bf16.msra.mxu0 %v697
        %835 = vmatprep.subr.bf16.mxu0 %v694
        %836 = vmatpush1.bf16.msra.mxu0 %v693
        %837 = vmatprep.subr.bf16.mxu0 %v754
        %838 = vmatpush2.bf16.msra.mxu0 %v753
        %839 = vmatprep.subr.bf16.mxu0 %v750
        %840 = vmatpush2.bf16.msra.mxu0 %v749
        %841 = vmatprep.subr.bf16.mxu0 %v746
        %842 = vmatpush2.bf16.msra.mxu0 %v745
        %843 = vmatprep.subr.bf16.mxu0 %v742
        %844 = vmatpush2.bf16.msra.mxu0 %v741
        %845 = vmatprep.subr.bf16.mxu0 %v738
        %846 = vmatpush2.bf16.msra.mxu0 %v737
        %847 = vmatprep.subr.bf16.mxu0 %v734
        %848 = vmatpush2.bf16.msra.mxu0 %v733
        %849 = vmatprep.subr.bf16.mxu0 %v730
        %850 = vmatpush2.bf16.msra.mxu0 %v729
        %851 = vmatprep.subr.bf16.mxu0 %v726
        %852 = vmatpush2.bf16.msra.mxu0 %v725
        %853 = vmatprep.mubr.bf16.mxu0 %v422
        %854 = vmatmul.mubr.bf16.gmra.mxu0 %v421
        %v855 = vpop.f32.mrf.mxu0
        %v856 = vadd.f32 0.0, %v855
        %v857 = vpop.f32.mrf.mxu0
        %v858 = vadd.f32 0.0, %v857
        %v859 = vpop.f32.mrf.mxu0
        %v860 = vadd.f32 0.0, %v859
        %v861 = vpop.f32.mrf.mxu0
        %v862 = vadd.f32 0.0, %v861
        %863 = vmatprep.mubr.bf16.mxu0 %v424
        %864 = vmatmul.mubr.bf16.gmra.mxu0 %v423
        %v865 = vpop.f32.mrf.mxu0
        %v866 = vadd.f32 0.0, %v865
        %v867 = vpop.f32.mrf.mxu0
        %v868 = vadd.f32 0.0, %v867
        %v869 = vpop.f32.mrf.mxu0
        %v870 = vadd.f32 0.0, %v869
        %v871 = vpop.f32.mrf.mxu0
        %v872 = vadd.f32 0.0, %v871
        %873 = vmatprep.mubr.bf16.mxu0 %v426
        %874 = vmatmul.mubr.bf16.gmra.mxu0 %v425
        %v875 = vpop.f32.mrf.mxu0
        %v876 = vadd.f32 0.0, %v875
        %v877 = vpop.f32.mrf.mxu0
        %v878 = vadd.f32 0.0, %v877
        %v879 = vpop.f32.mrf.mxu0
        %v880 = vadd.f32 0.0, %v879
        %v881 = vpop.f32.mrf.mxu0
        %v882 = vadd.f32 0.0, %v881
        %883 = vmatprep.mubr.bf16.mxu0 %v428
        %884 = vmatmul.mubr.bf16.gmra.mxu0 %v427
        %v885 = vpop.f32.mrf.mxu0
        %v886 = vadd.f32 0.0, %v885
        %v887 = vpop.f32.mrf.mxu0
        %v888 = vadd.f32 0.0, %v887
        %v889 = vpop.f32.mrf.mxu0
        %v890 = vadd.f32 0.0, %v889
        %v891 = vpop.f32.mrf.mxu0
        %v892 = vadd.f32 0.0, %v891
        %893 = vmatprep.mubr.bf16.mxu0 %v430
        %894 = vmatmul.mubr.bf16.gmra.mxu0 %v429
        %v895 = vpop.f32.mrf.mxu0
        %v896 = vadd.f32 0.0, %v895
        %v897 = vpop.f32.mrf.mxu0
        %v898 = vadd.f32 0.0, %v897
        %v899 = vpop.f32.mrf.mxu0
        %v900 = vadd.f32 0.0, %v899
        %v901 = vpop.f32.mrf.mxu0
        %v902 = vadd.f32 0.0, %v901
        %903 = vmatprep.mubr.bf16.mxu0 %v432
        %904 = vmatmul.mubr.bf16.gmra.mxu0 %v431
        %v905 = vpop.f32.mrf.mxu0
        %v906 = vadd.f32 0.0, %v905
        %v907 = vpop.f32.mrf.mxu0
        %v908 = vadd.f32 0.0, %v907
        %v909 = vpop.f32.mrf.mxu0
        %v910 = vadd.f32 0.0, %v909
        %v911 = vpop.f32.mrf.mxu0
        %v912 = vadd.f32 0.0, %v911
        %913 = vmatprep.mubr.bf16.mxu0 %v434
        %914 = vmatmul.mubr.bf16.gmra.mxu0 %v433
        %v915 = vpop.f32.mrf.mxu0
        %v916 = vadd.f32 0.0, %v915
        %v917 = vpop.f32.mrf.mxu0
        %v918 = vadd.f32 0.0, %v917
        %v919 = vpop.f32.mrf.mxu0
        %v920 = vadd.f32 0.0, %v919
        %v921 = vpop.f32.mrf.mxu0
        %v922 = vadd.f32 0.0, %v921
        %923 = vmatprep.mubr.bf16.mxu0 %v436
        %924 = vmatmul.mubr.bf16.gmra.mxu0 %v435
        %v925 = vpop.f32.mrf.mxu0
        %v926 = vadd.f32 0.0, %v925
        %v927 = vpop.f32.mrf.mxu0
        %v928 = vadd.f32 0.0, %v927
        %v929 = vpop.f32.mrf.mxu0
        %v930 = vadd.f32 0.0, %v929
        %v931 = vpop.f32.mrf.mxu0
        %v932 = vadd.f32 0.0, %v931
        %933 = vdwg.mxu0
        %934 = vmatprep.subr.bf16.mxu0 %v724
        %935 = vmatpush1.bf16.msra.mxu0 %v723
        %936 = vmatprep.subr.bf16.mxu0 %v720
        %937 = vmatpush1.bf16.msra.mxu0 %v719
        %938 = vmatprep.subr.bf16.mxu0 %v716
        %939 = vmatpush1.bf16.msra.mxu0 %v715
        %940 = vmatprep.subr.bf16.mxu0 %v712
        %941 = vmatpush1.bf16.msra.mxu0 %v711
        %942 = vmatprep.subr.bf16.mxu0 %v708
        %943 = vmatpush1.bf16.msra.mxu0 %v707
        %944 = vmatprep.subr.bf16.mxu0 %v704
        %945 = vmatpush1.bf16.msra.mxu0 %v703
        %946 = vmatprep.subr.bf16.mxu0 %v700
        %947 = vmatpush1.bf16.msra.mxu0 %v699
        %948 = vmatprep.subr.bf16.mxu0 %v696
        %949 = vmatpush1.bf16.msra.mxu0 %v695
        %950 = vmatprep.subr.bf16.mxu0 %v756
        %951 = vmatpush2.bf16.msra.mxu0 %v755
        %952 = vmatprep.subr.bf16.mxu0 %v752
        %953 = vmatpush2.bf16.msra.mxu0 %v751
        %954 = vmatprep.subr.bf16.mxu0 %v748
        %955 = vmatpush2.bf16.msra.mxu0 %v747
        %956 = vmatprep.subr.bf16.mxu0 %v744
        %957 = vmatpush2.bf16.msra.mxu0 %v743
        %958 = vmatprep.subr.bf16.mxu0 %v740
        %959 = vmatpush2.bf16.msra.mxu0 %v739
        %960 = vmatprep.subr.bf16.mxu0 %v736
        %961 = vmatpush2.bf16.msra.mxu0 %v735
        %962 = vmatprep.subr.bf16.mxu0 %v732
        %963 = vmatpush2.bf16.msra.mxu0 %v731
        %964 = vmatprep.subr.bf16.mxu0 %v728
        %965 = vmatpush2.bf16.msra.mxu0 %v727
        %966 = vmatprep.mubr.bf16.mxu0 %v422
        %967 = vmatmul.mubr.bf16.gmra.mxu0 %v421
        %v968 = vpop.f32.mrf.mxu0
        %v969 = vadd.f32 0.0, %v968
        %v970 = vpop.f32.mrf.mxu0
        %v971 = vadd.f32 0.0, %v970
        %v972 = vpop.f32.mrf.mxu0
        %v973 = vadd.f32 0.0, %v972
        %v974 = vpop.f32.mrf.mxu0
        %v975 = vadd.f32 0.0, %v974
        %976 = vmatprep.mubr.bf16.mxu0 %v424
        %977 = vmatmul.mubr.bf16.gmra.mxu0 %v423
        %v978 = vpop.f32.mrf.mxu0
        %v979 = vadd.f32 0.0, %v978
        %v980 = vpop.f32.mrf.mxu0
        %v981 = vadd.f32 0.0, %v980
        %v982 = vpop.f32.mrf.mxu0
        %v983 = vadd.f32 0.0, %v982
        %v984 = vpop.f32.mrf.mxu0
        %v985 = vadd.f32 0.0, %v984
        %986 = vmatprep.mubr.bf16.mxu0 %v426
        %987 = vmatmul.mubr.bf16.gmra.mxu0 %v425
        %v988 = vpop.f32.mrf.mxu0
        %v989 = vadd.f32 0.0, %v988
        %v990 = vpop.f32.mrf.mxu0
        %v991 = vadd.f32 0.0, %v990
        %v992 = vpop.f32.mrf.mxu0
        %v993 = vadd.f32 0.0, %v992
        %v994 = vpop.f32.mrf.mxu0
        %v995 = vadd.f32 0.0, %v994
        %996 = vmatprep.mubr.bf16.mxu0 %v428
        %997 = vmatmul.mubr.bf16.gmra.mxu0 %v427
        %v998 = vpop.f32.mrf.mxu0
        %v999 = vadd.f32 0.0, %v998
        %v1000 = vpop.f32.mrf.mxu0
        %v1001 = vadd.f32 0.0, %v1000
        %v1002 = vpop.f32.mrf.mxu0
        %v1003 = vadd.f32 0.0, %v1002
        %v1004 = vpop.f32.mrf.mxu0
        %v1005 = vadd.f32 0.0, %v1004
        %1006 = vmatprep.mubr.bf16.mxu0 %v430
        %1007 = vmatmul.mubr.bf16.gmra.mxu0 %v429
        %v1008 = vpop.f32.mrf.mxu0
        %v1009 = vadd.f32 0.0, %v1008
        %v1010 = vpop.f32.mrf.mxu0
        %v1011 = vadd.f32 0.0, %v1010
        %v1012 = vpop.f32.mrf.mxu0
        %v1013 = vadd.f32 0.0, %v1012
        %v1014 = vpop.f32.mrf.mxu0
        %v1015 = vadd.f32 0.0, %v1014
        %1016 = vmatprep.mubr.bf16.mxu0 %v432
        %1017 = vmatmul.mubr.bf16.gmra.mxu0 %v431
        %v1018 = vpop.f32.mrf.mxu0
        %v1019 = vadd.f32 0.0, %v1018
        %v1020 = vpop.f32.mrf.mxu0
        %v1021 = vadd.f32 0.0, %v1020
        %v1022 = vpop.f32.mrf.mxu0
        %v1023 = vadd.f32 0.0, %v1022
        %v1024 = vpop.f32.mrf.mxu0
        %v1025 = vadd.f32 0.0, %v1024
        %1026 = vmatprep.mubr.bf16.mxu0 %v434
        %1027 = vmatmul.mubr.bf16.gmra.mxu0 %v433
        %v1028 = vpop.f32.mrf.mxu0
        %v1029 = vadd.f32 0.0, %v1028
        %v1030 = vpop.f32.mrf.mxu0
        %v1031 = vadd.f32 0.0, %v1030
        %v1032 = vpop.f32.mrf.mxu0
        %v1033 = vadd.f32 0.0, %v1032
        %v1034 = vpop.f32.mrf.mxu0
        %v1035 = vadd.f32 0.0, %v1034
        %1036 = vmatprep.mubr.bf16.mxu0 %v436
        %1037 = vmatmul.mubr.bf16.gmra.mxu0 %v435
        %v1038 = vpop.f32.mrf.mxu0
        %v1039 = vadd.f32 0.0, %v1038
        %v1040 = vpop.f32.mrf.mxu0
        %v1041 = vadd.f32 0.0, %v1040
        %v1042 = vpop.f32.mrf.mxu0
        %v1043 = vadd.f32 0.0, %v1042
        %v1044 = vpop.f32.mrf.mxu0
        %v1045 = vadd.f32 0.0, %v1044
        %1046 = vdwg.mxu0
        %p1047 = scmp.eq.s32.totalorder %s24, 0
        %p1048 = scmp.eq.s32.totalorder %s25, 0
        %p1049 = pnand %p1047, %p1048
        %p1050 = pneg %p1049
        // Predicated region
        $region61: #{auxiliary_head_imagenet.1} parent=47 // pred_check
          _
        $region62: #{auxiliary_head_imagenet.1} parent=47 // pred_check_branch
          %1052 = sbr.rel (%p1049) target = $region64
        $region63: #{auxiliary_head_imagenet.1} parent=47 // pred_region
          %v1053 = vlaneseq
          %vm1054 = vcmp.ge.s32.totalorder %v1053, 0
          %vm1055 = vcmp.lt.s32.totalorder %v1053, 512
          %vm1056 = vmand %vm1054, %vm1055
          %1057 = vst.msk [vmem:[#allocation2] sm:$0xf] %vm1056, 0.0
          %1058 = vst.msk [vmem:[#allocation3] sm:$0xf] %vm1056, 0.0
          %1059 = vst [vmem:[%s351] sm:$0xff] 0.0
          %1060 = vst [vmem:[%s351 + $0x8] sm:$0xff] 0.0
          %1061 = vst [vmem:[%s351 + $0x10] sm:$0xff] 0.0
          %1062 = vst [vmem:[%s351 + $0x18] sm:$0xff] 0.0
          %1063 = vst [vmem:[%s351 + $0x20] sm:$0xff] 0.0
          %1064 = vst [vmem:[%s351 + $0x28] sm:$0xff] 0.0
          %1065 = vst [vmem:[%s351 + $0x30] sm:$0xff] 0.0
          %1066 = vst [vmem:[%s351 + $0x38] sm:$0xff] 0.0
          %1067 = vst [vmem:[%s351 + $0x40] sm:$0xff] 0.0
          %1068 = vst [vmem:[%s351 + $0x48] sm:$0xff] 0.0
          %1069 = vst [vmem:[%s351 + $0x50] sm:$0xff] 0.0
          %1070 = vst [vmem:[%s351 + $0x58] sm:$0xff] 0.0
          %1071 = vst [vmem:[%s351 + $0x60] sm:$0xff] 0.0
          %1072 = vst [vmem:[%s351 + $0x68] sm:$0xff] 0.0
          %1073 = vst [vmem:[%s351 + $0x70] sm:$0xff] 0.0
          %1074 = vst [vmem:[%s351 + $0x78] sm:$0xff] 0.0
        $region64: #{auxiliary_head_imagenet.1} parent=47 // pred_fallthru
          _
        // Predicated region
        $region65: #{auxiliary_head_imagenet.1} parent=47 // pred_check
          %p1075 = pneg %p1047
        $region66: #{auxiliary_head_imagenet.1} parent=47 // pred_check_branch
          %1077 = sbr.rel (%p1075) target = $region68
        $region67: #{auxiliary_head_imagenet.1} parent=47 // pred_region
          %v1078 = vld [vmem:[#allocation2] sm:$0xf]
          %v1079 = vadd.f32 %v856, %v860
          %v1080 = vadd.f32 %v1079, %v866
          %v1081 = vadd.f32 %v1080, %v870
          %v1082 = vadd.f32 %v1081, %v876
          %v1083 = vadd.f32 %v1082, %v880
          %v1084 = vadd.f32 %v1083, %v886
          %v1085 = vadd.f32 %v1084, %v890
          %v1086 = vadd.f32 %v1085, %v896
          %v1087 = vadd.f32 %v1086, %v900
          %v1088 = vadd.f32 %v1087, %v906
          %v1089 = vadd.f32 %v1088, %v910
          %v1090 = vadd.f32 %v1089, %v916
          %v1091 = vadd.f32 %v1090, %v920
          %v1092 = vadd.f32 %v1091, %v926
          %v1093 = vadd.f32 %v1092, %v930
          %v1094 = vrot.slane %v1093, 4
          %v1095 = vadd.f32 %v1093, %v1094
          %v1096 = vrot.slane %v1095, 2
          %v1097 = vadd.f32 %v1095, %v1096
          %v1098 = vrot.slane %v1097, 1
          %v1099 = vadd.f32 %v1097, %v1098
          %v1100 = vadd.f32 %v858, %v862
          %v1101 = vadd.f32 %v1100, %v868
          %v1102 = vadd.f32 %v1101, %v872
          %v1103 = vadd.f32 %v1102, %v878
          %v1104 = vadd.f32 %v1103, %v882
          %v1105 = vadd.f32 %v1104, %v888
          %v1106 = vadd.f32 %v1105, %v892
          %v1107 = vadd.f32 %v1106, %v898
          %v1108 = vadd.f32 %v1107, %v902
          %v1109 = vadd.f32 %v1108, %v908
          %v1110 = vadd.f32 %v1109, %v912
          %v1111 = vadd.f32 %v1110, %v918
          %v1112 = vadd.f32 %v1111, %v922
          %v1113 = vadd.f32 %v1112, %v928
          %v1114 = vadd.f32 %v1113, %v932
          %v1115 = vrot.slane %v1114, 4
          %v1116 = vadd.f32 %v1114, %v1115
          %v1117 = vrot.slane %v1116, 2
          %v1118 = vadd.f32 %v1116, %v1117
          %v1119 = vrot.slane %v1118, 1
          %v1120 = vadd.f32 %v1118, %v1119
          %v1121 = vadd.f32 %v969, %v973
          %v1122 = vadd.f32 %v1121, %v979
          %v1123 = vadd.f32 %v1122, %v983
          %v1124 = vadd.f32 %v1123, %v989
          %v1125 = vadd.f32 %v1124, %v993
          %v1126 = vadd.f32 %v1125, %v999
          %v1127 = vadd.f32 %v1126, %v1003
          %v1128 = vadd.f32 %v1127, %v1009
          %v1129 = vadd.f32 %v1128, %v1013
          %v1130 = vadd.f32 %v1129, %v1019
          %v1131 = vadd.f32 %v1130, %v1023
          %v1132 = vadd.f32 %v1131, %v1029
          %v1133 = vadd.f32 %v1132, %v1033
          %v1134 = vadd.f32 %v1133, %v1039
          %v1135 = vadd.f32 %v1134, %v1043
          %v1136 = vrot.slane %v1135, 4
          %v1137 = vadd.f32 %v1135, %v1136
          %v1138 = vrot.slane %v1137, 2
          %v1139 = vadd.f32 %v1137, %v1138
          %v1140 = vrot.slane %v1139, 1
          %v1141 = vadd.f32 %v1139, %v1140
          %v1142 = vadd.f32 %v971, %v975
          %v1143 = vadd.f32 %v1142, %v981
          %v1144 = vadd.f32 %v1143, %v985
          %v1145 = vadd.f32 %v1144, %v991
          %v1146 = vadd.f32 %v1145, %v995
          %v1147 = vadd.f32 %v1146, %v1001
          %v1148 = vadd.f32 %v1147, %v1005
          %v1149 = vadd.f32 %v1148, %v1011
          %v1150 = vadd.f32 %v1149, %v1015
          %v1151 = vadd.f32 %v1150, %v1021
          %v1152 = vadd.f32 %v1151, %v1025
          %v1153 = vadd.f32 %v1152, %v1031
          %v1154 = vadd.f32 %v1153, %v1035
          %v1155 = vadd.f32 %v1154, %v1041
          %v1156 = vadd.f32 %v1155, %v1045
          %v1157 = vrot.slane %v1156, 4
          %v1158 = vadd.f32 %v1156, %v1157
          %v1159 = vrot.slane %v1158, 2
          %v1160 = vadd.f32 %v1158, %v1159
          %v1161 = vrot.slane %v1160, 1
          %v1162 = vadd.f32 %v1160, %v1161
          %v1167 = vcombine.low %v1099, %v1120
          %v1168 = vcombine.low %v1141, %v1162
          %v1170 = vunpack.c.l.s4 1966171168
          %v1171 = vunpack.c.0.s8 %v1170
          %v1172 = vlaneseq
          %v1173 = vshrl.u32 %v1172, 7
          %v1174 = vsub.s32 %v1171, %v1173
          %v1175 = vrot.slane %v1167, %v1174
          %v1177 = vunpack.c.l.s4 1966171168
          %v1178 = vunpack.c.0.s8 %v1177
          %v1179 = vlaneseq
          %v1180 = vshrl.u32 %v1179, 7
          %v1181 = vsub.s32 %v1178, %v1180
          %v1182 = vrot.slane %v1168, %v1181
          %v1183 = vcombine.low %v1175, %v1182
          %v1185 = vunpack.c.l.s4 1966171168
          %v1186 = vunpack.c.0.s8 %v1185
          %v1187 = vlaneseq
          %v1188 = vshrl.u32 %v1187, 7
          %v1189 = vsub.s32 %v1186, %v1188
          %v1190 = vrot.slane %v1183, %v1189
          %v1192 = vadd.f32 %v1078, %v1190
          %v1193 = vlaneseq
          %vm1194 = vcmp.ge.s32.totalorder %v1193, 0
          %vm1195 = vcmp.lt.s32.totalorder %v1193, 512
          %vm1196 = vmand %vm1194, %vm1195
          %1197 = vst.msk [vmem:[#allocation2] sm:$0xf] %vm1196, %v1192
          %v1198 = vld [vmem:[#allocation3] sm:$0xf]
          %v1199 = vmul.f32 %v856, %v856
          %v1200 = vmul.f32 %v858, %v858
          %v1201 = vmul.f32 %v969, %v969
          %v1202 = vmul.f32 %v971, %v971
          %v1203 = vmul.f32 %v860, %v860
          %v1204 = vmul.f32 %v862, %v862
          %v1205 = vmul.f32 %v973, %v973
          %v1206 = vmul.f32 %v975, %v975
          %v1207 = vmul.f32 %v866, %v866
          %v1208 = vmul.f32 %v868, %v868
          %v1209 = vmul.f32 %v979, %v979
          %v1210 = vmul.f32 %v981, %v981
          %v1211 = vmul.f32 %v870, %v870
          %v1212 = vmul.f32 %v872, %v872
          %v1213 = vmul.f32 %v983, %v983
          %v1214 = vmul.f32 %v985, %v985
          %v1215 = vmul.f32 %v876, %v876
          %v1216 = vmul.f32 %v878, %v878
          %v1217 = vmul.f32 %v989, %v989
          %v1218 = vmul.f32 %v991, %v991
          %v1219 = vmul.f32 %v880, %v880
          %v1220 = vmul.f32 %v882, %v882
          %v1221 = vmul.f32 %v993, %v993
          %v1222 = vmul.f32 %v995, %v995
          %v1223 = vmul.f32 %v886, %v886
          %v1224 = vmul.f32 %v888, %v888
          %v1225 = vmul.f32 %v999, %v999
          %v1226 = vmul.f32 %v1001, %v1001
          %v1227 = vmul.f32 %v890, %v890
          %v1228 = vmul.f32 %v892, %v892
          %v1229 = vmul.f32 %v1003, %v1003
          %v1230 = vmul.f32 %v1005, %v1005
          %v1231 = vmul.f32 %v896, %v896
          %v1232 = vmul.f32 %v898, %v898
          %v1233 = vmul.f32 %v1009, %v1009
          %v1234 = vmul.f32 %v1011, %v1011
          %v1235 = vmul.f32 %v900, %v900
          %v1236 = vmul.f32 %v902, %v902
          %v1237 = vmul.f32 %v1013, %v1013
          %v1238 = vmul.f32 %v1015, %v1015
          %v1239 = vmul.f32 %v906, %v906
          %v1240 = vmul.f32 %v908, %v908
          %v1241 = vmul.f32 %v1019, %v1019
          %v1242 = vmul.f32 %v1021, %v1021
          %v1243 = vmul.f32 %v910, %v910
          %v1244 = vmul.f32 %v912, %v912
          %v1245 = vmul.f32 %v1023, %v1023
          %v1246 = vmul.f32 %v1025, %v1025
          %v1247 = vmul.f32 %v916, %v916
          %v1248 = vmul.f32 %v918, %v918
          %v1249 = vmul.f32 %v1029, %v1029
          %v1250 = vmul.f32 %v1031, %v1031
          %v1251 = vmul.f32 %v920, %v920
          %v1252 = vmul.f32 %v922, %v922
          %v1253 = vmul.f32 %v1033, %v1033
          %v1254 = vmul.f32 %v1035, %v1035
          %v1255 = vmul.f32 %v926, %v926
          %v1256 = vmul.f32 %v928, %v928
          %v1257 = vmul.f32 %v1039, %v1039
          %v1258 = vmul.f32 %v1041, %v1041
          %v1259 = vmul.f32 %v930, %v930
          %v1260 = vmul.f32 %v932, %v932
          %v1261 = vmul.f32 %v1043, %v1043
          %v1262 = vmul.f32 %v1045, %v1045
          %v1263 = vadd.f32 %v1199, %v1203
          %v1264 = vadd.f32 %v1263, %v1207
          %v1265 = vadd.f32 %v1264, %v1211
          %v1266 = vadd.f32 %v1265, %v1215
          %v1267 = vadd.f32 %v1266, %v1219
          %v1268 = vadd.f32 %v1267, %v1223
          %v1269 = vadd.f32 %v1268, %v1227
          %v1270 = vadd.f32 %v1269, %v1231
          %v1271 = vadd.f32 %v1270, %v1235
          %v1272 = vadd.f32 %v1271, %v1239
          %v1273 = vadd.f32 %v1272, %v1243
          %v1274 = vadd.f32 %v1273, %v1247
          %v1275 = vadd.f32 %v1274, %v1251
          %v1276 = vadd.f32 %v1275, %v1255
          %v1277 = vadd.f32 %v1276, %v1259
          %v1278 = vrot.slane %v1277, 4
          %v1279 = vadd.f32 %v1277, %v1278
          %v1280 = vrot.slane %v1279, 2
          %v1281 = vadd.f32 %v1279, %v1280
          %v1282 = vrot.slane %v1281, 1
          %v1283 = vadd.f32 %v1281, %v1282
          %v1284 = vadd.f32 %v1200, %v1204
          %v1285 = vadd.f32 %v1284, %v1208
          %v1286 = vadd.f32 %v1285, %v1212
          %v1287 = vadd.f32 %v1286, %v1216
          %v1288 = vadd.f32 %v1287, %v1220
          %v1289 = vadd.f32 %v1288, %v1224
          %v1290 = vadd.f32 %v1289, %v1228
          %v1291 = vadd.f32 %v1290, %v1232
          %v1292 = vadd.f32 %v1291, %v1236
          %v1293 = vadd.f32 %v1292, %v1240
          %v1294 = vadd.f32 %v1293, %v1244
          %v1295 = vadd.f32 %v1294, %v1248
          %v1296 = vadd.f32 %v1295, %v1252
          %v1297 = vadd.f32 %v1296, %v1256
          %v1298 = vadd.f32 %v1297, %v1260
          %v1299 = vrot.slane %v1298, 4
          %v1300 = vadd.f32 %v1298, %v1299
          %v1301 = vrot.slane %v1300, 2
          %v1302 = vadd.f32 %v1300, %v1301
          %v1303 = vrot.slane %v1302, 1
          %v1304 = vadd.f32 %v1302, %v1303
          %v1305 = vadd.f32 %v1201, %v1205
          %v1306 = vadd.f32 %v1305, %v1209
          %v1307 = vadd.f32 %v1306, %v1213
          %v1308 = vadd.f32 %v1307, %v1217
          %v1309 = vadd.f32 %v1308, %v1221
          %v1310 = vadd.f32 %v1309, %v1225
          %v1311 = vadd.f32 %v1310, %v1229
          %v1312 = vadd.f32 %v1311, %v1233
          %v1313 = vadd.f32 %v1312, %v1237
          %v1314 = vadd.f32 %v1313, %v1241
          %v1315 = vadd.f32 %v1314, %v1245
          %v1316 = vadd.f32 %v1315, %v1249
          %v1317 = vadd.f32 %v1316, %v1253
          %v1318 = vadd.f32 %v1317, %v1257
          %v1319 = vadd.f32 %v1318, %v1261
          %v1320 = vrot.slane %v1319, 4
          %v1321 = vadd.f32 %v1319, %v1320
          %v1322 = vrot.slane %v1321, 2
          %v1323 = vadd.f32 %v1321, %v1322
          %v1324 = vrot.slane %v1323, 1
          %v1325 = vadd.f32 %v1323, %v1324
          %v1326 = vadd.f32 %v1202, %v1206
          %v1327 = vadd.f32 %v1326, %v1210
          %v1328 = vadd.f32 %v1327, %v1214
          %v1329 = vadd.f32 %v1328, %v1218
          %v1330 = vadd.f32 %v1329, %v1222
          %v1331 = vadd.f32 %v1330, %v1226
          %v1332 = vadd.f32 %v1331, %v1230
          %v1333 = vadd.f32 %v1332, %v1234
          %v1334 = vadd.f32 %v1333, %v1238
          %v1335 = vadd.f32 %v1334, %v1242
          %v1336 = vadd.f32 %v1335, %v1246
          %v1337 = vadd.f32 %v1336, %v1250
          %v1338 = vadd.f32 %v1337, %v1254
          %v1339 = vadd.f32 %v1338, %v1258
          %v1340 = vadd.f32 %v1339, %v1262
          %v1341 = vrot.slane %v1340, 4
          %v1342 = vadd.f32 %v1340, %v1341
          %v1343 = vrot.slane %v1342, 2
          %v1344 = vadd.f32 %v1342, %v1343
          %v1345 = vrot.slane %v1344, 1
          %v1346 = vadd.f32 %v1344, %v1345
          %v1351 = vcombine.low %v1283, %v1304
          %v1352 = vcombine.low %v1325, %v1346
          %v1354 = vunpack.c.l.s4 1966171168
          %v1355 = vunpack.c.0.s8 %v1354
          %v1356 = vlaneseq
          %v1357 = vshrl.u32 %v1356, 7
          %v1358 = vsub.s32 %v1355, %v1357
          %v1359 = vrot.slane %v1351, %v1358
          %v1361 = vunpack.c.l.s4 1966171168
          %v1362 = vunpack.c.0.s8 %v1361
          %v1363 = vlaneseq
          %v1364 = vshrl.u32 %v1363, 7
          %v1365 = vsub.s32 %v1362, %v1364
          %v1366 = vrot.slane %v1352, %v1365
          %v1367 = vcombine.low %v1359, %v1366
          %v1369 = vunpack.c.l.s4 1966171168
          %v1370 = vunpack.c.0.s8 %v1369
          %v1371 = vlaneseq
          %v1372 = vshrl.u32 %v1371, 7
          %v1373 = vsub.s32 %v1370, %v1372
          %v1374 = vrot.slane %v1367, %v1373
          %v1376 = vadd.f32 %v1198, %v1374
          %1377 = vst.msk [vmem:[#allocation3] sm:$0xf] %vm1196, %v1376
        $region68: #{auxiliary_head_imagenet.1} parent=47 // pred_fallthru
          _
        %p1378 = scmp.eq.s32.totalorder %s24, 1
        // Predicated region
        $region69: #{auxiliary_head_imagenet.1} parent=47 // pred_check
          %p1379 = pneg %p1378
        $region70: #{auxiliary_head_imagenet.1} parent=47 // pred_check_branch
          %1381 = sbr.rel (%p1379) target = $region72
        $region71: #{auxiliary_head_imagenet.1} parent=47 // pred_region
          %v1382 = vld [vmem:[#allocation2] sm:$0xf]
          %v1383 = vld [vmem:[#allocation3] sm:$0xf]
          %v1384 = vadd.f32 %v1382, 0.0
          %v1385 = vadd.f32 %v1383, 0.0
          %v1387 = vrot.slane %v1382, 1
          %v1389 = vadd.f32 %v1384, %v1387
          %v1391 = vrot.slane %v1383, 1
          %v1393 = vadd.f32 %v1385, %v1391
          %v1394 = vrot.slane %v1382, 2
          %v1396 = vadd.f32 %v1389, %v1394
          %v1397 = vrot.slane %v1383, 2
          %v1399 = vadd.f32 %v1393, %v1397
          %v1400 = vrot.slane %v1382, 3
          %v1402 = vadd.f32 %v1396, %v1400
          %v1403 = vrot.slane %v1383, 3
          %v1405 = vadd.f32 %v1399, %v1403
          %v1406 = vmul.f32 %v1402, 0.125
          %v1407 = vmul.f32 %v1405, 0.125
          %v1408 = vmul.f32 %v1406, %v1406
          %v1409 = vsub.f32 %v1407, %v1408
          %v1410 = vmax.f32 %v1409, 0.0
          %v1411 = vld [vmem:[%s2] sm:$0x1]
          %v1412 = vadd.f32 %v1410, 1e-05
          %v1413 = vrsqrt.pop %v1412
          %v1414 = vmul.f32 %v1411, %v1413
          %v1415 = vld [vmem:[%s3] sm:$0x1]
          %v1416 = vmul.f32 %v1406, %v1414
          %v1417 = vsub.f32 %v1415, %v1416
          %v1418 = vlaneseq
          %v1419 = vshrl.u32 %v1418, 7
          %v1420 = vsub.s32 0, %v1419
          %v1421 = vrot.slane %v1414, %v1420
          %v1422 = vmul.f32 %v856, %v1421
          %v1423 = vmul.f32 %v858, %v1421
          %v1424 = vmul.f32 %v969, %v1421
          %v1425 = vmul.f32 %v971, %v1421
          %v1426 = vmul.f32 %v860, %v1421
          %v1427 = vmul.f32 %v862, %v1421
          %v1428 = vmul.f32 %v973, %v1421
          %v1429 = vmul.f32 %v975, %v1421
          %v1430 = vmul.f32 %v866, %v1421
          %v1431 = vmul.f32 %v868, %v1421
          %v1432 = vmul.f32 %v979, %v1421
          %v1433 = vmul.f32 %v981, %v1421
          %v1434 = vmul.f32 %v870, %v1421
          %v1435 = vmul.f32 %v872, %v1421
          %v1436 = vmul.f32 %v983, %v1421
          %v1437 = vmul.f32 %v985, %v1421
          %v1438 = vmul.f32 %v876, %v1421
          %v1439 = vmul.f32 %v878, %v1421
          %v1440 = vmul.f32 %v989, %v1421
          %v1441 = vmul.f32 %v991, %v1421
          %v1442 = vmul.f32 %v880, %v1421
          %v1443 = vmul.f32 %v882, %v1421
          %v1444 = vmul.f32 %v993, %v1421
          %v1445 = vmul.f32 %v995, %v1421
          %v1446 = vmul.f32 %v886, %v1421
          %v1447 = vmul.f32 %v888, %v1421
          %v1448 = vmul.f32 %v999, %v1421
          %v1449 = vmul.f32 %v1001, %v1421
          %v1450 = vmul.f32 %v890, %v1421
          %v1451 = vmul.f32 %v892, %v1421
          %v1452 = vmul.f32 %v1003, %v1421
          %v1453 = vmul.f32 %v1005, %v1421
          %v1454 = vmul.f32 %v896, %v1421
          %v1455 = vmul.f32 %v898, %v1421
          %v1456 = vmul.f32 %v1009, %v1421
          %v1457 = vmul.f32 %v1011, %v1421
          %v1458 = vmul.f32 %v900, %v1421
          %v1459 = vmul.f32 %v902, %v1421
          %v1460 = vmul.f32 %v1013, %v1421
          %v1461 = vmul.f32 %v1015, %v1421
          %v1462 = vmul.f32 %v906, %v1421
          %v1463 = vmul.f32 %v908, %v1421
          %v1464 = vmul.f32 %v1019, %v1421
          %v1465 = vmul.f32 %v1021, %v1421
          %v1466 = vmul.f32 %v910, %v1421
          %v1467 = vmul.f32 %v912, %v1421
          %v1468 = vmul.f32 %v1023, %v1421
          %v1469 = vmul.f32 %v1025, %v1421
          %v1470 = vmul.f32 %v916, %v1421
          %v1471 = vmul.f32 %v918, %v1421
          %v1472 = vmul.f32 %v1029, %v1421
          %v1473 = vmul.f32 %v1031, %v1421
          %v1474 = vmul.f32 %v920, %v1421
          %v1475 = vmul.f32 %v922, %v1421
          %v1476 = vmul.f32 %v1033, %v1421
          %v1477 = vmul.f32 %v1035, %v1421
          %v1478 = vmul.f32 %v926, %v1421
          %v1479 = vmul.f32 %v928, %v1421
          %v1480 = vmul.f32 %v1039, %v1421
          %v1481 = vmul.f32 %v1041, %v1421
          %v1482 = vmul.f32 %v930, %v1421
          %v1483 = vmul.f32 %v932, %v1421
          %v1484 = vmul.f32 %v1043, %v1421
          %v1485 = vmul.f32 %v1045, %v1421
          %v1486 = vlaneseq
          %v1487 = vshrl.u32 %v1486, 7
          %v1488 = vsub.s32 0, %v1487
          %v1489 = vrot.slane %v1417, %v1488
          %v1490 = vadd.f32 %v1422, %v1489
          %v1491 = vadd.f32 %v1423, %v1489
          %v1492 = vadd.f32 %v1424, %v1489
          %v1493 = vadd.f32 %v1425, %v1489
          %v1494 = vadd.f32 %v1426, %v1489
          %v1495 = vadd.f32 %v1427, %v1489
          %v1496 = vadd.f32 %v1428, %v1489
          %v1497 = vadd.f32 %v1429, %v1489
          %v1498 = vadd.f32 %v1430, %v1489
          %v1499 = vadd.f32 %v1431, %v1489
          %v1500 = vadd.f32 %v1432, %v1489
          %v1501 = vadd.f32 %v1433, %v1489
          %v1502 = vadd.f32 %v1434, %v1489
          %v1503 = vadd.f32 %v1435, %v1489
          %v1504 = vadd.f32 %v1436, %v1489
          %v1505 = vadd.f32 %v1437, %v1489
          %v1506 = vadd.f32 %v1438, %v1489
          %v1507 = vadd.f32 %v1439, %v1489
          %v1508 = vadd.f32 %v1440, %v1489
          %v1509 = vadd.f32 %v1441, %v1489
          %v1510 = vadd.f32 %v1442, %v1489
          %v1511 = vadd.f32 %v1443, %v1489
          %v1512 = vadd.f32 %v1444, %v1489
          %v1513 = vadd.f32 %v1445, %v1489
          %v1514 = vadd.f32 %v1446, %v1489
          %v1515 = vadd.f32 %v1447, %v1489
          %v1516 = vadd.f32 %v1448, %v1489
          %v1517 = vadd.f32 %v1449, %v1489
          %v1518 = vadd.f32 %v1450, %v1489
          %v1519 = vadd.f32 %v1451, %v1489
          %v1520 = vadd.f32 %v1452, %v1489
          %v1521 = vadd.f32 %v1453, %v1489
          %v1522 = vadd.f32 %v1454, %v1489
          %v1523 = vadd.f32 %v1455, %v1489
          %v1524 = vadd.f32 %v1456, %v1489
          %v1525 = vadd.f32 %v1457, %v1489
          %v1526 = vadd.f32 %v1458, %v1489
          %v1527 = vadd.f32 %v1459, %v1489
          %v1528 = vadd.f32 %v1460, %v1489
          %v1529 = vadd.f32 %v1461, %v1489
          %v1530 = vadd.f32 %v1462, %v1489
          %v1531 = vadd.f32 %v1463, %v1489
          %v1532 = vadd.f32 %v1464, %v1489
          %v1533 = vadd.f32 %v1465, %v1489
          %v1534 = vadd.f32 %v1466, %v1489
          %v1535 = vadd.f32 %v1467, %v1489
          %v1536 = vadd.f32 %v1468, %v1489
          %v1537 = vadd.f32 %v1469, %v1489
          %v1538 = vadd.f32 %v1470, %v1489
          %v1539 = vadd.f32 %v1471, %v1489
          %v1540 = vadd.f32 %v1472, %v1489
          %v1541 = vadd.f32 %v1473, %v1489
          %v1542 = vadd.f32 %v1474, %v1489
          %v1543 = vadd.f32 %v1475, %v1489
          %v1544 = vadd.f32 %v1476, %v1489
          %v1545 = vadd.f32 %v1477, %v1489
          %v1546 = vadd.f32 %v1478, %v1489
          %v1547 = vadd.f32 %v1479, %v1489
          %v1548 = vadd.f32 %v1480, %v1489
          %v1549 = vadd.f32 %v1481, %v1489
          %v1550 = vadd.f32 %v1482, %v1489
          %v1551 = vadd.f32 %v1483, %v1489
          %v1552 = vadd.f32 %v1484, %v1489
          %v1553 = vadd.f32 %v1485, %v1489
          %v1554 = vmax.f32 %v1490, 0.0
          %v1555 = vmax.f32 %v1491, 0.0
          %v1556 = vmax.f32 %v1492, 0.0
          %v1557 = vmax.f32 %v1493, 0.0
          %v1558 = vmax.f32 %v1494, 0.0
          %v1559 = vmax.f32 %v1495, 0.0
          %v1560 = vmax.f32 %v1496, 0.0
          %v1561 = vmax.f32 %v1497, 0.0
          %v1562 = vmax.f32 %v1498, 0.0
          %v1563 = vmax.f32 %v1499, 0.0
          %v1564 = vmax.f32 %v1500, 0.0
          %v1565 = vmax.f32 %v1501, 0.0
          %v1566 = vmax.f32 %v1502, 0.0
          %v1567 = vmax.f32 %v1503, 0.0
          %v1568 = vmax.f32 %v1504, 0.0
          %v1569 = vmax.f32 %v1505, 0.0
          %v1570 = vmax.f32 %v1506, 0.0
          %v1571 = vmax.f32 %v1507, 0.0
          %v1572 = vmax.f32 %v1508, 0.0
          %v1573 = vmax.f32 %v1509, 0.0
          %v1574 = vmax.f32 %v1510, 0.0
          %v1575 = vmax.f32 %v1511, 0.0
          %v1576 = vmax.f32 %v1512, 0.0
          %v1577 = vmax.f32 %v1513, 0.0
          %v1578 = vmax.f32 %v1514, 0.0
          %v1579 = vmax.f32 %v1515, 0.0
          %v1580 = vmax.f32 %v1516, 0.0
          %v1581 = vmax.f32 %v1517, 0.0
          %v1582 = vmax.f32 %v1518, 0.0
          %v1583 = vmax.f32 %v1519, 0.0
          %v1584 = vmax.f32 %v1520, 0.0
          %v1585 = vmax.f32 %v1521, 0.0
          %v1586 = vmax.f32 %v1522, 0.0
          %v1587 = vmax.f32 %v1523, 0.0
          %v1588 = vmax.f32 %v1524, 0.0
          %v1589 = vmax.f32 %v1525, 0.0
          %v1590 = vmax.f32 %v1526, 0.0
          %v1591 = vmax.f32 %v1527, 0.0
          %v1592 = vmax.f32 %v1528, 0.0
          %v1593 = vmax.f32 %v1529, 0.0
          %v1594 = vmax.f32 %v1530, 0.0
          %v1595 = vmax.f32 %v1531, 0.0
          %v1596 = vmax.f32 %v1532, 0.0
          %v1597 = vmax.f32 %v1533, 0.0
          %v1598 = vmax.f32 %v1534, 0.0
          %v1599 = vmax.f32 %v1535, 0.0
          %v1600 = vmax.f32 %v1536, 0.0
          %v1601 = vmax.f32 %v1537, 0.0
          %v1602 = vmax.f32 %v1538, 0.0
          %v1603 = vmax.f32 %v1539, 0.0
          %v1604 = vmax.f32 %v1540, 0.0
          %v1605 = vmax.f32 %v1541, 0.0
          %v1606 = vmax.f32 %v1542, 0.0
          %v1607 = vmax.f32 %v1543, 0.0
          %v1608 = vmax.f32 %v1544, 0.0
          %v1609 = vmax.f32 %v1545, 0.0
          %v1610 = vmax.f32 %v1546, 0.0
          %v1611 = vmax.f32 %v1547, 0.0
          %v1612 = vmax.f32 %v1548, 0.0
          %v1613 = vmax.f32 %v1549, 0.0
          %v1614 = vmax.f32 %v1550, 0.0
          %v1615 = vmax.f32 %v1551, 0.0
          %v1616 = vmax.f32 %v1552, 0.0
          %v1617 = vmax.f32 %v1553, 0.0
          %v1618 = vpack.c.bf16 %v1558, %v1554
          %v1619 = vpack.c.bf16 %v1559, %v1555
          %v1620 = vpack.c.bf16 %v1560, %v1556
          %v1621 = vpack.c.bf16 %v1561, %v1557
          %v1622 = vpack.c.bf16 %v1566, %v1562
          %v1623 = vpack.c.bf16 %v1567, %v1563
          %v1624 = vpack.c.bf16 %v1568, %v1564
          %v1625 = vpack.c.bf16 %v1569, %v1565
          %v1626 = vpack.c.bf16 %v1574, %v1570
          %v1627 = vpack.c.bf16 %v1575, %v1571
          %v1628 = vpack.c.bf16 %v1576, %v1572
          %v1629 = vpack.c.bf16 %v1577, %v1573
          %v1630 = vpack.c.bf16 %v1582, %v1578
          %v1631 = vpack.c.bf16 %v1583, %v1579
          %v1632 = vpack.c.bf16 %v1584, %v1580
          %v1633 = vpack.c.bf16 %v1585, %v1581
          %v1634 = vpack.c.bf16 %v1590, %v1586
          %v1635 = vpack.c.bf16 %v1591, %v1587
          %v1636 = vpack.c.bf16 %v1592, %v1588
          %v1637 = vpack.c.bf16 %v1593, %v1589
          %v1638 = vpack.c.bf16 %v1598, %v1594
          %v1639 = vpack.c.bf16 %v1599, %v1595
          %v1640 = vpack.c.bf16 %v1600, %v1596
          %v1641 = vpack.c.bf16 %v1601, %v1597
          %v1642 = vpack.c.bf16 %v1606, %v1602
          %v1643 = vpack.c.bf16 %v1607, %v1603
          %v1644 = vpack.c.bf16 %v1608, %v1604
          %v1645 = vpack.c.bf16 %v1609, %v1605
          %v1646 = vpack.c.bf16 %v1614, %v1610
          %v1647 = vpack.c.bf16 %v1615, %v1611
          %v1648 = vpack.c.bf16 %v1616, %v1612
          %v1649 = vpack.c.bf16 %v1617, %v1613
          %v1650 = vld [vmem:[#allocation6] sm:$0xff]
          %v1651 = vld [vmem:[#allocation6 + $0x8] sm:$0xff]
          %v1652 = vld [vmem:[#allocation6 + $0x10] sm:$0xff]
          %v1653 = vld [vmem:[#allocation6 + $0x18] sm:$0xff]
          %v1654 = vld [vmem:[#allocation6 + $0x20] sm:$0xff]
          %v1655 = vld [vmem:[#allocation6 + $0x28] sm:$0xff]
          %v1656 = vld [vmem:[#allocation6 + $0x30] sm:$0xff]
          %v1657 = vld [vmem:[#allocation6 + $0x38] sm:$0xff]
          %v1658 = vld [vmem:[#allocation6 + $0x40] sm:$0xff]
          %v1659 = vld [vmem:[#allocation6 + $0x48] sm:$0xff]
          %v1660 = vld [vmem:[#allocation6 + $0x50] sm:$0xff]
          %v1661 = vld [vmem:[#allocation6 + $0x58] sm:$0xff]
          %v1662 = vld [vmem:[#allocation6 + $0x60] sm:$0xff]
          %v1663 = vld [vmem:[#allocation6 + $0x68] sm:$0xff]
          %v1664 = vld [vmem:[#allocation6 + $0x70] sm:$0xff]
          %v1665 = vld [vmem:[#allocation6 + $0x78] sm:$0xff]
          %v1666 = vld [vmem:[#allocation6 + $0x80] sm:$0xff]
          %v1667 = vld [vmem:[#allocation6 + $0x88] sm:$0xff]
          %v1668 = vld [vmem:[#allocation6 + $0x90] sm:$0xff]
          %v1669 = vld [vmem:[#allocation6 + $0x98] sm:$0xff]
          %v1670 = vld [vmem:[#allocation6 + $0xa0] sm:$0xff]
          %v1671 = vld [vmem:[#allocation6 + $0xa8] sm:$0xff]
          %v1672 = vld [vmem:[#allocation6 + $0xb0] sm:$0xff]
          %v1673 = vld [vmem:[#allocation6 + $0xb8] sm:$0xff]
          %v1674 = vld [vmem:[#allocation6 + $0xc0] sm:$0xff]
          %v1675 = vld [vmem:[#allocation6 + $0xc8] sm:$0xff]
          %v1676 = vld [vmem:[#allocation6 + $0xd0] sm:$0xff]
          %v1677 = vld [vmem:[#allocation6 + $0xd8] sm:$0xff]
          %v1678 = vld [vmem:[#allocation6 + $0xe0] sm:$0xff]
          %v1679 = vld [vmem:[#allocation6 + $0xe8] sm:$0xff]
          %v1680 = vld [vmem:[#allocation6 + $0xf0] sm:$0xff]
          %v1681 = vld [vmem:[#allocation6 + $0xf8] sm:$0xff]
          %v1682 = vld [vmem:[#allocation6 + $0x100] sm:$0xff]
          %v1683 = vld [vmem:[#allocation6 + $0x108] sm:$0xff]
          %v1684 = vld [vmem:[#allocation6 + $0x110] sm:$0xff]
          %v1685 = vld [vmem:[#allocation6 + $0x118] sm:$0xff]
          %v1686 = vld [vmem:[#allocation6 + $0x120] sm:$0xff]
          %v1687 = vld [vmem:[#allocation6 + $0x128] sm:$0xff]
          %v1688 = vld [vmem:[#allocation6 + $0x130] sm:$0xff]
          %v1689 = vld [vmem:[#allocation6 + $0x138] sm:$0xff]
          %v1690 = vld [vmem:[#allocation6 + $0x140] sm:$0xff]
          %v1691 = vld [vmem:[#allocation6 + $0x148] sm:$0xff]
          %v1692 = vld [vmem:[#allocation6 + $0x150] sm:$0xff]
          %v1693 = vld [vmem:[#allocation6 + $0x158] sm:$0xff]
          %v1694 = vld [vmem:[#allocation6 + $0x160] sm:$0xff]
          %v1695 = vld [vmem:[#allocation6 + $0x168] sm:$0xff]
          %v1696 = vld [vmem:[#allocation6 + $0x170] sm:$0xff]
          %v1697 = vld [vmem:[#allocation6 + $0x178] sm:$0xff]
          %v1698 = vld [vmem:[#allocation6 + $0x180] sm:$0xff]
          %v1699 = vld [vmem:[#allocation6 + $0x188] sm:$0xff]
          %v1700 = vld [vmem:[#allocation6 + $0x190] sm:$0xff]
          %v1701 = vld [vmem:[#allocation6 + $0x198] sm:$0xff]
          %v1702 = vld [vmem:[#allocation6 + $0x1a0] sm:$0xff]
          %v1703 = vld [vmem:[#allocation6 + $0x1a8] sm:$0xff]
          %v1704 = vld [vmem:[#allocation6 + $0x1b0] sm:$0xff]
          %v1705 = vld [vmem:[#allocation6 + $0x1b8] sm:$0xff]
          %v1706 = vld [vmem:[#allocation6 + $0x1c0] sm:$0xff]
          %v1707 = vld [vmem:[#allocation6 + $0x1c8] sm:$0xff]
          %v1708 = vld [vmem:[#allocation6 + $0x1d0] sm:$0xff]
          %v1709 = vld [vmem:[#allocation6 + $0x1d8] sm:$0xff]
          %v1710 = vld [vmem:[#allocation6 + $0x1e0] sm:$0xff]
          %v1711 = vld [vmem:[#allocation6 + $0x1e8] sm:$0xff]
          %v1712 = vld [vmem:[#allocation6 + $0x1f0] sm:$0xff]
          %v1713 = vld [vmem:[#allocation6 + $0x1f8] sm:$0xff]
          %v1714 = vld [vmem:[#allocation6 + $0x200] sm:$0xff]
          %v1715 = vld [vmem:[#allocation6 + $0x208] sm:$0xff]
          %v1716 = vld [vmem:[#allocation6 + $0x210] sm:$0xff]
          %v1717 = vld [vmem:[#allocation6 + $0x218] sm:$0xff]
          %v1718 = vld [vmem:[#allocation6 + $0x220] sm:$0xff]
          %v1719 = vld [vmem:[#allocation6 + $0x228] sm:$0xff]
          %v1720 = vld [vmem:[#allocation6 + $0x230] sm:$0xff]
          %v1721 = vld [vmem:[#allocation6 + $0x238] sm:$0xff]
          %v1722 = vld [vmem:[#allocation6 + $0x240] sm:$0xff]
          %v1723 = vld [vmem:[#allocation6 + $0x248] sm:$0xff]
          %v1724 = vld [vmem:[#allocation6 + $0x250] sm:$0xff]
          %v1725 = vld [vmem:[#allocation6 + $0x258] sm:$0xff]
          %v1726 = vld [vmem:[#allocation6 + $0x260] sm:$0xff]
          %v1727 = vld [vmem:[#allocation6 + $0x268] sm:$0xff]
          %v1728 = vld [vmem:[#allocation6 + $0x270] sm:$0xff]
          %v1729 = vld [vmem:[#allocation6 + $0x278] sm:$0xff]
          %v1730 = vld [vmem:[#allocation6 + $0x280] sm:$0xff]
          %v1731 = vld [vmem:[#allocation6 + $0x288] sm:$0xff]
          %v1732 = vld [vmem:[#allocation6 + $0x290] sm:$0xff]
          %v1733 = vld [vmem:[#allocation6 + $0x298] sm:$0xff]
          %v1734 = vld [vmem:[#allocation6 + $0x2a0] sm:$0xff]
          %v1735 = vld [vmem:[#allocation6 + $0x2a8] sm:$0xff]
          %v1736 = vld [vmem:[#allocation6 + $0x2b0] sm:$0xff]
          %v1737 = vld [vmem:[#allocation6 + $0x2b8] sm:$0xff]
          %v1738 = vld [vmem:[#allocation6 + $0x2c0] sm:$0xff]
          %v1739 = vld [vmem:[#allocation6 + $0x2c8] sm:$0xff]
          %v1740 = vld [vmem:[#allocation6 + $0x2d0] sm:$0xff]
          %v1741 = vld [vmem:[#allocation6 + $0x2d8] sm:$0xff]
          %v1742 = vld [vmem:[#allocation6 + $0x2e0] sm:$0xff]
          %v1743 = vld [vmem:[#allocation6 + $0x2e8] sm:$0xff]
          %v1744 = vld [vmem:[#allocation6 + $0x2f0] sm:$0xff]
          %v1745 = vld [vmem:[#allocation6 + $0x2f8] sm:$0xff]
          %v1746 = vld [vmem:[#allocation6 + $0x300] sm:$0xff]
          %v1747 = vld [vmem:[#allocation6 + $0x308] sm:$0xff]
          %v1748 = vld [vmem:[#allocation6 + $0x310] sm:$0xff]
          %v1749 = vld [vmem:[#allocation6 + $0x318] sm:$0xff]
          %v1750 = vld [vmem:[#allocation6 + $0x320] sm:$0xff]
          %v1751 = vld [vmem:[#allocation6 + $0x328] sm:$0xff]
          %v1752 = vld [vmem:[#allocation6 + $0x330] sm:$0xff]
          %v1753 = vld [vmem:[#allocation6 + $0x338] sm:$0xff]
          %v1754 = vld [vmem:[#allocation6 + $0x340] sm:$0xff]
          %v1755 = vld [vmem:[#allocation6 + $0x348] sm:$0xff]
          %v1756 = vld [vmem:[#allocation6 + $0x350] sm:$0xff]
          %v1757 = vld [vmem:[#allocation6 + $0x358] sm:$0xff]
          %v1758 = vld [vmem:[#allocation6 + $0x360] sm:$0xff]
          %v1759 = vld [vmem:[#allocation6 + $0x368] sm:$0xff]
          %v1760 = vld [vmem:[#allocation6 + $0x370] sm:$0xff]
          %v1761 = vld [vmem:[#allocation6 + $0x378] sm:$0xff]
          %v1762 = vld [vmem:[#allocation6 + $0x380] sm:$0xff]
          %v1763 = vld [vmem:[#allocation6 + $0x388] sm:$0xff]
          %v1764 = vld [vmem:[#allocation6 + $0x390] sm:$0xff]
          %v1765 = vld [vmem:[#allocation6 + $0x398] sm:$0xff]
          %v1766 = vld [vmem:[#allocation6 + $0x3a0] sm:$0xff]
          %v1767 = vld [vmem:[#allocation6 + $0x3a8] sm:$0xff]
          %v1768 = vld [vmem:[#allocation6 + $0x3b0] sm:$0xff]
          %v1769 = vld [vmem:[#allocation6 + $0x3b8] sm:$0xff]
          %v1770 = vld [vmem:[#allocation6 + $0x3c0] sm:$0xff]
          %v1771 = vld [vmem:[#allocation6 + $0x3c8] sm:$0xff]
          %v1772 = vld [vmem:[#allocation6 + $0x3d0] sm:$0xff]
          %v1773 = vld [vmem:[#allocation6 + $0x3d8] sm:$0xff]
          %v1774 = vld [vmem:[#allocation6 + $0x3e0] sm:$0xff]
          %v1775 = vld [vmem:[#allocation6 + $0x3e8] sm:$0xff]
          %v1776 = vld [vmem:[#allocation6 + $0x3f0] sm:$0xff]
          %v1777 = vld [vmem:[#allocation6 + $0x3f8] sm:$0xff]
          %v1778 = vld [vmem:[#allocation6 + $0x400] sm:$0xff]
          %v1779 = vld [vmem:[#allocation6 + $0x408] sm:$0xff]
          %v1780 = vld [vmem:[#allocation6 + $0x410] sm:$0xff]
          %v1781 = vld [vmem:[#allocation6 + $0x418] sm:$0xff]
          %v1782 = vld [vmem:[#allocation6 + $0x420] sm:$0xff]
          %v1783 = vld [vmem:[#allocation6 + $0x428] sm:$0xff]
          %v1784 = vld [vmem:[#allocation6 + $0x430] sm:$0xff]
          %v1785 = vld [vmem:[#allocation6 + $0x438] sm:$0xff]
          %v1786 = vld [vmem:[#allocation6 + $0x440] sm:$0xff]
          %v1787 = vld [vmem:[#allocation6 + $0x448] sm:$0xff]
          %v1788 = vld [vmem:[#allocation6 + $0x450] sm:$0xff]
          %v1789 = vld [vmem:[#allocation6 + $0x458] sm:$0xff]
          %v1790 = vld [vmem:[#allocation6 + $0x460] sm:$0xff]
          %v1791 = vld [vmem:[#allocation6 + $0x468] sm:$0xff]
          %v1792 = vld [vmem:[#allocation6 + $0x470] sm:$0xff]
          %v1793 = vld [vmem:[#allocation6 + $0x478] sm:$0xff]
          %v1794 = vld [vmem:[#allocation6 + $0x480] sm:$0xff]
          %v1795 = vld [vmem:[#allocation6 + $0x488] sm:$0xff]
          %v1796 = vld [vmem:[#allocation6 + $0x490] sm:$0xff]
          %v1797 = vld [vmem:[#allocation6 + $0x498] sm:$0xff]
          %v1798 = vld [vmem:[#allocation6 + $0x4a0] sm:$0xff]
          %v1799 = vld [vmem:[#allocation6 + $0x4a8] sm:$0xff]
          %v1800 = vld [vmem:[#allocation6 + $0x4b0] sm:$0xff]
          %v1801 = vld [vmem:[#allocation6 + $0x4b8] sm:$0xff]
          %v1802 = vld [vmem:[#allocation6 + $0x4c0] sm:$0xff]
          %v1803 = vld [vmem:[#allocation6 + $0x4c8] sm:$0xff]
          %v1804 = vld [vmem:[#allocation6 + $0x4d0] sm:$0xff]
          %v1805 = vld [vmem:[#allocation6 + $0x4d8] sm:$0xff]
          %v1806 = vld [vmem:[#allocation6 + $0x4e0] sm:$0xff]
          %v1807 = vld [vmem:[#allocation6 + $0x4e8] sm:$0xff]
          %v1808 = vld [vmem:[#allocation6 + $0x4f0] sm:$0xff]
          %v1809 = vld [vmem:[#allocation6 + $0x4f8] sm:$0xff]
          %v1810 = vld [vmem:[#allocation6 + $0x500] sm:$0xff]
          %v1811 = vld [vmem:[#allocation6 + $0x508] sm:$0xff]
          %v1812 = vld [vmem:[#allocation6 + $0x510] sm:$0xff]
          %v1813 = vld [vmem:[#allocation6 + $0x518] sm:$0xff]
          %v1814 = vld [vmem:[#allocation6 + $0x520] sm:$0xff]
          %v1815 = vld [vmem:[#allocation6 + $0x528] sm:$0xff]
          %v1816 = vld [vmem:[#allocation6 + $0x530] sm:$0xff]
          %v1817 = vld [vmem:[#allocation6 + $0x538] sm:$0xff]
          %v1818 = vld [vmem:[#allocation6 + $0x540] sm:$0xff]
          %v1819 = vld [vmem:[#allocation6 + $0x548] sm:$0xff]
          %v1820 = vld [vmem:[#allocation6 + $0x550] sm:$0xff]
          %v1821 = vld [vmem:[#allocation6 + $0x558] sm:$0xff]
          %v1822 = vld [vmem:[#allocation6 + $0x560] sm:$0xff]
          %v1823 = vld [vmem:[#allocation6 + $0x568] sm:$0xff]
          %v1824 = vld [vmem:[#allocation6 + $0x570] sm:$0xff]
          %v1825 = vld [vmem:[#allocation6 + $0x578] sm:$0xff]
          %v1826 = vld [vmem:[#allocation6 + $0x580] sm:$0xff]
          %v1827 = vld [vmem:[#allocation6 + $0x588] sm:$0xff]
          %v1828 = vld [vmem:[#allocation6 + $0x590] sm:$0xff]
          %v1829 = vld [vmem:[#allocation6 + $0x598] sm:$0xff]
          %v1830 = vld [vmem:[#allocation6 + $0x5a0] sm:$0xff]
          %v1831 = vld [vmem:[#allocation6 + $0x5a8] sm:$0xff]
          %v1832 = vld [vmem:[#allocation6 + $0x5b0] sm:$0xff]
          %v1833 = vld [vmem:[#allocation6 + $0x5b8] sm:$0xff]
          %v1834 = vld [vmem:[#allocation6 + $0x5c0] sm:$0xff]
          %v1835 = vld [vmem:[#allocation6 + $0x5c8] sm:$0xff]
          %v1836 = vld [vmem:[#allocation6 + $0x5d0] sm:$0xff]
          %v1837 = vld [vmem:[#allocation6 + $0x5d8] sm:$0xff]
          %v1838 = vld [vmem:[#allocation6 + $0x5e0] sm:$0xff]
          %v1839 = vld [vmem:[#allocation6 + $0x5e8] sm:$0xff]
          %v1840 = vld [vmem:[#allocation6 + $0x5f0] sm:$0xff]
          %v1841 = vld [vmem:[#allocation6 + $0x5f8] sm:$0xff]
          %v2034 = vunpack.c.l.b16 %v1650
          %v2035 = vunpack.c.h.b16 %v1650
          %v2036 = vunpack.c.l.b16 %v1651
          %v2037 = vunpack.c.h.b16 %v1651
          %v2038 = vunpack.c.l.b16 %v1652
          %v2039 = vunpack.c.h.b16 %v1652
          %v2040 = vunpack.c.l.b16 %v1653
          %v2041 = vunpack.c.h.b16 %v1653
          %v2042 = vunpack.c.l.b16 %v1654
          %v2043 = vunpack.c.h.b16 %v1654
          %v2044 = vunpack.c.l.b16 %v1655
          %v2045 = vunpack.c.h.b16 %v1655
          %v2046 = vunpack.c.l.b16 %v1656
          %v2047 = vunpack.c.h.b16 %v1656
          %v2048 = vunpack.c.l.b16 %v1657
          %v2049 = vunpack.c.h.b16 %v1657
          %v2050 = vunpack.c.l.b16 %v1658
          %v2051 = vunpack.c.h.b16 %v1658
          %v2052 = vunpack.c.l.b16 %v1659
          %v2053 = vunpack.c.h.b16 %v1659
          %v2054 = vunpack.c.l.b16 %v1660
          %v2055 = vunpack.c.h.b16 %v1660
          %v2056 = vunpack.c.l.b16 %v1661
          %v2057 = vunpack.c.h.b16 %v1661
          %v2058 = vunpack.c.l.b16 %v1662
          %v2059 = vunpack.c.h.b16 %v1662
          %v2060 = vunpack.c.l.b16 %v1663
          %v2061 = vunpack.c.h.b16 %v1663
          %v2062 = vunpack.c.l.b16 %v1664
          %v2063 = vunpack.c.h.b16 %v1664
          %v2064 = vunpack.c.l.b16 %v1665
          %v2065 = vunpack.c.h.b16 %v1665
          %v2066 = vunpack.c.l.b16 %v1666
          %v2067 = vunpack.c.h.b16 %v1666
          %v2068 = vunpack.c.l.b16 %v1667
          %v2069 = vunpack.c.h.b16 %v1667
          %v2070 = vunpack.c.l.b16 %v1668
          %v2071 = vunpack.c.h.b16 %v1668
          %v2072 = vunpack.c.l.b16 %v1669
          %v2073 = vunpack.c.h.b16 %v1669
          %v2074 = vunpack.c.l.b16 %v1670
          %v2075 = vunpack.c.h.b16 %v1670
          %v2076 = vunpack.c.l.b16 %v1671
          %v2077 = vunpack.c.h.b16 %v1671
          %v2078 = vunpack.c.l.b16 %v1672
          %v2079 = vunpack.c.h.b16 %v1672
          %v2080 = vunpack.c.l.b16 %v1673
          %v2081 = vunpack.c.h.b16 %v1673
          %v2082 = vunpack.c.l.b16 %v1674
          %v2083 = vunpack.c.h.b16 %v1674
          %v2084 = vunpack.c.l.b16 %v1675
          %v2085 = vunpack.c.h.b16 %v1675
          %v2086 = vunpack.c.l.b16 %v1676
          %v2087 = vunpack.c.h.b16 %v1676
          %v2088 = vunpack.c.l.b16 %v1677
          %v2089 = vunpack.c.h.b16 %v1677
          %v2090 = vunpack.c.l.b16 %v1678
          %v2091 = vunpack.c.h.b16 %v1678
          %v2092 = vunpack.c.l.b16 %v1679
          %v2093 = vunpack.c.h.b16 %v1679
          %v2094 = vunpack.c.l.b16 %v1680
          %v2095 = vunpack.c.h.b16 %v1680
          %v2096 = vunpack.c.l.b16 %v1681
          %v2097 = vunpack.c.h.b16 %v1681
          %v2098 = vunpack.c.l.b16 %v1682
          %v2099 = vunpack.c.h.b16 %v1682
          %v2100 = vunpack.c.l.b16 %v1683
          %v2101 = vunpack.c.h.b16 %v1683
          %v2102 = vunpack.c.l.b16 %v1684
          %v2103 = vunpack.c.h.b16 %v1684
          %v2104 = vunpack.c.l.b16 %v1685
          %v2105 = vunpack.c.h.b16 %v1685
          %v2106 = vunpack.c.l.b16 %v1686
          %v2107 = vunpack.c.h.b16 %v1686
          %v2108 = vunpack.c.l.b16 %v1687
          %v2109 = vunpack.c.h.b16 %v1687
          %v2110 = vunpack.c.l.b16 %v1688
          %v2111 = vunpack.c.h.b16 %v1688
          %v2112 = vunpack.c.l.b16 %v1689
          %v2113 = vunpack.c.h.b16 %v1689
          %v2114 = vunpack.c.l.b16 %v1690
          %v2115 = vunpack.c.h.b16 %v1690
          %v2116 = vunpack.c.l.b16 %v1691
          %v2117 = vunpack.c.h.b16 %v1691
          %v2118 = vunpack.c.l.b16 %v1692
          %v2119 = vunpack.c.h.b16 %v1692
          %v2120 = vunpack.c.l.b16 %v1693
          %v2121 = vunpack.c.h.b16 %v1693
          %v2122 = vunpack.c.l.b16 %v1694
          %v2123 = vunpack.c.h.b16 %v1694
          %v2124 = vunpack.c.l.b16 %v1695
          %v2125 = vunpack.c.h.b16 %v1695
          %v2126 = vunpack.c.l.b16 %v1696
          %v2127 = vunpack.c.h.b16 %v1696
          %v2128 = vunpack.c.l.b16 %v1697
          %v2129 = vunpack.c.h.b16 %v1697
          %v2130 = vunpack.c.l.b16 %v1698
          %v2131 = vunpack.c.h.b16 %v1698
          %v2132 = vunpack.c.l.b16 %v1699
          %v2133 = vunpack.c.h.b16 %v1699
          %v2134 = vunpack.c.l.b16 %v1700
          %v2135 = vunpack.c.h.b16 %v1700
          %v2136 = vunpack.c.l.b16 %v1701
          %v2137 = vunpack.c.h.b16 %v1701
          %v2138 = vunpack.c.l.b16 %v1702
          %v2139 = vunpack.c.h.b16 %v1702
          %v2140 = vunpack.c.l.b16 %v1703
          %v2141 = vunpack.c.h.b16 %v1703
          %v2142 = vunpack.c.l.b16 %v1704
          %v2143 = vunpack.c.h.b16 %v1704
          %v2144 = vunpack.c.l.b16 %v1705
          %v2145 = vunpack.c.h.b16 %v1705
          %v2146 = vunpack.c.l.b16 %v1706
          %v2147 = vunpack.c.h.b16 %v1706
          %v2148 = vunpack.c.l.b16 %v1707
          %v2149 = vunpack.c.h.b16 %v1707
          %v2150 = vunpack.c.l.b16 %v1708
          %v2151 = vunpack.c.h.b16 %v1708
          %v2152 = vunpack.c.l.b16 %v1709
          %v2153 = vunpack.c.h.b16 %v1709
          %v2154 = vunpack.c.l.b16 %v1710
          %v2155 = vunpack.c.h.b16 %v1710
          %v2156 = vunpack.c.l.b16 %v1711
          %v2157 = vunpack.c.h.b16 %v1711
          %v2158 = vunpack.c.l.b16 %v1712
          %v2159 = vunpack.c.h.b16 %v1712
          %v2160 = vunpack.c.l.b16 %v1713
          %v2161 = vunpack.c.h.b16 %v1713
          %v2162 = vunpack.c.l.b16 %v1714
          %v2163 = vunpack.c.h.b16 %v1714
          %v2164 = vunpack.c.l.b16 %v1715
          %v2165 = vunpack.c.h.b16 %v1715
          %v2166 = vunpack.c.l.b16 %v1716
          %v2167 = vunpack.c.h.b16 %v1716
          %v2168 = vunpack.c.l.b16 %v1717
          %v2169 = vunpack.c.h.b16 %v1717
          %v2170 = vunpack.c.l.b16 %v1718
          %v2171 = vunpack.c.h.b16 %v1718
          %v2172 = vunpack.c.l.b16 %v1719
          %v2173 = vunpack.c.h.b16 %v1719
          %v2174 = vunpack.c.l.b16 %v1720
          %v2175 = vunpack.c.h.b16 %v1720
          %v2176 = vunpack.c.l.b16 %v1721
          %v2177 = vunpack.c.h.b16 %v1721
          %v2178 = vunpack.c.l.b16 %v1722
          %v2179 = vunpack.c.h.b16 %v1722
          %v2180 = vunpack.c.l.b16 %v1723
          %v2181 = vunpack.c.h.b16 %v1723
          %v2182 = vunpack.c.l.b16 %v1724
          %v2183 = vunpack.c.h.b16 %v1724
          %v2184 = vunpack.c.l.b16 %v1725
          %v2185 = vunpack.c.h.b16 %v1725
          %v2186 = vunpack.c.l.b16 %v1726
          %v2187 = vunpack.c.h.b16 %v1726
          %v2188 = vunpack.c.l.b16 %v1727
          %v2189 = vunpack.c.h.b16 %v1727
          %v2190 = vunpack.c.l.b16 %v1728
          %v2191 = vunpack.c.h.b16 %v1728
          %v2192 = vunpack.c.l.b16 %v1729
          %v2193 = vunpack.c.h.b16 %v1729
          %v2194 = vunpack.c.l.b16 %v1730
          %v2195 = vunpack.c.h.b16 %v1730
          %v2196 = vunpack.c.l.b16 %v1731
          %v2197 = vunpack.c.h.b16 %v1731
          %v2198 = vunpack.c.l.b16 %v1732
          %v2199 = vunpack.c.h.b16 %v1732
          %v2200 = vunpack.c.l.b16 %v1733
          %v2201 = vunpack.c.h.b16 %v1733
          %v2202 = vunpack.c.l.b16 %v1734
          %v2203 = vunpack.c.h.b16 %v1734
          %v2204 = vunpack.c.l.b16 %v1735
          %v2205 = vunpack.c.h.b16 %v1735
          %v2206 = vunpack.c.l.b16 %v1736
          %v2207 = vunpack.c.h.b16 %v1736
          %v2208 = vunpack.c.l.b16 %v1737
          %v2209 = vunpack.c.h.b16 %v1737
          %v2210 = vunpack.c.l.b16 %v1738
          %v2211 = vunpack.c.h.b16 %v1738
          %v2212 = vunpack.c.l.b16 %v1739
          %v2213 = vunpack.c.h.b16 %v1739
          %v2214 = vunpack.c.l.b16 %v1740
          %v2215 = vunpack.c.h.b16 %v1740
          %v2216 = vunpack.c.l.b16 %v1741
          %v2217 = vunpack.c.h.b16 %v1741
          %v2218 = vunpack.c.l.b16 %v1742
          %v2219 = vunpack.c.h.b16 %v1742
          %v2220 = vunpack.c.l.b16 %v1743
          %v2221 = vunpack.c.h.b16 %v1743
          %v2222 = vunpack.c.l.b16 %v1744
          %v2223 = vunpack.c.h.b16 %v1744
          %v2224 = vunpack.c.l.b16 %v1745
          %v2225 = vunpack.c.h.b16 %v1745
          %v2226 = vunpack.c.l.b16 %v1746
          %v2227 = vunpack.c.h.b16 %v1746
          %v2228 = vunpack.c.l.b16 %v1747
          %v2229 = vunpack.c.h.b16 %v1747
          %v2230 = vunpack.c.l.b16 %v1748
          %v2231 = vunpack.c.h.b16 %v1748
          %v2232 = vunpack.c.l.b16 %v1749
          %v2233 = vunpack.c.h.b16 %v1749
          %v2234 = vunpack.c.l.b16 %v1750
          %v2235 = vunpack.c.h.b16 %v1750
          %v2236 = vunpack.c.l.b16 %v1751
          %v2237 = vunpack.c.h.b16 %v1751
          %v2238 = vunpack.c.l.b16 %v1752
          %v2239 = vunpack.c.h.b16 %v1752
          %v2240 = vunpack.c.l.b16 %v1753
          %v2241 = vunpack.c.h.b16 %v1753
          %v2242 = vunpack.c.l.b16 %v1754
          %v2243 = vunpack.c.h.b16 %v1754
          %v2244 = vunpack.c.l.b16 %v1755
          %v2245 = vunpack.c.h.b16 %v1755
          %v2246 = vunpack.c.l.b16 %v1756
          %v2247 = vunpack.c.h.b16 %v1756
          %v2248 = vunpack.c.l.b16 %v1757
          %v2249 = vunpack.c.h.b16 %v1757
          %v2250 = vunpack.c.l.b16 %v1758
          %v2251 = vunpack.c.h.b16 %v1758
          %v2252 = vunpack.c.l.b16 %v1759
          %v2253 = vunpack.c.h.b16 %v1759
          %v2254 = vunpack.c.l.b16 %v1760
          %v2255 = vunpack.c.h.b16 %v1760
          %v2256 = vunpack.c.l.b16 %v1761
          %v2257 = vunpack.c.h.b16 %v1761
          %v2258 = vunpack.c.l.b16 %v1762
          %v2259 = vunpack.c.h.b16 %v1762
          %v2260 = vunpack.c.l.b16 %v1763
          %v2261 = vunpack.c.h.b16 %v1763
          %v2262 = vunpack.c.l.b16 %v1764
          %v2263 = vunpack.c.h.b16 %v1764
          %v2264 = vunpack.c.l.b16 %v1765
          %v2265 = vunpack.c.h.b16 %v1765
          %v2266 = vunpack.c.l.b16 %v1766
          %v2267 = vunpack.c.h.b16 %v1766
          %v2268 = vunpack.c.l.b16 %v1767
          %v2269 = vunpack.c.h.b16 %v1767
          %v2270 = vunpack.c.l.b16 %v1768
          %v2271 = vunpack.c.h.b16 %v1768
          %v2272 = vunpack.c.l.b16 %v1769
          %v2273 = vunpack.c.h.b16 %v1769
          %v2274 = vunpack.c.l.b16 %v1770
          %v2275 = vunpack.c.h.b16 %v1770
          %v2276 = vunpack.c.l.b16 %v1771
          %v2277 = vunpack.c.h.b16 %v1771
          %v2278 = vunpack.c.l.b16 %v1772
          %v2279 = vunpack.c.h.b16 %v1772
          %v2280 = vunpack.c.l.b16 %v1773
          %v2281 = vunpack.c.h.b16 %v1773
          %v2282 = vunpack.c.l.b16 %v1774
          %v2283 = vunpack.c.h.b16 %v1774
          %v2284 = vunpack.c.l.b16 %v1775
          %v2285 = vunpack.c.h.b16 %v1775
          %v2286 = vunpack.c.l.b16 %v1776
          %v2287 = vunpack.c.h.b16 %v1776
          %v2288 = vunpack.c.l.b16 %v1777
          %v2289 = vunpack.c.h.b16 %v1777
          %v2290 = vunpack.c.l.b16 %v1778
          %v2291 = vunpack.c.h.b16 %v1778
          %v2292 = vunpack.c.l.b16 %v1779
          %v2293 = vunpack.c.h.b16 %v1779
          %v2294 = vunpack.c.l.b16 %v1780
          %v2295 = vunpack.c.h.b16 %v1780
          %v2296 = vunpack.c.l.b16 %v1781
          %v2297 = vunpack.c.h.b16 %v1781
          %v2298 = vunpack.c.l.b16 %v1782
          %v2299 = vunpack.c.h.b16 %v1782
          %v2300 = vunpack.c.l.b16 %v1783
          %v2301 = vunpack.c.h.b16 %v1783
          %v2302 = vunpack.c.l.b16 %v1784
          %v2303 = vunpack.c.h.b16 %v1784
          %v2304 = vunpack.c.l.b16 %v1785
          %v2305 = vunpack.c.h.b16 %v1785
          %v2306 = vunpack.c.l.b16 %v1786
          %v2307 = vunpack.c.h.b16 %v1786
          %v2308 = vunpack.c.l.b16 %v1787
          %v2309 = vunpack.c.h.b16 %v1787
          %v2310 = vunpack.c.l.b16 %v1788
          %v2311 = vunpack.c.h.b16 %v1788
          %v2312 = vunpack.c.l.b16 %v1789
          %v2313 = vunpack.c.h.b16 %v1789
          %v2314 = vunpack.c.l.b16 %v1790
          %v2315 = vunpack.c.h.b16 %v1790
          %v2316 = vunpack.c.l.b16 %v1791
          %v2317 = vunpack.c.h.b16 %v1791
          %v2318 = vunpack.c.l.b16 %v1792
          %v2319 = vunpack.c.h.b16 %v1792
          %v2320 = vunpack.c.l.b16 %v1793
          %v2321 = vunpack.c.h.b16 %v1793
          %v2322 = vunpack.c.l.b16 %v1794
          %v2323 = vunpack.c.h.b16 %v1794
          %v2324 = vunpack.c.l.b16 %v1795
          %v2325 = vunpack.c.h.b16 %v1795
          %v2326 = vunpack.c.l.b16 %v1796
          %v2327 = vunpack.c.h.b16 %v1796
          %v2328 = vunpack.c.l.b16 %v1797
          %v2329 = vunpack.c.h.b16 %v1797
          %v2330 = vunpack.c.l.b16 %v1798
          %v2331 = vunpack.c.h.b16 %v1798
          %v2332 = vunpack.c.l.b16 %v1799
          %v2333 = vunpack.c.h.b16 %v1799
          %v2334 = vunpack.c.l.b16 %v1800
          %v2335 = vunpack.c.h.b16 %v1800
          %v2336 = vunpack.c.l.b16 %v1801
          %v2337 = vunpack.c.h.b16 %v1801
          %v2338 = vunpack.c.l.b16 %v1802
          %v2339 = vunpack.c.h.b16 %v1802
          %v2340 = vunpack.c.l.b16 %v1803
          %v2341 = vunpack.c.h.b16 %v1803
          %v2342 = vunpack.c.l.b16 %v1804
          %v2343 = vunpack.c.h.b16 %v1804
          %v2344 = vunpack.c.l.b16 %v1805
          %v2345 = vunpack.c.h.b16 %v1805
          %v2346 = vunpack.c.l.b16 %v1806
          %v2347 = vunpack.c.h.b16 %v1806
          %v2348 = vunpack.c.l.b16 %v1807
          %v2349 = vunpack.c.h.b16 %v1807
          %v2350 = vunpack.c.l.b16 %v1808
          %v2351 = vunpack.c.h.b16 %v1808
          %v2352 = vunpack.c.l.b16 %v1809
          %v2353 = vunpack.c.h.b16 %v1809
          %v2354 = vunpack.c.l.b16 %v1810
          %v2355 = vunpack.c.h.b16 %v1810
          %v2356 = vunpack.c.l.b16 %v1811
          %v2357 = vunpack.c.h.b16 %v1811
          %v2358 = vunpack.c.l.b16 %v1812
          %v2359 = vunpack.c.h.b16 %v1812
          %v2360 = vunpack.c.l.b16 %v1813
          %v2361 = vunpack.c.h.b16 %v1813
          %v2362 = vunpack.c.l.b16 %v1814
          %v2363 = vunpack.c.h.b16 %v1814
          %v2364 = vunpack.c.l.b16 %v1815
          %v2365 = vunpack.c.h.b16 %v1815
          %v2366 = vunpack.c.l.b16 %v1816
          %v2367 = vunpack.c.h.b16 %v1816
          %v2368 = vunpack.c.l.b16 %v1817
          %v2369 = vunpack.c.h.b16 %v1817
          %v2370 = vunpack.c.l.b16 %v1818
          %v2371 = vunpack.c.h.b16 %v1818
          %v2372 = vunpack.c.l.b16 %v1819
          %v2373 = vunpack.c.h.b16 %v1819
          %v2374 = vunpack.c.l.b16 %v1820
          %v2375 = vunpack.c.h.b16 %v1820
          %v2376 = vunpack.c.l.b16 %v1821
          %v2377 = vunpack.c.h.b16 %v1821
          %v2378 = vunpack.c.l.b16 %v1822
          %v2379 = vunpack.c.h.b16 %v1822
          %v2380 = vunpack.c.l.b16 %v1823
          %v2381 = vunpack.c.h.b16 %v1823
          %v2382 = vunpack.c.l.b16 %v1824
          %v2383 = vunpack.c.h.b16 %v1824
          %v2384 = vunpack.c.l.b16 %v1825
          %v2385 = vunpack.c.h.b16 %v1825
          %v2386 = vunpack.c.l.b16 %v1826
          %v2387 = vunpack.c.h.b16 %v1826
          %v2388 = vunpack.c.l.b16 %v1827
          %v2389 = vunpack.c.h.b16 %v1827
          %v2390 = vunpack.c.l.b16 %v1828
          %v2391 = vunpack.c.h.b16 %v1828
          %v2392 = vunpack.c.l.b16 %v1829
          %v2393 = vunpack.c.h.b16 %v1829
          %v2394 = vunpack.c.l.b16 %v1830
          %v2395 = vunpack.c.h.b16 %v1830
          %v2396 = vunpack.c.l.b16 %v1831
          %v2397 = vunpack.c.h.b16 %v1831
          %v2398 = vunpack.c.l.b16 %v1832
          %v2399 = vunpack.c.h.b16 %v1832
          %v2400 = vunpack.c.l.b16 %v1833
          %v2401 = vunpack.c.h.b16 %v1833
          %v2402 = vunpack.c.l.b16 %v1834
          %v2403 = vunpack.c.h.b16 %v1834
          %v2404 = vunpack.c.l.b16 %v1835
          %v2405 = vunpack.c.h.b16 %v1835
          %v2406 = vunpack.c.l.b16 %v1836
          %v2407 = vunpack.c.h.b16 %v1836
          %v2408 = vunpack.c.l.b16 %v1837
          %v2409 = vunpack.c.h.b16 %v1837
          %v2410 = vunpack.c.l.b16 %v1838
          %v2411 = vunpack.c.h.b16 %v1838
          %v2412 = vunpack.c.l.b16 %v1839
          %v2413 = vunpack.c.h.b16 %v1839
          %v2414 = vunpack.c.l.b16 %v1840
          %v2415 = vunpack.c.h.b16 %v1840
          %v2416 = vunpack.c.l.b16 %v1841
          %v2417 = vunpack.c.h.b16 %v1841
          %v2418 = vpack.c.b16 %v2040, %v2034
          %v2419 = vpack.c.b16 %v2041, %v2035
          %v2420 = vpack.c.b16 %v2042, %v2036
          %v2421 = vpack.c.b16 %v2043, %v2037
          %v2422 = vpack.c.b16 %v2044, %v2038
          %v2423 = vpack.c.b16 %v2045, %v2039
          %v2424 = vpack.c.b16 %v2052, %v2046
          %v2425 = vpack.c.b16 %v2053, %v2047
          %v2426 = vpack.c.b16 %v2054, %v2048
          %v2427 = vpack.c.b16 %v2055, %v2049
          %v2428 = vpack.c.b16 %v2056, %v2050
          %v2429 = vpack.c.b16 %v2057, %v2051
          %v2430 = vpack.c.b16 %v2064, %v2058
          %v2431 = vpack.c.b16 %v2065, %v2059
          %v2432 = vpack.c.b16 %v2066, %v2060
          %v2433 = vpack.c.b16 %v2067, %v2061
          %v2434 = vpack.c.b16 %v2068, %v2062
          %v2435 = vpack.c.b16 %v2069, %v2063
          %v2436 = vpack.c.b16 %v2076, %v2070
          %v2437 = vpack.c.b16 %v2077, %v2071
          %v2438 = vpack.c.b16 %v2078, %v2072
          %v2439 = vpack.c.b16 %v2079, %v2073
          %v2440 = vpack.c.b16 %v2080, %v2074
          %v2441 = vpack.c.b16 %v2081, %v2075
          %v2442 = vpack.c.b16 %v2088, %v2082
          %v2443 = vpack.c.b16 %v2089, %v2083
          %v2444 = vpack.c.b16 %v2090, %v2084
          %v2445 = vpack.c.b16 %v2091, %v2085
          %v2446 = vpack.c.b16 %v2092, %v2086
          %v2447 = vpack.c.b16 %v2093, %v2087
          %v2448 = vpack.c.b16 %v2100, %v2094
          %v2449 = vpack.c.b16 %v2101, %v2095
          %v2450 = vpack.c.b16 %v2102, %v2096
          %v2451 = vpack.c.b16 %v2103, %v2097
          %v2452 = vpack.c.b16 %v2104, %v2098
          %v2453 = vpack.c.b16 %v2105, %v2099
          %v2454 = vpack.c.b16 %v2112, %v2106
          %v2455 = vpack.c.b16 %v2113, %v2107
          %v2456 = vpack.c.b16 %v2114, %v2108
          %v2457 = vpack.c.b16 %v2115, %v2109
          %v2458 = vpack.c.b16 %v2116, %v2110
          %v2459 = vpack.c.b16 %v2117, %v2111
          %v2460 = vpack.c.b16 %v2124, %v2118
          %v2461 = vpack.c.b16 %v2125, %v2119
          %v2462 = vpack.c.b16 %v2126, %v2120
          %v2463 = vpack.c.b16 %v2127, %v2121
          %v2464 = vpack.c.b16 %v2128, %v2122
          %v2465 = vpack.c.b16 %v2129, %v2123
          %v2466 = vpack.c.b16 %v2136, %v2130
          %v2467 = vpack.c.b16 %v2137, %v2131
          %v2468 = vpack.c.b16 %v2138, %v2132
          %v2469 = vpack.c.b16 %v2139, %v2133
          %v2470 = vpack.c.b16 %v2140, %v2134
          %v2471 = vpack.c.b16 %v2141, %v2135
          %v2472 = vpack.c.b16 %v2148, %v2142
          %v2473 = vpack.c.b16 %v2149, %v2143
          %v2474 = vpack.c.b16 %v2150, %v2144
          %v2475 = vpack.c.b16 %v2151, %v2145
          %v2476 = vpack.c.b16 %v2152, %v2146
          %v2477 = vpack.c.b16 %v2153, %v2147
          %v2478 = vpack.c.b16 %v2160, %v2154
          %v2479 = vpack.c.b16 %v2161, %v2155
          %v2480 = vpack.c.b16 %v2162, %v2156
          %v2481 = vpack.c.b16 %v2163, %v2157
          %v2482 = vpack.c.b16 %v2164, %v2158
          %v2483 = vpack.c.b16 %v2165, %v2159
          %v2484 = vpack.c.b16 %v2172, %v2166
          %v2485 = vpack.c.b16 %v2173, %v2167
          %v2486 = vpack.c.b16 %v2174, %v2168
          %v2487 = vpack.c.b16 %v2175, %v2169
          %v2488 = vpack.c.b16 %v2176, %v2170
          %v2489 = vpack.c.b16 %v2177, %v2171
          %v2490 = vpack.c.b16 %v2184, %v2178
          %v2491 = vpack.c.b16 %v2185, %v2179
          %v2492 = vpack.c.b16 %v2186, %v2180
          %v2493 = vpack.c.b16 %v2187, %v2181
          %v2494 = vpack.c.b16 %v2188, %v2182
          %v2495 = vpack.c.b16 %v2189, %v2183
          %v2496 = vpack.c.b16 %v2196, %v2190
          %v2497 = vpack.c.b16 %v2197, %v2191
          %v2498 = vpack.c.b16 %v2198, %v2192
          %v2499 = vpack.c.b16 %v2199, %v2193
          %v2500 = vpack.c.b16 %v2200, %v2194
          %v2501 = vpack.c.b16 %v2201, %v2195
          %v2502 = vpack.c.b16 %v2208, %v2202
          %v2503 = vpack.c.b16 %v2209, %v2203
          %v2504 = vpack.c.b16 %v2210, %v2204
          %v2505 = vpack.c.b16 %v2211, %v2205
          %v2506 = vpack.c.b16 %v2212, %v2206
          %v2507 = vpack.c.b16 %v2213, %v2207
          %v2508 = vpack.c.b16 %v2220, %v2214
          %v2509 = vpack.c.b16 %v2221, %v2215
          %v2510 = vpack.c.b16 %v2222, %v2216
          %v2511 = vpack.c.b16 %v2223, %v2217
          %v2512 = vpack.c.b16 %v2224, %v2218
          %v2513 = vpack.c.b16 %v2225, %v2219
          %v2514 = vpack.c.b16 %v2232, %v2226
          %v2515 = vpack.c.b16 %v2233, %v2227
          %v2516 = vpack.c.b16 %v2234, %v2228
          %v2517 = vpack.c.b16 %v2235, %v2229
          %v2518 = vpack.c.b16 %v2236, %v2230
          %v2519 = vpack.c.b16 %v2237, %v2231
          %v2520 = vpack.c.b16 %v2244, %v2238
          %v2521 = vpack.c.b16 %v2245, %v2239
          %v2522 = vpack.c.b16 %v2246, %v2240
          %v2523 = vpack.c.b16 %v2247, %v2241
          %v2524 = vpack.c.b16 %v2248, %v2242
          %v2525 = vpack.c.b16 %v2249, %v2243
          %v2526 = vpack.c.b16 %v2256, %v2250
          %v2527 = vpack.c.b16 %v2257, %v2251
          %v2528 = vpack.c.b16 %v2258, %v2252
          %v2529 = vpack.c.b16 %v2259, %v2253
          %v2530 = vpack.c.b16 %v2260, %v2254
          %v2531 = vpack.c.b16 %v2261, %v2255
          %v2532 = vpack.c.b16 %v2268, %v2262
          %v2533 = vpack.c.b16 %v2269, %v2263
          %v2534 = vpack.c.b16 %v2270, %v2264
          %v2535 = vpack.c.b16 %v2271, %v2265
          %v2536 = vpack.c.b16 %v2272, %v2266
          %v2537 = vpack.c.b16 %v2273, %v2267
          %v2538 = vpack.c.b16 %v2280, %v2274
          %v2539 = vpack.c.b16 %v2281, %v2275
          %v2540 = vpack.c.b16 %v2282, %v2276
          %v2541 = vpack.c.b16 %v2283, %v2277
          %v2542 = vpack.c.b16 %v2284, %v2278
          %v2543 = vpack.c.b16 %v2285, %v2279
          %v2544 = vpack.c.b16 %v2292, %v2286
          %v2545 = vpack.c.b16 %v2293, %v2287
          %v2546 = vpack.c.b16 %v2294, %v2288
          %v2547 = vpack.c.b16 %v2295, %v2289
          %v2548 = vpack.c.b16 %v2296, %v2290
          %v2549 = vpack.c.b16 %v2297, %v2291
          %v2550 = vpack.c.b16 %v2304, %v2298
          %v2551 = vpack.c.b16 %v2305, %v2299
          %v2552 = vpack.c.b16 %v2306, %v2300
          %v2553 = vpack.c.b16 %v2307, %v2301
          %v2554 = vpack.c.b16 %v2308, %v2302
          %v2555 = vpack.c.b16 %v2309, %v2303
          %v2556 = vpack.c.b16 %v2316, %v2310
          %v2557 = vpack.c.b16 %v2317, %v2311
          %v2558 = vpack.c.b16 %v2318, %v2312
          %v2559 = vpack.c.b16 %v2319, %v2313
          %v2560 = vpack.c.b16 %v2320, %v2314
          %v2561 = vpack.c.b16 %v2321, %v2315
          %v2562 = vpack.c.b16 %v2328, %v2322
          %v2563 = vpack.c.b16 %v2329, %v2323
          %v2564 = vpack.c.b16 %v2330, %v2324
          %v2565 = vpack.c.b16 %v2331, %v2325
          %v2566 = vpack.c.b16 %v2332, %v2326
          %v2567 = vpack.c.b16 %v2333, %v2327
          %v2568 = vpack.c.b16 %v2340, %v2334
          %v2569 = vpack.c.b16 %v2341, %v2335
          %v2570 = vpack.c.b16 %v2342, %v2336
          %v2571 = vpack.c.b16 %v2343, %v2337
          %v2572 = vpack.c.b16 %v2344, %v2338
          %v2573 = vpack.c.b16 %v2345, %v2339
          %v2574 = vpack.c.b16 %v2352, %v2346
          %v2575 = vpack.c.b16 %v2353, %v2347
          %v2576 = vpack.c.b16 %v2354, %v2348
          %v2577 = vpack.c.b16 %v2355, %v2349
          %v2578 = vpack.c.b16 %v2356, %v2350
          %v2579 = vpack.c.b16 %v2357, %v2351
          %v2580 = vpack.c.b16 %v2364, %v2358
          %v2581 = vpack.c.b16 %v2365, %v2359
          %v2582 = vpack.c.b16 %v2366, %v2360
          %v2583 = vpack.c.b16 %v2367, %v2361
          %v2584 = vpack.c.b16 %v2368, %v2362
          %v2585 = vpack.c.b16 %v2369, %v2363
          %v2586 = vpack.c.b16 %v2376, %v2370
          %v2587 = vpack.c.b16 %v2377, %v2371
          %v2588 = vpack.c.b16 %v2378, %v2372
          %v2589 = vpack.c.b16 %v2379, %v2373
          %v2590 = vpack.c.b16 %v2380, %v2374
          %v2591 = vpack.c.b16 %v2381, %v2375
          %v2592 = vpack.c.b16 %v2388, %v2382
          %v2593 = vpack.c.b16 %v2389, %v2383
          %v2594 = vpack.c.b16 %v2390, %v2384
          %v2595 = vpack.c.b16 %v2391, %v2385
          %v2596 = vpack.c.b16 %v2392, %v2386
          %v2597 = vpack.c.b16 %v2393, %v2387
          %v2598 = vpack.c.b16 %v2400, %v2394
          %v2599 = vpack.c.b16 %v2401, %v2395
          %v2600 = vpack.c.b16 %v2402, %v2396
          %v2601 = vpack.c.b16 %v2403, %v2397
          %v2602 = vpack.c.b16 %v2404, %v2398
          %v2603 = vpack.c.b16 %v2405, %v2399
          %v2604 = vpack.c.b16 %v2412, %v2406
          %v2605 = vpack.c.b16 %v2413, %v2407
          %v2606 = vpack.c.b16 %v2414, %v2408
          %v2607 = vpack.c.b16 %v2415, %v2409
          %v2608 = vpack.c.b16 %v2416, %v2410
          %v2609 = vpack.c.b16 %v2417, %v2411
          %2802 = vmatprep.subr.bf16.mxu0 %v2461
          %2803 = vmatpush1.bf16.msra.mxu0 %v2460
          %2804 = vmatprep.subr.bf16.mxu0 %v2455
          %2805 = vmatpush1.bf16.msra.mxu0 %v2454
          %2806 = vmatprep.subr.bf16.mxu0 %v2449
          %2807 = vmatpush1.bf16.msra.mxu0 %v2448
          %2808 = vmatprep.subr.bf16.mxu0 %v2443
          %2809 = vmatpush1.bf16.msra.mxu0 %v2442
          %2810 = vmatprep.subr.bf16.mxu0 %v2437
          %2811 = vmatpush1.bf16.msra.mxu0 %v2436
          %2812 = vmatprep.subr.bf16.mxu0 %v2431
          %2813 = vmatpush1.bf16.msra.mxu0 %v2430
          %2814 = vmatprep.subr.bf16.mxu0 %v2425
          %2815 = vmatpush1.bf16.msra.mxu0 %v2424
          %2816 = vmatprep.subr.bf16.mxu0 %v2419
          %2817 = vmatpush1.bf16.msra.mxu0 %v2418
          %2818 = vmatprep.subr.bf16.mxu0 %v2509
          %2819 = vmatpush2.bf16.msra.mxu0 %v2508
          %2820 = vmatprep.subr.bf16.mxu0 %v2503
          %2821 = vmatpush2.bf16.msra.mxu0 %v2502
          %2822 = vmatprep.subr.bf16.mxu0 %v2497
          %2823 = vmatpush2.bf16.msra.mxu0 %v2496
          %2824 = vmatprep.subr.bf16.mxu0 %v2491
          %2825 = vmatpush2.bf16.msra.mxu0 %v2490
          %2826 = vmatprep.subr.bf16.mxu0 %v2485
          %2827 = vmatpush2.bf16.msra.mxu0 %v2484
          %2828 = vmatprep.subr.bf16.mxu0 %v2479
          %2829 = vmatpush2.bf16.msra.mxu0 %v2478
          %2830 = vmatprep.subr.bf16.mxu0 %v2473
          %2831 = vmatpush2.bf16.msra.mxu0 %v2472
          %2832 = vmatprep.subr.bf16.mxu0 %v2467
          %2833 = vmatpush2.bf16.msra.mxu0 %v2466
          %2834 = vmatprep.mubr.bf16.mxu0 %v1619
          %2835 = vmatmul.mubr.bf16.gmra.mxu0 %v1618
          %v2836 = vpop.f32.mrf.mxu0
          %v2837 = vadd.f32 0.0, %v2836
          %v2838 = vpop.f32.mrf.mxu0
          %v2839 = vadd.f32 0.0, %v2838
          %v2840 = vpop.f32.mrf.mxu0
          %v2841 = vadd.f32 0.0, %v2840
          %v2842 = vpop.f32.mrf.mxu0
          %v2843 = vadd.f32 0.0, %v2842
          %2844 = vmatprep.mubr.bf16.mxu0 %v1623
          %2845 = vmatmul.mubr.bf16.gmra.mxu0 %v1622
          %v2846 = vpop.f32.mrf.mxu0
          %v2847 = vadd.f32 0.0, %v2846
          %v2848 = vpop.f32.mrf.mxu0
          %v2849 = vadd.f32 0.0, %v2848
          %v2850 = vpop.f32.mrf.mxu0
          %v2851 = vadd.f32 0.0, %v2850
          %v2852 = vpop.f32.mrf.mxu0
          %v2853 = vadd.f32 0.0, %v2852
          %2854 = vmatprep.mubr.bf16.mxu0 %v1627
          %2855 = vmatmul.mubr.bf16.gmra.mxu0 %v1626
          %v2856 = vpop.f32.mrf.mxu0
          %v2857 = vadd.f32 0.0, %v2856
          %v2858 = vpop.f32.mrf.mxu0
          %v2859 = vadd.f32 0.0, %v2858
          %v2860 = vpop.f32.mrf.mxu0
          %v2861 = vadd.f32 0.0, %v2860
          %v2862 = vpop.f32.mrf.mxu0
          %v2863 = vadd.f32 0.0, %v2862
          %2864 = vmatprep.mubr.bf16.mxu0 %v1631
          %2865 = vmatmul.mubr.bf16.gmra.mxu0 %v1630
          %v2866 = vpop.f32.mrf.mxu0
          %v2867 = vadd.f32 0.0, %v2866
          %v2868 = vpop.f32.mrf.mxu0
          %v2869 = vadd.f32 0.0, %v2868
          %v2870 = vpop.f32.mrf.mxu0
          %v2871 = vadd.f32 0.0, %v2870
          %v2872 = vpop.f32.mrf.mxu0
          %v2873 = vadd.f32 0.0, %v2872
          %2874 = vmatprep.mubr.bf16.mxu0 %v1635
          %2875 = vmatmul.mubr.bf16.gmra.mxu0 %v1634
          %v2876 = vpop.f32.mrf.mxu0
          %v2877 = vadd.f32 0.0, %v2876
          %v2878 = vpop.f32.mrf.mxu0
          %v2879 = vadd.f32 0.0, %v2878
          %v2880 = vpop.f32.mrf.mxu0
          %v2881 = vadd.f32 0.0, %v2880
          %v2882 = vpop.f32.mrf.mxu0
          %v2883 = vadd.f32 0.0, %v2882
          %2884 = vmatprep.mubr.bf16.mxu0 %v1639
          %2885 = vmatmul.mubr.bf16.gmra.mxu0 %v1638
          %v2886 = vpop.f32.mrf.mxu0
          %v2887 = vadd.f32 0.0, %v2886
          %v2888 = vpop.f32.mrf.mxu0
          %v2889 = vadd.f32 0.0, %v2888
          %v2890 = vpop.f32.mrf.mxu0
          %v2891 = vadd.f32 0.0, %v2890
          %v2892 = vpop.f32.mrf.mxu0
          %v2893 = vadd.f32 0.0, %v2892
          %2894 = vmatprep.mubr.bf16.mxu0 %v1643
          %2895 = vmatmul.mubr.bf16.gmra.mxu0 %v1642
          %v2896 = vpop.f32.mrf.mxu0
          %v2897 = vadd.f32 0.0, %v2896
          %v2898 = vpop.f32.mrf.mxu0
          %v2899 = vadd.f32 0.0, %v2898
          %v2900 = vpop.f32.mrf.mxu0
          %v2901 = vadd.f32 0.0, %v2900
          %v2902 = vpop.f32.mrf.mxu0
          %v2903 = vadd.f32 0.0, %v2902
          %2904 = vmatprep.mubr.bf16.mxu0 %v1647
          %2905 = vmatmul.mubr.bf16.gmra.mxu0 %v1646
          %v2906 = vpop.f32.mrf.mxu0
          %v2907 = vadd.f32 0.0, %v2906
          %v2908 = vpop.f32.mrf.mxu0
          %v2909 = vadd.f32 0.0, %v2908
          %v2910 = vpop.f32.mrf.mxu0
          %v2911 = vadd.f32 0.0, %v2910
          %v2912 = vpop.f32.mrf.mxu0
          %v2913 = vadd.f32 0.0, %v2912
          %2914 = vdwg.mxu0
          %2915 = vmatprep.subr.bf16.mxu0 %v2557
          %2916 = vmatpush1.bf16.msra.mxu0 %v2556
          %2917 = vmatprep.subr.bf16.mxu0 %v2551
          %2918 = vmatpush1.bf16.msra.mxu0 %v2550
          %2919 = vmatprep.subr.bf16.mxu0 %v2545
          %2920 = vmatpush1.bf16.msra.mxu0 %v2544
          %2921 = vmatprep.subr.bf16.mxu0 %v2539
          %2922 = vmatpush1.bf16.msra.mxu0 %v2538
          %2923 = vmatprep.subr.bf16.mxu0 %v2533
          %2924 = vmatpush1.bf16.msra.mxu0 %v2532
          %2925 = vmatprep.subr.bf16.mxu0 %v2527
          %2926 = vmatpush1.bf16.msra.mxu0 %v2526
          %2927 = vmatprep.subr.bf16.mxu0 %v2521
          %2928 = vmatpush1.bf16.msra.mxu0 %v2520
          %2929 = vmatprep.subr.bf16.mxu0 %v2515
          %2930 = vmatpush1.bf16.msra.mxu0 %v2514
          %2931 = vmatprep.subr.bf16.mxu0 %v2605
          %2932 = vmatpush2.bf16.msra.mxu0 %v2604
          %2933 = vmatprep.subr.bf16.mxu0 %v2599
          %2934 = vmatpush2.bf16.msra.mxu0 %v2598
          %2935 = vmatprep.subr.bf16.mxu0 %v2593
          %2936 = vmatpush2.bf16.msra.mxu0 %v2592
          %2937 = vmatprep.subr.bf16.mxu0 %v2587
          %2938 = vmatpush2.bf16.msra.mxu0 %v2586
          %2939 = vmatprep.subr.bf16.mxu0 %v2581
          %2940 = vmatpush2.bf16.msra.mxu0 %v2580
          %2941 = vmatprep.subr.bf16.mxu0 %v2575
          %2942 = vmatpush2.bf16.msra.mxu0 %v2574
          %2943 = vmatprep.subr.bf16.mxu0 %v2569
          %2944 = vmatpush2.bf16.msra.mxu0 %v2568
          %2945 = vmatprep.subr.bf16.mxu0 %v2563
          %2946 = vmatpush2.bf16.msra.mxu0 %v2562
          %2947 = vmatprep.mubr.bf16.mxu0 %v1621
          %2948 = vmatmul.mubr.bf16.gmra.mxu0 %v1620
          %v2949 = vpop.f32.mrf.mxu0
          %v2950 = vadd.f32 %v2837, %v2949
          %v2951 = vpop.f32.mrf.mxu0
          %v2952 = vadd.f32 %v2839, %v2951
          %v2953 = vpop.f32.mrf.mxu0
          %v2954 = vadd.f32 %v2841, %v2953
          %v2955 = vpop.f32.mrf.mxu0
          %v2956 = vadd.f32 %v2843, %v2955
          %2957 = vmatprep.mubr.bf16.mxu0 %v1625
          %2958 = vmatmul.mubr.bf16.gmra.mxu0 %v1624
          %v2959 = vpop.f32.mrf.mxu0
          %v2960 = vadd.f32 %v2847, %v2959
          %v2961 = vpop.f32.mrf.mxu0
          %v2962 = vadd.f32 %v2849, %v2961
          %v2963 = vpop.f32.mrf.mxu0
          %v2964 = vadd.f32 %v2851, %v2963
          %v2965 = vpop.f32.mrf.mxu0
          %v2966 = vadd.f32 %v2853, %v2965
          %2967 = vmatprep.mubr.bf16.mxu0 %v1629
          %2968 = vmatmul.mubr.bf16.gmra.mxu0 %v1628
          %v2969 = vpop.f32.mrf.mxu0
          %v2970 = vadd.f32 %v2857, %v2969
          %v2971 = vpop.f32.mrf.mxu0
          %v2972 = vadd.f32 %v2859, %v2971
          %v2973 = vpop.f32.mrf.mxu0
          %v2974 = vadd.f32 %v2861, %v2973
          %v2975 = vpop.f32.mrf.mxu0
          %v2976 = vadd.f32 %v2863, %v2975
          %2977 = vmatprep.mubr.bf16.mxu0 %v1633
          %2978 = vmatmul.mubr.bf16.gmra.mxu0 %v1632
          %v2979 = vpop.f32.mrf.mxu0
          %v2980 = vadd.f32 %v2867, %v2979
          %v2981 = vpop.f32.mrf.mxu0
          %v2982 = vadd.f32 %v2869, %v2981
          %v2983 = vpop.f32.mrf.mxu0
          %v2984 = vadd.f32 %v2871, %v2983
          %v2985 = vpop.f32.mrf.mxu0
          %v2986 = vadd.f32 %v2873, %v2985
          %2987 = vmatprep.mubr.bf16.mxu0 %v1637
          %2988 = vmatmul.mubr.bf16.gmra.mxu0 %v1636
          %v2989 = vpop.f32.mrf.mxu0
          %v2990 = vadd.f32 %v2877, %v2989
          %v2991 = vpop.f32.mrf.mxu0
          %v2992 = vadd.f32 %v2879, %v2991
          %v2993 = vpop.f32.mrf.mxu0
          %v2994 = vadd.f32 %v2881, %v2993
          %v2995 = vpop.f32.mrf.mxu0
          %v2996 = vadd.f32 %v2883, %v2995
          %2997 = vmatprep.mubr.bf16.mxu0 %v1641
          %2998 = vmatmul.mubr.bf16.gmra.mxu0 %v1640
          %v2999 = vpop.f32.mrf.mxu0
          %v3000 = vadd.f32 %v2887, %v2999
          %v3001 = vpop.f32.mrf.mxu0
          %v3002 = vadd.f32 %v2889, %v3001
          %v3003 = vpop.f32.mrf.mxu0
          %v3004 = vadd.f32 %v2891, %v3003
          %v3005 = vpop.f32.mrf.mxu0
          %v3006 = vadd.f32 %v2893, %v3005
          %3007 = vmatprep.mubr.bf16.mxu0 %v1645
          %3008 = vmatmul.mubr.bf16.gmra.mxu0 %v1644
          %v3009 = vpop.f32.mrf.mxu0
          %v3010 = vadd.f32 %v2897, %v3009
          %v3011 = vpop.f32.mrf.mxu0
          %v3012 = vadd.f32 %v2899, %v3011
          %v3013 = vpop.f32.mrf.mxu0
          %v3014 = vadd.f32 %v2901, %v3013
          %v3015 = vpop.f32.mrf.mxu0
          %v3016 = vadd.f32 %v2903, %v3015
          %3017 = vmatprep.mubr.bf16.mxu0 %v1649
          %3018 = vmatmul.mubr.bf16.gmra.mxu0 %v1648
          %v3019 = vpop.f32.mrf.mxu0
          %v3020 = vadd.f32 %v2907, %v3019
          %v3021 = vpop.f32.mrf.mxu0
          %v3022 = vadd.f32 %v2909, %v3021
          %v3023 = vpop.f32.mrf.mxu0
          %v3024 = vadd.f32 %v2911, %v3023
          %v3025 = vpop.f32.mrf.mxu0
          %v3026 = vadd.f32 %v2913, %v3025
          %3027 = vdwg.mxu0
          %3028 = vmatprep.subr.bf16.mxu0 %v2463
          %3029 = vmatpush1.bf16.msra.mxu0 %v2462
          %3030 = vmatprep.subr.bf16.mxu0 %v2457
          %3031 = vmatpush1.bf16.msra.mxu0 %v2456
          %3032 = vmatprep.subr.bf16.mxu0 %v2451
          %3033 = vmatpush1.bf16.msra.mxu0 %v2450
          %3034 = vmatprep.subr.bf16.mxu0 %v2445
          %3035 = vmatpush1.bf16.msra.mxu0 %v2444
          %3036 = vmatprep.subr.bf16.mxu0 %v2439
          %3037 = vmatpush1.bf16.msra.mxu0 %v2438
          %3038 = vmatprep.subr.bf16.mxu0 %v2433
          %3039 = vmatpush1.bf16.msra.mxu0 %v2432
          %3040 = vmatprep.subr.bf16.mxu0 %v2427
          %3041 = vmatpush1.bf16.msra.mxu0 %v2426
          %3042 = vmatprep.subr.bf16.mxu0 %v2421
          %3043 = vmatpush1.bf16.msra.mxu0 %v2420
          %3044 = vmatprep.subr.bf16.mxu0 %v2511
          %3045 = vmatpush2.bf16.msra.mxu0 %v2510
          %3046 = vmatprep.subr.bf16.mxu0 %v2505
          %3047 = vmatpush2.bf16.msra.mxu0 %v2504
          %3048 = vmatprep.subr.bf16.mxu0 %v2499
          %3049 = vmatpush2.bf16.msra.mxu0 %v2498
          %3050 = vmatprep.subr.bf16.mxu0 %v2493
          %3051 = vmatpush2.bf16.msra.mxu0 %v2492
          %3052 = vmatprep.subr.bf16.mxu0 %v2487
          %3053 = vmatpush2.bf16.msra.mxu0 %v2486
          %3054 = vmatprep.subr.bf16.mxu0 %v2481
          %3055 = vmatpush2.bf16.msra.mxu0 %v2480
          %3056 = vmatprep.subr.bf16.mxu0 %v2475
          %3057 = vmatpush2.bf16.msra.mxu0 %v2474
          %3058 = vmatprep.subr.bf16.mxu0 %v2469
          %3059 = vmatpush2.bf16.msra.mxu0 %v2468
          %3060 = vmatprep.mubr.bf16.mxu0 %v1619
          %3061 = vmatmul.mubr.bf16.gmra.mxu0 %v1618
          %v3062 = vpop.f32.mrf.mxu0
          %v3063 = vadd.f32 0.0, %v3062
          %v3064 = vpop.f32.mrf.mxu0
          %v3065 = vadd.f32 0.0, %v3064
          %v3066 = vpop.f32.mrf.mxu0
          %v3067 = vadd.f32 0.0, %v3066
          %v3068 = vpop.f32.mrf.mxu0
          %v3069 = vadd.f32 0.0, %v3068
          %3070 = vmatprep.mubr.bf16.mxu0 %v1623
          %3071 = vmatmul.mubr.bf16.gmra.mxu0 %v1622
          %v3072 = vpop.f32.mrf.mxu0
          %v3073 = vadd.f32 0.0, %v3072
          %v3074 = vpop.f32.mrf.mxu0
          %v3075 = vadd.f32 0.0, %v3074
          %v3076 = vpop.f32.mrf.mxu0
          %v3077 = vadd.f32 0.0, %v3076
          %v3078 = vpop.f32.mrf.mxu0
          %v3079 = vadd.f32 0.0, %v3078
          %3080 = vmatprep.mubr.bf16.mxu0 %v1627
          %3081 = vmatmul.mubr.bf16.gmra.mxu0 %v1626
          %v3082 = vpop.f32.mrf.mxu0
          %v3083 = vadd.f32 0.0, %v3082
          %v3084 = vpop.f32.mrf.mxu0
          %v3085 = vadd.f32 0.0, %v3084
          %v3086 = vpop.f32.mrf.mxu0
          %v3087 = vadd.f32 0.0, %v3086
          %v3088 = vpop.f32.mrf.mxu0
          %v3089 = vadd.f32 0.0, %v3088
          %3090 = vmatprep.mubr.bf16.mxu0 %v1631
          %3091 = vmatmul.mubr.bf16.gmra.mxu0 %v1630
          %v3092 = vpop.f32.mrf.mxu0
          %v3093 = vadd.f32 0.0, %v3092
          %v3094 = vpop.f32.mrf.mxu0
          %v3095 = vadd.f32 0.0, %v3094
          %v3096 = vpop.f32.mrf.mxu0
          %v3097 = vadd.f32 0.0, %v3096
          %v3098 = vpop.f32.mrf.mxu0
          %v3099 = vadd.f32 0.0, %v3098
          %3100 = vmatprep.mubr.bf16.mxu0 %v1635
          %3101 = vmatmul.mubr.bf16.gmra.mxu0 %v1634
          %v3102 = vpop.f32.mrf.mxu0
          %v3103 = vadd.f32 0.0, %v3102
          %v3104 = vpop.f32.mrf.mxu0
          %v3105 = vadd.f32 0.0, %v3104
          %v3106 = vpop.f32.mrf.mxu0
          %v3107 = vadd.f32 0.0, %v3106
          %v3108 = vpop.f32.mrf.mxu0
          %v3109 = vadd.f32 0.0, %v3108
          %3110 = vmatprep.mubr.bf16.mxu0 %v1639
          %3111 = vmatmul.mubr.bf16.gmra.mxu0 %v1638
          %v3112 = vpop.f32.mrf.mxu0
          %v3113 = vadd.f32 0.0, %v3112
          %v3114 = vpop.f32.mrf.mxu0
          %v3115 = vadd.f32 0.0, %v3114
          %v3116 = vpop.f32.mrf.mxu0
          %v3117 = vadd.f32 0.0, %v3116
          %v3118 = vpop.f32.mrf.mxu0
          %v3119 = vadd.f32 0.0, %v3118
          %3120 = vmatprep.mubr.bf16.mxu0 %v1643
          %3121 = vmatmul.mubr.bf16.gmra.mxu0 %v1642
          %v3122 = vpop.f32.mrf.mxu0
          %v3123 = vadd.f32 0.0, %v3122
          %v3124 = vpop.f32.mrf.mxu0
          %v3125 = vadd.f32 0.0, %v3124
          %v3126 = vpop.f32.mrf.mxu0
          %v3127 = vadd.f32 0.0, %v3126
          %v3128 = vpop.f32.mrf.mxu0
          %v3129 = vadd.f32 0.0, %v3128
          %3130 = vmatprep.mubr.bf16.mxu0 %v1647
          %3131 = vmatmul.mubr.bf16.gmra.mxu0 %v1646
          %v3132 = vpop.f32.mrf.mxu0
          %v3133 = vadd.f32 0.0, %v3132
          %v3134 = vpop.f32.mrf.mxu0
          %v3135 = vadd.f32 0.0, %v3134
          %v3136 = vpop.f32.mrf.mxu0
          %v3137 = vadd.f32 0.0, %v3136
          %v3138 = vpop.f32.mrf.mxu0
          %v3139 = vadd.f32 0.0, %v3138
          %3140 = vdwg.mxu0
          %3141 = vmatprep.subr.bf16.mxu0 %v2559
          %3142 = vmatpush1.bf16.msra.mxu0 %v2558
          %3143 = vmatprep.subr.bf16.mxu0 %v2553
          %3144 = vmatpush1.bf16.msra.mxu0 %v2552
          %3145 = vmatprep.subr.bf16.mxu0 %v2547
          %3146 = vmatpush1.bf16.msra.mxu0 %v2546
          %3147 = vmatprep.subr.bf16.mxu0 %v2541
          %3148 = vmatpush1.bf16.msra.mxu0 %v2540
          %3149 = vmatprep.subr.bf16.mxu0 %v2535
          %3150 = vmatpush1.bf16.msra.mxu0 %v2534
          %3151 = vmatprep.subr.bf16.mxu0 %v2529
          %3152 = vmatpush1.bf16.msra.mxu0 %v2528
          %3153 = vmatprep.subr.bf16.mxu0 %v2523
          %3154 = vmatpush1.bf16.msra.mxu0 %v2522
          %3155 = vmatprep.subr.bf16.mxu0 %v2517
          %3156 = vmatpush1.bf16.msra.mxu0 %v2516
          %3157 = vmatprep.subr.bf16.mxu0 %v2607
          %3158 = vmatpush2.bf16.msra.mxu0 %v2606
          %3159 = vmatprep.subr.bf16.mxu0 %v2601
          %3160 = vmatpush2.bf16.msra.mxu0 %v2600
          %3161 = vmatprep.subr.bf16.mxu0 %v2595
          %3162 = vmatpush2.bf16.msra.mxu0 %v2594
          %3163 = vmatprep.subr.bf16.mxu0 %v2589
          %3164 = vmatpush2.bf16.msra.mxu0 %v2588
          %3165 = vmatprep.subr.bf16.mxu0 %v2583
          %3166 = vmatpush2.bf16.msra.mxu0 %v2582
          %3167 = vmatprep.subr.bf16.mxu0 %v2577
          %3168 = vmatpush2.bf16.msra.mxu0 %v2576
          %3169 = vmatprep.subr.bf16.mxu0 %v2571
          %3170 = vmatpush2.bf16.msra.mxu0 %v2570
          %3171 = vmatprep.subr.bf16.mxu0 %v2565
          %3172 = vmatpush2.bf16.msra.mxu0 %v2564
          %3173 = vmatprep.mubr.bf16.mxu0 %v1621
          %3174 = vmatmul.mubr.bf16.gmra.mxu0 %v1620
          %v3175 = vpop.f32.mrf.mxu0
          %v3176 = vadd.f32 %v3063, %v3175
          %v3177 = vpop.f32.mrf.mxu0
          %v3178 = vadd.f32 %v3065, %v3177
          %v3179 = vpop.f32.mrf.mxu0
          %v3180 = vadd.f32 %v3067, %v3179
          %v3181 = vpop.f32.mrf.mxu0
          %v3182 = vadd.f32 %v3069, %v3181
          %3183 = vmatprep.mubr.bf16.mxu0 %v1625
          %3184 = vmatmul.mubr.bf16.gmra.mxu0 %v1624
          %v3185 = vpop.f32.mrf.mxu0
          %v3186 = vadd.f32 %v3073, %v3185
          %v3187 = vpop.f32.mrf.mxu0
          %v3188 = vadd.f32 %v3075, %v3187
          %v3189 = vpop.f32.mrf.mxu0
          %v3190 = vadd.f32 %v3077, %v3189
          %v3191 = vpop.f32.mrf.mxu0
          %v3192 = vadd.f32 %v3079, %v3191
          %3193 = vmatprep.mubr.bf16.mxu0 %v1629
          %3194 = vmatmul.mubr.bf16.gmra.mxu0 %v1628
          %v3195 = vpop.f32.mrf.mxu0
          %v3196 = vadd.f32 %v3083, %v3195
          %v3197 = vpop.f32.mrf.mxu0
          %v3198 = vadd.f32 %v3085, %v3197
          %v3199 = vpop.f32.mrf.mxu0
          %v3200 = vadd.f32 %v3087, %v3199
          %v3201 = vpop.f32.mrf.mxu0
          %v3202 = vadd.f32 %v3089, %v3201
          %3203 = vmatprep.mubr.bf16.mxu0 %v1633
          %3204 = vmatmul.mubr.bf16.gmra.mxu0 %v1632
          %v3205 = vpop.f32.mrf.mxu0
          %v3206 = vadd.f32 %v3093, %v3205
          %v3207 = vpop.f32.mrf.mxu0
          %v3208 = vadd.f32 %v3095, %v3207
          %v3209 = vpop.f32.mrf.mxu0
          %v3210 = vadd.f32 %v3097, %v3209
          %v3211 = vpop.f32.mrf.mxu0
          %v3212 = vadd.f32 %v3099, %v3211
          %3213 = vmatprep.mubr.bf16.mxu0 %v1637
          %3214 = vmatmul.mubr.bf16.gmra.mxu0 %v1636
          %v3215 = vpop.f32.mrf.mxu0
          %v3216 = vadd.f32 %v3103, %v3215
          %v3217 = vpop.f32.mrf.mxu0
          %v3218 = vadd.f32 %v3105, %v3217
          %v3219 = vpop.f32.mrf.mxu0
          %v3220 = vadd.f32 %v3107, %v3219
          %v3221 = vpop.f32.mrf.mxu0
          %v3222 = vadd.f32 %v3109, %v3221
          %3223 = vmatprep.mubr.bf16.mxu0 %v1641
          %3224 = vmatmul.mubr.bf16.gmra.mxu0 %v1640
          %v3225 = vpop.f32.mrf.mxu0
          %v3226 = vadd.f32 %v3113, %v3225
          %v3227 = vpop.f32.mrf.mxu0
          %v3228 = vadd.f32 %v3115, %v3227
          %v3229 = vpop.f32.mrf.mxu0
          %v3230 = vadd.f32 %v3117, %v3229
          %v3231 = vpop.f32.mrf.mxu0
          %v3232 = vadd.f32 %v3119, %v3231
          %3233 = vmatprep.mubr.bf16.mxu0 %v1645
          %3234 = vmatmul.mubr.bf16.gmra.mxu0 %v1644
          %v3235 = vpop.f32.mrf.mxu0
          %v3236 = vadd.f32 %v3123, %v3235
          %v3237 = vpop.f32.mrf.mxu0
          %v3238 = vadd.f32 %v3125, %v3237
          %v3239 = vpop.f32.mrf.mxu0
          %v3240 = vadd.f32 %v3127, %v3239
          %v3241 = vpop.f32.mrf.mxu0
          %v3242 = vadd.f32 %v3129, %v3241
          %3243 = vmatprep.mubr.bf16.mxu0 %v1649
          %3244 = vmatmul.mubr.bf16.gmra.mxu0 %v1648
          %v3245 = vpop.f32.mrf.mxu0
          %v3246 = vadd.f32 %v3133, %v3245
          %v3247 = vpop.f32.mrf.mxu0
          %v3248 = vadd.f32 %v3135, %v3247
          %v3249 = vpop.f32.mrf.mxu0
          %v3250 = vadd.f32 %v3137, %v3249
          %v3251 = vpop.f32.mrf.mxu0
          %v3252 = vadd.f32 %v3139, %v3251
          %3253 = vdwg.mxu0
          %3254 = vmatprep.subr.bf16.mxu0 %v2465
          %3255 = vmatpush1.bf16.msra.mxu0 %v2464
          %3256 = vmatprep.subr.bf16.mxu0 %v2459
          %3257 = vmatpush1.bf16.msra.mxu0 %v2458
          %3258 = vmatprep.subr.bf16.mxu0 %v2453
          %3259 = vmatpush1.bf16.msra.mxu0 %v2452
          %3260 = vmatprep.subr.bf16.mxu0 %v2447
          %3261 = vmatpush1.bf16.msra.mxu0 %v2446
          %3262 = vmatprep.subr.bf16.mxu0 %v2441
          %3263 = vmatpush1.bf16.msra.mxu0 %v2440
          %3264 = vmatprep.subr.bf16.mxu0 %v2435
          %3265 = vmatpush1.bf16.msra.mxu0 %v2434
          %3266 = vmatprep.subr.bf16.mxu0 %v2429
          %3267 = vmatpush1.bf16.msra.mxu0 %v2428
          %3268 = vmatprep.subr.bf16.mxu0 %v2423
          %3269 = vmatpush1.bf16.msra.mxu0 %v2422
          %3270 = vmatprep.subr.bf16.mxu0 %v2513
          %3271 = vmatpush2.bf16.msra.mxu0 %v2512
          %3272 = vmatprep.subr.bf16.mxu0 %v2507
          %3273 = vmatpush2.bf16.msra.mxu0 %v2506
          %3274 = vmatprep.subr.bf16.mxu0 %v2501
          %3275 = vmatpush2.bf16.msra.mxu0 %v2500
          %3276 = vmatprep.subr.bf16.mxu0 %v2495
          %3277 = vmatpush2.bf16.msra.mxu0 %v2494
          %3278 = vmatprep.subr.bf16.mxu0 %v2489
          %3279 = vmatpush2.bf16.msra.mxu0 %v2488
          %3280 = vmatprep.subr.bf16.mxu0 %v2483
          %3281 = vmatpush2.bf16.msra.mxu0 %v2482
          %3282 = vmatprep.subr.bf16.mxu0 %v2477
          %3283 = vmatpush2.bf16.msra.mxu0 %v2476
          %3284 = vmatprep.subr.bf16.mxu0 %v2471
          %3285 = vmatpush2.bf16.msra.mxu0 %v2470
          %3286 = vmatprep.mubr.bf16.mxu0 %v1619
          %3287 = vmatmul.mubr.bf16.gmra.mxu0 %v1618
          %v3288 = vpop.f32.mrf.mxu0
          %v3289 = vadd.f32 0.0, %v3288
          %v3290 = vpop.f32.mrf.mxu0
          %v3291 = vadd.f32 0.0, %v3290
          %v3292 = vpop.f32.mrf.mxu0
          %v3293 = vadd.f32 0.0, %v3292
          %v3294 = vpop.f32.mrf.mxu0
          %v3295 = vadd.f32 0.0, %v3294
          %3296 = vmatprep.mubr.bf16.mxu0 %v1623
          %3297 = vmatmul.mubr.bf16.gmra.mxu0 %v1622
          %v3298 = vpop.f32.mrf.mxu0
          %v3299 = vadd.f32 0.0, %v3298
          %v3300 = vpop.f32.mrf.mxu0
          %v3301 = vadd.f32 0.0, %v3300
          %v3302 = vpop.f32.mrf.mxu0
          %v3303 = vadd.f32 0.0, %v3302
          %v3304 = vpop.f32.mrf.mxu0
          %v3305 = vadd.f32 0.0, %v3304
          %3306 = vmatprep.mubr.bf16.mxu0 %v1627
          %3307 = vmatmul.mubr.bf16.gmra.mxu0 %v1626
          %v3308 = vpop.f32.mrf.mxu0
          %v3309 = vadd.f32 0.0, %v3308
          %v3310 = vpop.f32.mrf.mxu0
          %v3311 = vadd.f32 0.0, %v3310
          %v3312 = vpop.f32.mrf.mxu0
          %v3313 = vadd.f32 0.0, %v3312
          %v3314 = vpop.f32.mrf.mxu0
          %v3315 = vadd.f32 0.0, %v3314
          %3316 = vmatprep.mubr.bf16.mxu0 %v1631
          %3317 = vmatmul.mubr.bf16.gmra.mxu0 %v1630
          %v3318 = vpop.f32.mrf.mxu0
          %v3319 = vadd.f32 0.0, %v3318
          %v3320 = vpop.f32.mrf.mxu0
          %v3321 = vadd.f32 0.0, %v3320
          %v3322 = vpop.f32.mrf.mxu0
          %v3323 = vadd.f32 0.0, %v3322
          %v3324 = vpop.f32.mrf.mxu0
          %v3325 = vadd.f32 0.0, %v3324
          %3326 = vmatprep.mubr.bf16.mxu0 %v1635
          %3327 = vmatmul.mubr.bf16.gmra.mxu0 %v1634
          %v3328 = vpop.f32.mrf.mxu0
          %v3329 = vadd.f32 0.0, %v3328
          %v3330 = vpop.f32.mrf.mxu0
          %v3331 = vadd.f32 0.0, %v3330
          %v3332 = vpop.f32.mrf.mxu0
          %v3333 = vadd.f32 0.0, %v3332
          %v3334 = vpop.f32.mrf.mxu0
          %v3335 = vadd.f32 0.0, %v3334
          %3336 = vmatprep.mubr.bf16.mxu0 %v1639
          %3337 = vmatmul.mubr.bf16.gmra.mxu0 %v1638
          %v3338 = vpop.f32.mrf.mxu0
          %v3339 = vadd.f32 0.0, %v3338
          %v3340 = vpop.f32.mrf.mxu0
          %v3341 = vadd.f32 0.0, %v3340
          %v3342 = vpop.f32.mrf.mxu0
          %v3343 = vadd.f32 0.0, %v3342
          %v3344 = vpop.f32.mrf.mxu0
          %v3345 = vadd.f32 0.0, %v3344
          %3346 = vmatprep.mubr.bf16.mxu0 %v1643
          %3347 = vmatmul.mubr.bf16.gmra.mxu0 %v1642
          %v3348 = vpop.f32.mrf.mxu0
          %v3349 = vadd.f32 0.0, %v3348
          %v3350 = vpop.f32.mrf.mxu0
          %v3351 = vadd.f32 0.0, %v3350
          %v3352 = vpop.f32.mrf.mxu0
          %v3353 = vadd.f32 0.0, %v3352
          %v3354 = vpop.f32.mrf.mxu0
          %v3355 = vadd.f32 0.0, %v3354
          %3356 = vmatprep.mubr.bf16.mxu0 %v1647
          %3357 = vmatmul.mubr.bf16.gmra.mxu0 %v1646
          %v3358 = vpop.f32.mrf.mxu0
          %v3359 = vadd.f32 0.0, %v3358
          %v3360 = vpop.f32.mrf.mxu0
          %v3361 = vadd.f32 0.0, %v3360
          %v3362 = vpop.f32.mrf.mxu0
          %v3363 = vadd.f32 0.0, %v3362
          %v3364 = vpop.f32.mrf.mxu0
          %v3365 = vadd.f32 0.0, %v3364
          %3366 = vdwg.mxu0
          %3367 = vmatprep.subr.bf16.mxu0 %v2561
          %3368 = vmatpush1.bf16.msra.mxu0 %v2560
          %3369 = vmatprep.subr.bf16.mxu0 %v2555
          %3370 = vmatpush1.bf16.msra.mxu0 %v2554
          %3371 = vmatprep.subr.bf16.mxu0 %v2549
          %3372 = vmatpush1.bf16.msra.mxu0 %v2548
          %3373 = vmatprep.subr.bf16.mxu0 %v2543
          %3374 = vmatpush1.bf16.msra.mxu0 %v2542
          %3375 = vmatprep.subr.bf16.mxu0 %v2537
          %3376 = vmatpush1.bf16.msra.mxu0 %v2536
          %3377 = vmatprep.subr.bf16.mxu0 %v2531
          %3378 = vmatpush1.bf16.msra.mxu0 %v2530
          %3379 = vmatprep.subr.bf16.mxu0 %v2525
          %3380 = vmatpush1.bf16.msra.mxu0 %v2524
          %3381 = vmatprep.subr.bf16.mxu0 %v2519
          %3382 = vmatpush1.bf16.msra.mxu0 %v2518
          %3383 = vmatprep.subr.bf16.mxu0 %v2609
          %3384 = vmatpush2.bf16.msra.mxu0 %v2608
          %3385 = vmatprep.subr.bf16.mxu0 %v2603
          %3386 = vmatpush2.bf16.msra.mxu0 %v2602
          %3387 = vmatprep.subr.bf16.mxu0 %v2597
          %3388 = vmatpush2.bf16.msra.mxu0 %v2596
          %3389 = vmatprep.subr.bf16.mxu0 %v2591
          %3390 = vmatpush2.bf16.msra.mxu0 %v2590
          %3391 = vmatprep.subr.bf16.mxu0 %v2585
          %3392 = vmatpush2.bf16.msra.mxu0 %v2584
          %3393 = vmatprep.subr.bf16.mxu0 %v2579
          %3394 = vmatpush2.bf16.msra.mxu0 %v2578
          %3395 = vmatprep.subr.bf16.mxu0 %v2573
          %3396 = vmatpush2.bf16.msra.mxu0 %v2572
          %3397 = vmatprep.subr.bf16.mxu0 %v2567
          %3398 = vmatpush2.bf16.msra.mxu0 %v2566
          %3399 = vmatprep.mubr.bf16.mxu0 %v1621
          %3400 = vmatmul.mubr.bf16.gmra.mxu0 %v1620
          %v3401 = vpop.f32.mrf.mxu0
          %v3402 = vadd.f32 %v3289, %v3401
          %v3403 = vpop.f32.mrf.mxu0
          %v3404 = vadd.f32 %v3291, %v3403
          %v3405 = vpop.f32.mrf.mxu0
          %v3406 = vadd.f32 %v3293, %v3405
          %v3407 = vpop.f32.mrf.mxu0
          %v3408 = vadd.f32 %v3295, %v3407
          %3409 = vmatprep.mubr.bf16.mxu0 %v1625
          %3410 = vmatmul.mubr.bf16.gmra.mxu0 %v1624
          %v3411 = vpop.f32.mrf.mxu0
          %v3412 = vadd.f32 %v3299, %v3411
          %v3413 = vpop.f32.mrf.mxu0
          %v3414 = vadd.f32 %v3301, %v3413
          %v3415 = vpop.f32.mrf.mxu0
          %v3416 = vadd.f32 %v3303, %v3415
          %v3417 = vpop.f32.mrf.mxu0
          %v3418 = vadd.f32 %v3305, %v3417
          %3419 = vmatprep.mubr.bf16.mxu0 %v1629
          %3420 = vmatmul.mubr.bf16.gmra.mxu0 %v1628
          %v3421 = vpop.f32.mrf.mxu0
          %v3422 = vadd.f32 %v3309, %v3421
          %v3423 = vpop.f32.mrf.mxu0
          %v3424 = vadd.f32 %v3311, %v3423
          %v3425 = vpop.f32.mrf.mxu0
          %v3426 = vadd.f32 %v3313, %v3425
          %v3427 = vpop.f32.mrf.mxu0
          %v3428 = vadd.f32 %v3315, %v3427
          %3429 = vmatprep.mubr.bf16.mxu0 %v1633
          %3430 = vmatmul.mubr.bf16.gmra.mxu0 %v1632
          %v3431 = vpop.f32.mrf.mxu0
          %v3432 = vadd.f32 %v3319, %v3431
          %v3433 = vpop.f32.mrf.mxu0
          %v3434 = vadd.f32 %v3321, %v3433
          %v3435 = vpop.f32.mrf.mxu0
          %v3436 = vadd.f32 %v3323, %v3435
          %v3437 = vpop.f32.mrf.mxu0
          %v3438 = vadd.f32 %v3325, %v3437
          %3439 = vmatprep.mubr.bf16.mxu0 %v1637
          %3440 = vmatmul.mubr.bf16.gmra.mxu0 %v1636
          %v3441 = vpop.f32.mrf.mxu0
          %v3442 = vadd.f32 %v3329, %v3441
          %v3443 = vpop.f32.mrf.mxu0
          %v3444 = vadd.f32 %v3331, %v3443
          %v3445 = vpop.f32.mrf.mxu0
          %v3446 = vadd.f32 %v3333, %v3445
          %v3447 = vpop.f32.mrf.mxu0
          %v3448 = vadd.f32 %v3335, %v3447
          %3449 = vmatprep.mubr.bf16.mxu0 %v1641
          %3450 = vmatmul.mubr.bf16.gmra.mxu0 %v1640
          %v3451 = vpop.f32.mrf.mxu0
          %v3452 = vadd.f32 %v3339, %v3451
          %v3453 = vpop.f32.mrf.mxu0
          %v3454 = vadd.f32 %v3341, %v3453
          %v3455 = vpop.f32.mrf.mxu0
          %v3456 = vadd.f32 %v3343, %v3455
          %v3457 = vpop.f32.mrf.mxu0
          %v3458 = vadd.f32 %v3345, %v3457
          %3459 = vmatprep.mubr.bf16.mxu0 %v1645
          %3460 = vmatmul.mubr.bf16.gmra.mxu0 %v1644
          %v3461 = vpop.f32.mrf.mxu0
          %v3462 = vadd.f32 %v3349, %v3461
          %v3463 = vpop.f32.mrf.mxu0
          %v3464 = vadd.f32 %v3351, %v3463
          %v3465 = vpop.f32.mrf.mxu0
          %v3466 = vadd.f32 %v3353, %v3465
          %v3467 = vpop.f32.mrf.mxu0
          %v3468 = vadd.f32 %v3355, %v3467
          %3469 = vmatprep.mubr.bf16.mxu0 %v1649
          %3470 = vmatmul.mubr.bf16.gmra.mxu0 %v1648
          %v3471 = vpop.f32.mrf.mxu0
          %v3472 = vadd.f32 %v3359, %v3471
          %v3473 = vpop.f32.mrf.mxu0
          %v3474 = vadd.f32 %v3361, %v3473
          %v3475 = vpop.f32.mrf.mxu0
          %v3476 = vadd.f32 %v3363, %v3475
          %v3477 = vpop.f32.mrf.mxu0
          %v3478 = vadd.f32 %v3365, %v3477
          %3479 = vdwg.mxu0
          %v3480 = vmax.f32 %v2950, 0.0
          %v3481 = vmax.f32 %v2952, 0.0
          %v3482 = vmax.f32 %v3176, 0.0
          %v3483 = vmax.f32 %v3178, 0.0
          %v3484 = vmax.f32 %v3402, 0.0
          %v3485 = vmax.f32 %v3404, 0.0
          %v3486 = vmax.f32 %v2954, 0.0
          %v3487 = vmax.f32 %v2956, 0.0
          %v3488 = vmax.f32 %v3180, 0.0
          %v3489 = vmax.f32 %v3182, 0.0
          %v3490 = vmax.f32 %v3406, 0.0
          %v3491 = vmax.f32 %v3408, 0.0
          %v3492 = vmax.f32 %v2960, 0.0
          %v3493 = vmax.f32 %v2962, 0.0
          %v3494 = vmax.f32 %v3186, 0.0
          %v3495 = vmax.f32 %v3188, 0.0
          %v3496 = vmax.f32 %v3412, 0.0
          %v3497 = vmax.f32 %v3414, 0.0
          %v3498 = vmax.f32 %v2964, 0.0
          %v3499 = vmax.f32 %v2966, 0.0
          %v3500 = vmax.f32 %v3190, 0.0
          %v3501 = vmax.f32 %v3192, 0.0
          %v3502 = vmax.f32 %v3416, 0.0
          %v3503 = vmax.f32 %v3418, 0.0
          %v3504 = vmax.f32 %v2970, 0.0
          %v3505 = vmax.f32 %v2972, 0.0
          %v3506 = vmax.f32 %v3196, 0.0
          %v3507 = vmax.f32 %v3198, 0.0
          %v3508 = vmax.f32 %v3422, 0.0
          %v3509 = vmax.f32 %v3424, 0.0
          %v3510 = vmax.f32 %v2974, 0.0
          %v3511 = vmax.f32 %v2976, 0.0
          %v3512 = vmax.f32 %v3200, 0.0
          %v3513 = vmax.f32 %v3202, 0.0
          %v3514 = vmax.f32 %v3426, 0.0
          %v3515 = vmax.f32 %v3428, 0.0
          %v3516 = vmax.f32 %v2980, 0.0
          %v3517 = vmax.f32 %v2982, 0.0
          %v3518 = vmax.f32 %v3206, 0.0
          %v3519 = vmax.f32 %v3208, 0.0
          %v3520 = vmax.f32 %v3432, 0.0
          %v3521 = vmax.f32 %v3434, 0.0
          %v3522 = vmax.f32 %v2984, 0.0
          %v3523 = vmax.f32 %v2986, 0.0
          %v3524 = vmax.f32 %v3210, 0.0
          %v3525 = vmax.f32 %v3212, 0.0
          %v3526 = vmax.f32 %v3436, 0.0
          %v3527 = vmax.f32 %v3438, 0.0
          %v3528 = vmax.f32 %v2990, 0.0
          %v3529 = vmax.f32 %v2992, 0.0
          %v3530 = vmax.f32 %v3216, 0.0
          %v3531 = vmax.f32 %v3218, 0.0
          %v3532 = vmax.f32 %v3442, 0.0
          %v3533 = vmax.f32 %v3444, 0.0
          %v3534 = vmax.f32 %v2994, 0.0
          %v3535 = vmax.f32 %v2996, 0.0
          %v3536 = vmax.f32 %v3220, 0.0
          %v3537 = vmax.f32 %v3222, 0.0
          %v3538 = vmax.f32 %v3446, 0.0
          %v3539 = vmax.f32 %v3448, 0.0
          %v3540 = vmax.f32 %v3000, 0.0
          %v3541 = vmax.f32 %v3002, 0.0
          %v3542 = vmax.f32 %v3226, 0.0
          %v3543 = vmax.f32 %v3228, 0.0
          %v3544 = vmax.f32 %v3452, 0.0
          %v3545 = vmax.f32 %v3454, 0.0
          %v3546 = vmax.f32 %v3004, 0.0
          %v3547 = vmax.f32 %v3006, 0.0
          %v3548 = vmax.f32 %v3230, 0.0
          %v3549 = vmax.f32 %v3232, 0.0
          %v3550 = vmax.f32 %v3456, 0.0
          %v3551 = vmax.f32 %v3458, 0.0
          %v3552 = vmax.f32 %v3010, 0.0
          %v3553 = vmax.f32 %v3012, 0.0
          %v3554 = vmax.f32 %v3236, 0.0
          %v3555 = vmax.f32 %v3238, 0.0
          %v3556 = vmax.f32 %v3462, 0.0
          %v3557 = vmax.f32 %v3464, 0.0
          %v3558 = vmax.f32 %v3014, 0.0
          %v3559 = vmax.f32 %v3016, 0.0
          %v3560 = vmax.f32 %v3240, 0.0
          %v3561 = vmax.f32 %v3242, 0.0
          %v3562 = vmax.f32 %v3466, 0.0
          %v3563 = vmax.f32 %v3468, 0.0
          %v3564 = vmax.f32 %v3020, 0.0
          %v3565 = vmax.f32 %v3022, 0.0
          %v3566 = vmax.f32 %v3246, 0.0
          %v3567 = vmax.f32 %v3248, 0.0
          %v3568 = vmax.f32 %v3472, 0.0
          %v3569 = vmax.f32 %v3474, 0.0
          %v3570 = vmax.f32 %v3024, 0.0
          %v3571 = vmax.f32 %v3026, 0.0
          %v3572 = vmax.f32 %v3250, 0.0
          %v3573 = vmax.f32 %v3252, 0.0
          %v3574 = vmax.f32 %v3476, 0.0
          %v3575 = vmax.f32 %v3478, 0.0
          %v3576 = vpack.c.bf16 %v3486, %v3480
          %v3577 = vpack.c.bf16 %v3487, %v3481
          %v3578 = vpack.c.bf16 %v3488, %v3482
          %v3579 = vpack.c.bf16 %v3489, %v3483
          %v3580 = vpack.c.bf16 %v3490, %v3484
          %v3581 = vpack.c.bf16 %v3491, %v3485
          %v3582 = vpack.c.bf16 %v3498, %v3492
          %v3583 = vpack.c.bf16 %v3499, %v3493
          %v3584 = vpack.c.bf16 %v3500, %v3494
          %v3585 = vpack.c.bf16 %v3501, %v3495
          %v3586 = vpack.c.bf16 %v3502, %v3496
          %v3587 = vpack.c.bf16 %v3503, %v3497
          %v3588 = vpack.c.bf16 %v3510, %v3504
          %v3589 = vpack.c.bf16 %v3511, %v3505
          %v3590 = vpack.c.bf16 %v3512, %v3506
          %v3591 = vpack.c.bf16 %v3513, %v3507
          %v3592 = vpack.c.bf16 %v3514, %v3508
          %v3593 = vpack.c.bf16 %v3515, %v3509
          %v3594 = vpack.c.bf16 %v3522, %v3516
          %v3595 = vpack.c.bf16 %v3523, %v3517
          %v3596 = vpack.c.bf16 %v3524, %v3518
          %v3597 = vpack.c.bf16 %v3525, %v3519
          %v3598 = vpack.c.bf16 %v3526, %v3520
          %v3599 = vpack.c.bf16 %v3527, %v3521
          %v3600 = vpack.c.bf16 %v3534, %v3528
          %v3601 = vpack.c.bf16 %v3535, %v3529
          %v3602 = vpack.c.bf16 %v3536, %v3530
          %v3603 = vpack.c.bf16 %v3537, %v3531
          %v3604 = vpack.c.bf16 %v3538, %v3532
          %v3605 = vpack.c.bf16 %v3539, %v3533
          %v3606 = vpack.c.bf16 %v3546, %v3540
          %v3607 = vpack.c.bf16 %v3547, %v3541
          %v3608 = vpack.c.bf16 %v3548, %v3542
          %v3609 = vpack.c.bf16 %v3549, %v3543
          %v3610 = vpack.c.bf16 %v3550, %v3544
          %v3611 = vpack.c.bf16 %v3551, %v3545
          %v3612 = vpack.c.bf16 %v3558, %v3552
          %v3613 = vpack.c.bf16 %v3559, %v3553
          %v3614 = vpack.c.bf16 %v3560, %v3554
          %v3615 = vpack.c.bf16 %v3561, %v3555
          %v3616 = vpack.c.bf16 %v3562, %v3556
          %v3617 = vpack.c.bf16 %v3563, %v3557
          %v3618 = vpack.c.bf16 %v3570, %v3564
          %v3619 = vpack.c.bf16 %v3571, %v3565
          %v3620 = vpack.c.bf16 %v3572, %v3566
          %v3621 = vpack.c.bf16 %v3573, %v3567
          %v3622 = vpack.c.bf16 %v3574, %v3568
          %v3623 = vpack.c.bf16 %v3575, %v3569
          %v3624 = vld [vmem:[#allocation8] sm:$0xf]
          %v3625 = vld [vmem:[#allocation8 + $0x4] sm:$0xf]
          %v3626 = vld [vmem:[#allocation8 + $0x8] sm:$0xf]
          %v3627 = vld [vmem:[#allocation8 + $0xc] sm:$0xf]
          %v3628 = vld [vmem:[#allocation8 + $0x10] sm:$0xf]
          %v3629 = vld [vmem:[#allocation8 + $0x14] sm:$0xf]
          %v3630 = vld [vmem:[#allocation8 + $0x18] sm:$0xf]
          %v3631 = vld [vmem:[#allocation8 + $0x1c] sm:$0xf]
          %v3632 = vld [vmem:[#allocation8 + $0x20] sm:$0xf]
          %v3633 = vld [vmem:[#allocation8 + $0x24] sm:$0xf]
          %v3634 = vld [vmem:[#allocation8 + $0x28] sm:$0xf]
          %v3635 = vld [vmem:[#allocation8 + $0x2c] sm:$0xf]
          %v3636 = vld [vmem:[#allocation8 + $0x30] sm:$0xf]
          %v3637 = vld [vmem:[#allocation8 + $0x34] sm:$0xf]
          %v3638 = vld [vmem:[#allocation8 + $0x38] sm:$0xf]
          %v3639 = vld [vmem:[#allocation8 + $0x3c] sm:$0xf]
          %v3640 = vld [vmem:[#allocation8 + $0x40] sm:$0xf]
          %v3641 = vld [vmem:[#allocation8 + $0x44] sm:$0xf]
          %v3642 = vld [vmem:[#allocation8 + $0x48] sm:$0xf]
          %v3643 = vld [vmem:[#allocation8 + $0x4c] sm:$0xf]
          %v3644 = vld [vmem:[#allocation8 + $0x50] sm:$0xf]
          %v3645 = vld [vmem:[#allocation8 + $0x54] sm:$0xf]
          %v3646 = vld [vmem:[#allocation8 + $0x58] sm:$0xf]
          %v3647 = vld [vmem:[#allocation8 + $0x5c] sm:$0xf]
          %v3648 = vld [vmem:[#allocation8 + $0x60] sm:$0xf]
          %v3649 = vld [vmem:[#allocation8 + $0x64] sm:$0xf]
          %v3650 = vld [vmem:[#allocation8 + $0x68] sm:$0xf]
          %v3651 = vld [vmem:[#allocation8 + $0x6c] sm:$0xf]
          %v3652 = vld [vmem:[#allocation8 + $0x70] sm:$0xf]
          %v3653 = vld [vmem:[#allocation8 + $0x74] sm:$0xf]
          %v3654 = vld [vmem:[#allocation8 + $0x78] sm:$0xf]
          %v3655 = vld [vmem:[#allocation8 + $0x7c] sm:$0xf]
          %v3656 = vld [vmem:[#allocation8 + $0x80] sm:$0xf]
          %v3657 = vld [vmem:[#allocation8 + $0x84] sm:$0xf]
          %v3658 = vld [vmem:[#allocation8 + $0x88] sm:$0xf]
          %v3659 = vld [vmem:[#allocation8 + $0x8c] sm:$0xf]
          %v3660 = vld [vmem:[#allocation8 + $0x90] sm:$0xf]
          %v3661 = vld [vmem:[#allocation8 + $0x94] sm:$0xf]
          %v3662 = vld [vmem:[#allocation8 + $0x98] sm:$0xf]
          %v3663 = vld [vmem:[#allocation8 + $0x9c] sm:$0xf]
          %v3664 = vld [vmem:[#allocation8 + $0xa0] sm:$0xf]
          %v3665 = vld [vmem:[#allocation8 + $0xa4] sm:$0xf]
          %v3666 = vld [vmem:[#allocation8 + $0xa8] sm:$0xf]
          %v3667 = vld [vmem:[#allocation8 + $0xac] sm:$0xf]
          %v3668 = vld [vmem:[#allocation8 + $0xb0] sm:$0xf]
          %v3669 = vld [vmem:[#allocation8 + $0xb4] sm:$0xf]
          %v3670 = vld [vmem:[#allocation8 + $0xb8] sm:$0xf]
          %v3671 = vld [vmem:[#allocation8 + $0xbc] sm:$0xf]
          %v3672 = vld [vmem:[#allocation8 + $0xc0] sm:$0xf]
          %v3673 = vld [vmem:[#allocation8 + $0xc4] sm:$0xf]
          %v3674 = vld [vmem:[#allocation8 + $0xc8] sm:$0xf]
          %v3675 = vld [vmem:[#allocation8 + $0xcc] sm:$0xf]
          %v3676 = vld [vmem:[#allocation8 + $0xd0] sm:$0xf]
          %v3677 = vld [vmem:[#allocation8 + $0xd4] sm:$0xf]
          %v3678 = vld [vmem:[#allocation8 + $0xd8] sm:$0xf]
          %v3679 = vld [vmem:[#allocation8 + $0xdc] sm:$0xf]
          %v3680 = vld [vmem:[#allocation8 + $0xe0] sm:$0xf]
          %v3681 = vld [vmem:[#allocation8 + $0xe4] sm:$0xf]
          %v3682 = vld [vmem:[#allocation8 + $0xe8] sm:$0xf]
          %v3683 = vld [vmem:[#allocation8 + $0xec] sm:$0xf]
          %v3684 = vld [vmem:[#allocation8 + $0xf0] sm:$0xf]
          %v3685 = vld [vmem:[#allocation8 + $0xf4] sm:$0xf]
          %v3686 = vld [vmem:[#allocation8 + $0xf8] sm:$0xf]
          %v3687 = vld [vmem:[#allocation8 + $0xfc] sm:$0xf]
          %v3688 = vld [vmem:[#allocation8 + $0x100] sm:$0xf]
          %v3689 = vld [vmem:[#allocation8 + $0x104] sm:$0xf]
          %v3690 = vld [vmem:[#allocation8 + $0x108] sm:$0xf]
          %v3691 = vld [vmem:[#allocation8 + $0x10c] sm:$0xf]
          %v3692 = vld [vmem:[#allocation8 + $0x110] sm:$0xf]
          %v3693 = vld [vmem:[#allocation8 + $0x114] sm:$0xf]
          %v3694 = vld [vmem:[#allocation8 + $0x118] sm:$0xf]
          %v3695 = vld [vmem:[#allocation8 + $0x11c] sm:$0xf]
          %v3696 = vld [vmem:[#allocation8 + $0x120] sm:$0xf]
          %v3697 = vld [vmem:[#allocation8 + $0x124] sm:$0xf]
          %v3698 = vld [vmem:[#allocation8 + $0x128] sm:$0xf]
          %v3699 = vld [vmem:[#allocation8 + $0x12c] sm:$0xf]
          %v3700 = vld [vmem:[#allocation8 + $0x130] sm:$0xf]
          %v3701 = vld [vmem:[#allocation8 + $0x134] sm:$0xf]
          %v3702 = vld [vmem:[#allocation8 + $0x138] sm:$0xf]
          %v3703 = vld [vmem:[#allocation8 + $0x13c] sm:$0xf]
          %v3704 = vld [vmem:[#allocation8 + $0x140] sm:$0xf]
          %v3705 = vld [vmem:[#allocation8 + $0x144] sm:$0xf]
          %v3706 = vld [vmem:[#allocation8 + $0x148] sm:$0xf]
          %v3707 = vld [vmem:[#allocation8 + $0x14c] sm:$0xf]
          %v3708 = vld [vmem:[#allocation8 + $0x150] sm:$0xf]
          %v3709 = vld [vmem:[#allocation8 + $0x154] sm:$0xf]
          %v3710 = vld [vmem:[#allocation8 + $0x158] sm:$0xf]
          %v3711 = vld [vmem:[#allocation8 + $0x15c] sm:$0xf]
          %v3712 = vld [vmem:[#allocation8 + $0x160] sm:$0xf]
          %v3713 = vld [vmem:[#allocation8 + $0x164] sm:$0xf]
          %v3714 = vld [vmem:[#allocation8 + $0x168] sm:$0xf]
          %v3715 = vld [vmem:[#allocation8 + $0x16c] sm:$0xf]
          %v3716 = vld [vmem:[#allocation8 + $0x170] sm:$0xf]
          %v3717 = vld [vmem:[#allocation8 + $0x174] sm:$0xf]
          %v3718 = vld [vmem:[#allocation8 + $0x178] sm:$0xf]
          %v3719 = vld [vmem:[#allocation8 + $0x17c] sm:$0xf]
          %v3720 = vld [vmem:[%s6] sm:$0x1]
          %v3722 = vlaneseq
          %v3723 = vshrl.u32 %v3722, 7
          %v3724 = vsub.s32 0, %v3723
          %v3725 = vrot.slane %v3720, %v3724
          %v3823 = vunpack.c.l.b16 %v3624
          %v3824 = vunpack.c.l.b16 %v3625
          %v3825 = vunpack.c.l.b16 %v3626
          %v3826 = vunpack.c.l.b16 %v3627
          %v3827 = vunpack.c.l.b16 %v3628
          %v3828 = vunpack.c.l.b16 %v3629
          %v3829 = vunpack.c.l.b16 %v3630
          %v3830 = vunpack.c.l.b16 %v3631
          %v3831 = vunpack.c.l.b16 %v3632
          %v3832 = vunpack.c.l.b16 %v3633
          %v3833 = vunpack.c.l.b16 %v3634
          %v3834 = vunpack.c.l.b16 %v3635
          %v3835 = vunpack.c.l.b16 %v3636
          %v3836 = vunpack.c.l.b16 %v3637
          %v3837 = vunpack.c.l.b16 %v3638
          %v3838 = vunpack.c.l.b16 %v3639
          %v3839 = vunpack.c.l.b16 %v3640
          %v3840 = vunpack.c.l.b16 %v3641
          %v3841 = vunpack.c.l.b16 %v3642
          %v3842 = vunpack.c.l.b16 %v3643
          %v3843 = vunpack.c.l.b16 %v3644
          %v3844 = vunpack.c.l.b16 %v3645
          %v3845 = vunpack.c.l.b16 %v3646
          %v3846 = vunpack.c.l.b16 %v3647
          %v3847 = vunpack.c.l.b16 %v3648
          %v3848 = vunpack.c.l.b16 %v3649
          %v3849 = vunpack.c.l.b16 %v3650
          %v3850 = vunpack.c.l.b16 %v3651
          %v3851 = vunpack.c.l.b16 %v3652
          %v3852 = vunpack.c.l.b16 %v3653
          %v3853 = vunpack.c.l.b16 %v3654
          %v3854 = vunpack.c.l.b16 %v3655
          %v3855 = vunpack.c.l.b16 %v3656
          %v3856 = vunpack.c.l.b16 %v3657
          %v3857 = vunpack.c.l.b16 %v3658
          %v3858 = vunpack.c.l.b16 %v3659
          %v3859 = vunpack.c.l.b16 %v3660
          %v3860 = vunpack.c.l.b16 %v3661
          %v3861 = vunpack.c.l.b16 %v3662
          %v3862 = vunpack.c.l.b16 %v3663
          %v3863 = vunpack.c.l.b16 %v3664
          %v3864 = vunpack.c.l.b16 %v3665
          %v3865 = vunpack.c.l.b16 %v3666
          %v3866 = vunpack.c.l.b16 %v3667
          %v3867 = vunpack.c.l.b16 %v3668
          %v3868 = vunpack.c.l.b16 %v3669
          %v3869 = vunpack.c.l.b16 %v3670
          %v3870 = vunpack.c.l.b16 %v3671
          %v3871 = vunpack.c.l.b16 %v3672
          %v3872 = vunpack.c.l.b16 %v3673
          %v3873 = vunpack.c.l.b16 %v3674
          %v3874 = vunpack.c.l.b16 %v3675
          %v3875 = vunpack.c.l.b16 %v3676
          %v3876 = vunpack.c.l.b16 %v3677
          %v3877 = vunpack.c.l.b16 %v3678
          %v3878 = vunpack.c.l.b16 %v3679
          %v3879 = vunpack.c.l.b16 %v3680
          %v3880 = vunpack.c.l.b16 %v3681
          %v3881 = vunpack.c.l.b16 %v3682
          %v3882 = vunpack.c.l.b16 %v3683
          %v3883 = vunpack.c.l.b16 %v3684
          %v3884 = vunpack.c.l.b16 %v3685
          %v3885 = vunpack.c.l.b16 %v3686
          %v3886 = vunpack.c.l.b16 %v3687
          %v3887 = vunpack.c.l.b16 %v3688
          %v3888 = vunpack.c.l.b16 %v3689
          %v3889 = vunpack.c.l.b16 %v3690
          %v3890 = vunpack.c.l.b16 %v3691
          %v3891 = vunpack.c.l.b16 %v3692
          %v3892 = vunpack.c.l.b16 %v3693
          %v3893 = vunpack.c.l.b16 %v3694
          %v3894 = vunpack.c.l.b16 %v3695
          %v3895 = vunpack.c.l.b16 %v3696
          %v3896 = vunpack.c.l.b16 %v3697
          %v3897 = vunpack.c.l.b16 %v3698
          %v3898 = vunpack.c.l.b16 %v3699
          %v3899 = vunpack.c.l.b16 %v3700
          %v3900 = vunpack.c.l.b16 %v3701
          %v3901 = vunpack.c.l.b16 %v3702
          %v3902 = vunpack.c.l.b16 %v3703
          %v3903 = vunpack.c.l.b16 %v3704
          %v3904 = vunpack.c.l.b16 %v3705
          %v3905 = vunpack.c.l.b16 %v3706
          %v3906 = vunpack.c.l.b16 %v3707
          %v3907 = vunpack.c.l.b16 %v3708
          %v3908 = vunpack.c.l.b16 %v3709
          %v3909 = vunpack.c.l.b16 %v3710
          %v3910 = vunpack.c.l.b16 %v3711
          %v3911 = vunpack.c.l.b16 %v3712
          %v3912 = vunpack.c.l.b16 %v3713
          %v3913 = vunpack.c.l.b16 %v3714
          %v3914 = vunpack.c.l.b16 %v3715
          %v3915 = vunpack.c.l.b16 %v3716
          %v3916 = vunpack.c.l.b16 %v3717
          %v3917 = vunpack.c.l.b16 %v3718
          %v3918 = vunpack.c.l.b16 %v3719
          %v3919 = vpack.c.b16 %v3824, %v3823
          %v3920 = vpack.c.b16 %v3826, %v3825
          %v3921 = vpack.c.b16 %v3828, %v3827
          %v3922 = vpack.c.b16 %v3830, %v3829
          %v3923 = vpack.c.b16 %v3832, %v3831
          %v3924 = vpack.c.b16 %v3834, %v3833
          %v3925 = vpack.c.b16 %v3836, %v3835
          %v3926 = vpack.c.b16 %v3838, %v3837
          %v3927 = vpack.c.b16 %v3840, %v3839
          %v3928 = vpack.c.b16 %v3842, %v3841
          %v3929 = vpack.c.b16 %v3844, %v3843
          %v3930 = vpack.c.b16 %v3846, %v3845
          %v3931 = vpack.c.b16 %v3848, %v3847
          %v3932 = vpack.c.b16 %v3850, %v3849
          %v3933 = vpack.c.b16 %v3852, %v3851
          %v3934 = vpack.c.b16 %v3854, %v3853
          %v3935 = vpack.c.b16 %v3856, %v3855
          %v3936 = vpack.c.b16 %v3858, %v3857
          %v3937 = vpack.c.b16 %v3860, %v3859
          %v3938 = vpack.c.b16 %v3862, %v3861
          %v3939 = vpack.c.b16 %v3864, %v3863
          %v3940 = vpack.c.b16 %v3866, %v3865
          %v3941 = vpack.c.b16 %v3868, %v3867
          %v3942 = vpack.c.b16 %v3870, %v3869
          %v3943 = vpack.c.b16 %v3872, %v3871
          %v3944 = vpack.c.b16 %v3874, %v3873
          %v3945 = vpack.c.b16 %v3876, %v3875
          %v3946 = vpack.c.b16 %v3878, %v3877
          %v3947 = vpack.c.b16 %v3880, %v3879
          %v3948 = vpack.c.b16 %v3882, %v3881
          %v3949 = vpack.c.b16 %v3884, %v3883
          %v3950 = vpack.c.b16 %v3886, %v3885
          %v3951 = vpack.c.b16 %v3888, %v3887
          %v3952 = vpack.c.b16 %v3890, %v3889
          %v3953 = vpack.c.b16 %v3892, %v3891
          %v3954 = vpack.c.b16 %v3894, %v3893
          %v3955 = vpack.c.b16 %v3896, %v3895
          %v3956 = vpack.c.b16 %v3898, %v3897
          %v3957 = vpack.c.b16 %v3900, %v3899
          %v3958 = vpack.c.b16 %v3902, %v3901
          %v3959 = vpack.c.b16 %v3904, %v3903
          %v3960 = vpack.c.b16 %v3906, %v3905
          %v3961 = vpack.c.b16 %v3908, %v3907
          %v3962 = vpack.c.b16 %v3910, %v3909
          %v3963 = vpack.c.b16 %v3912, %v3911
          %v3964 = vpack.c.b16 %v3914, %v3913
          %v3965 = vpack.c.b16 %v3916, %v3915
          %v3966 = vpack.c.b16 %v3918, %v3917
          %4015 = vmatprep.subr.bf16.mxu0 0
          %4016 = vmatpush1.bf16.msra.mxu0 %v3926
          %4017 = vmatprep.subr.bf16.mxu0 0
          %4018 = vmatpush1.bf16.msra.mxu0 %v3925
          %4019 = vmatprep.subr.bf16.mxu0 0
          %4020 = vmatpush1.bf16.msra.mxu0 %v3924
          %4021 = vmatprep.subr.bf16.mxu0 0
          %4022 = vmatpush1.bf16.msra.mxu0 %v3923
          %4023 = vmatprep.subr.bf16.mxu0 0
          %4024 = vmatpush1.bf16.msra.mxu0 %v3922
          %4025 = vmatprep.subr.bf16.mxu0 0
          %4026 = vmatpush1.bf16.msra.mxu0 %v3921
          %4027 = vmatprep.subr.bf16.mxu0 0
          %4028 = vmatpush1.bf16.msra.mxu0 %v3920
          %4029 = vmatprep.subr.bf16.mxu0 0
          %4030 = vmatpush1.bf16.msra.mxu0 %v3919
          %4031 = vmatprep.subr.bf16.mxu0 0
          %4032 = vmatpush2.bf16.msra.mxu0 %v3934
          %4033 = vmatprep.subr.bf16.mxu0 0
          %4034 = vmatpush2.bf16.msra.mxu0 %v3933
          %4035 = vmatprep.subr.bf16.mxu0 0
          %4036 = vmatpush2.bf16.msra.mxu0 %v3932
          %4037 = vmatprep.subr.bf16.mxu0 0
          %4038 = vmatpush2.bf16.msra.mxu0 %v3931
          %4039 = vmatprep.subr.bf16.mxu0 0
          %4040 = vmatpush2.bf16.msra.mxu0 %v3930
          %4041 = vmatprep.subr.bf16.mxu0 0
          %4042 = vmatpush2.bf16.msra.mxu0 %v3929
          %4043 = vmatprep.subr.bf16.mxu0 0
          %4044 = vmatpush2.bf16.msra.mxu0 %v3928
          %4045 = vmatprep.subr.bf16.mxu0 0
          %4046 = vmatpush2.bf16.msra.mxu0 %v3927
          %4047 = vmatprep.mubr.bf16.mxu0 %v3577
          %4048 = vmatmul.mubr.bf16.gmra.mxu0 %v3576
          %v4049 = vpop.f32.mrf.mxu0
          %v4050 = vadd.f32 %v3725, %v4049
          %v4051 = vpop.f32.mrf.mxu0
          %v4052 = vpop.f32.mrf.mxu0
          %v4053 = vadd.f32 %v3725, %v4052
          %v4054 = vpop.f32.mrf.mxu0
          %4055 = vmatprep.mubr.bf16.mxu0 %v3583
          %4056 = vmatmul.mubr.bf16.gmra.mxu0 %v3582
          %v4057 = vpop.f32.mrf.mxu0
          %v4058 = vadd.f32 %v3725, %v4057
          %v4059 = vpop.f32.mrf.mxu0
          %v4060 = vpop.f32.mrf.mxu0
          %v4061 = vadd.f32 %v3725, %v4060
          %v4062 = vpop.f32.mrf.mxu0
          %4063 = vmatprep.mubr.bf16.mxu0 %v3589
          %4064 = vmatmul.mubr.bf16.gmra.mxu0 %v3588
          %v4065 = vpop.f32.mrf.mxu0
          %v4066 = vadd.f32 %v3725, %v4065
          %v4067 = vpop.f32.mrf.mxu0
          %v4068 = vpop.f32.mrf.mxu0
          %v4069 = vadd.f32 %v3725, %v4068
          %v4070 = vpop.f32.mrf.mxu0
          %4071 = vmatprep.mubr.bf16.mxu0 %v3595
          %4072 = vmatmul.mubr.bf16.gmra.mxu0 %v3594
          %v4073 = vpop.f32.mrf.mxu0
          %v4074 = vadd.f32 %v3725, %v4073
          %v4075 = vpop.f32.mrf.mxu0
          %v4076 = vpop.f32.mrf.mxu0
          %v4077 = vadd.f32 %v3725, %v4076
          %v4078 = vpop.f32.mrf.mxu0
          %4079 = vmatprep.mubr.bf16.mxu0 %v3601
          %4080 = vmatmul.mubr.bf16.gmra.mxu0 %v3600
          %v4081 = vpop.f32.mrf.mxu0
          %v4082 = vadd.f32 %v3725, %v4081
          %v4083 = vpop.f32.mrf.mxu0
          %v4084 = vpop.f32.mrf.mxu0
          %v4085 = vadd.f32 %v3725, %v4084
          %v4086 = vpop.f32.mrf.mxu0
          %4087 = vmatprep.mubr.bf16.mxu0 %v3607
          %4088 = vmatmul.mubr.bf16.gmra.mxu0 %v3606
          %v4089 = vpop.f32.mrf.mxu0
          %v4090 = vadd.f32 %v3725, %v4089
          %v4091 = vpop.f32.mrf.mxu0
          %v4092 = vpop.f32.mrf.mxu0
          %v4093 = vadd.f32 %v3725, %v4092
          %v4094 = vpop.f32.mrf.mxu0
          %4095 = vmatprep.mubr.bf16.mxu0 %v3613
          %4096 = vmatmul.mubr.bf16.gmra.mxu0 %v3612
          %v4097 = vpop.f32.mrf.mxu0
          %v4098 = vadd.f32 %v3725, %v4097
          %v4099 = vpop.f32.mrf.mxu0
          %v4100 = vpop.f32.mrf.mxu0
          %v4101 = vadd.f32 %v3725, %v4100
          %v4102 = vpop.f32.mrf.mxu0
          %4103 = vmatprep.mubr.bf16.mxu0 %v3619
          %4104 = vmatmul.mubr.bf16.gmra.mxu0 %v3618
          %v4105 = vpop.f32.mrf.mxu0
          %v4106 = vadd.f32 %v3725, %v4105
          %v4107 = vpop.f32.mrf.mxu0
          %v4108 = vpop.f32.mrf.mxu0
          %v4109 = vadd.f32 %v3725, %v4108
          %v4110 = vpop.f32.mrf.mxu0
          %4111 = vdwg.mxu0
          %4112 = vmatprep.subr.bf16.mxu0 0
          %4113 = vmatpush1.bf16.msra.mxu0 %v3942
          %4114 = vmatprep.subr.bf16.mxu0 0
          %4115 = vmatpush1.bf16.msra.mxu0 %v3941
          %4116 = vmatprep.subr.bf16.mxu0 0
          %4117 = vmatpush1.bf16.msra.mxu0 %v3940
          %4118 = vmatprep.subr.bf16.mxu0 0
          %4119 = vmatpush1.bf16.msra.mxu0 %v3939
          %4120 = vmatprep.subr.bf16.mxu0 0
          %4121 = vmatpush1.bf16.msra.mxu0 %v3938
          %4122 = vmatprep.subr.bf16.mxu0 0
          %4123 = vmatpush1.bf16.msra.mxu0 %v3937
          %4124 = vmatprep.subr.bf16.mxu0 0
          %4125 = vmatpush1.bf16.msra.mxu0 %v3936
          %4126 = vmatprep.subr.bf16.mxu0 0
          %4127 = vmatpush1.bf16.msra.mxu0 %v3935
          %4128 = vmatprep.subr.bf16.mxu0 0
          %4129 = vmatpush2.bf16.msra.mxu0 %v3950
          %4130 = vmatprep.subr.bf16.mxu0 0
          %4131 = vmatpush2.bf16.msra.mxu0 %v3949
          %4132 = vmatprep.subr.bf16.mxu0 0
          %4133 = vmatpush2.bf16.msra.mxu0 %v3948
          %4134 = vmatprep.subr.bf16.mxu0 0
          %4135 = vmatpush2.bf16.msra.mxu0 %v3947
          %4136 = vmatprep.subr.bf16.mxu0 0
          %4137 = vmatpush2.bf16.msra.mxu0 %v3946
          %4138 = vmatprep.subr.bf16.mxu0 0
          %4139 = vmatpush2.bf16.msra.mxu0 %v3945
          %4140 = vmatprep.subr.bf16.mxu0 0
          %4141 = vmatpush2.bf16.msra.mxu0 %v3944
          %4142 = vmatprep.subr.bf16.mxu0 0
          %4143 = vmatpush2.bf16.msra.mxu0 %v3943
          %4144 = vmatprep.mubr.bf16.mxu0 %v3579
          %4145 = vmatmul.mubr.bf16.gmra.mxu0 %v3578
          %v4146 = vpop.f32.mrf.mxu0
          %v4147 = vadd.f32 %v4050, %v4146
          %v4148 = vpop.f32.mrf.mxu0
          %v4149 = vpop.f32.mrf.mxu0
          %v4150 = vadd.f32 %v4053, %v4149
          %v4151 = vpop.f32.mrf.mxu0
          %4152 = vmatprep.mubr.bf16.mxu0 %v3585
          %4153 = vmatmul.mubr.bf16.gmra.mxu0 %v3584
          %v4154 = vpop.f32.mrf.mxu0
          %v4155 = vadd.f32 %v4058, %v4154
          %v4156 = vpop.f32.mrf.mxu0
          %v4157 = vpop.f32.mrf.mxu0
          %v4158 = vadd.f32 %v4061, %v4157
          %v4159 = vpop.f32.mrf.mxu0
          %4160 = vmatprep.mubr.bf16.mxu0 %v3591
          %4161 = vmatmul.mubr.bf16.gmra.mxu0 %v3590
          %v4162 = vpop.f32.mrf.mxu0
          %v4163 = vadd.f32 %v4066, %v4162
          %v4164 = vpop.f32.mrf.mxu0
          %v4165 = vpop.f32.mrf.mxu0
          %v4166 = vadd.f32 %v4069, %v4165
          %v4167 = vpop.f32.mrf.mxu0
          %4168 = vmatprep.mubr.bf16.mxu0 %v3597
          %4169 = vmatmul.mubr.bf16.gmra.mxu0 %v3596
          %v4170 = vpop.f32.mrf.mxu0
          %v4171 = vadd.f32 %v4074, %v4170
          %v4172 = vpop.f32.mrf.mxu0
          %v4173 = vpop.f32.mrf.mxu0
          %v4174 = vadd.f32 %v4077, %v4173
          %v4175 = vpop.f32.mrf.mxu0
          %4176 = vmatprep.mubr.bf16.mxu0 %v3603
          %4177 = vmatmul.mubr.bf16.gmra.mxu0 %v3602
          %v4178 = vpop.f32.mrf.mxu0
          %v4179 = vadd.f32 %v4082, %v4178
          %v4180 = vpop.f32.mrf.mxu0
          %v4181 = vpop.f32.mrf.mxu0
          %v4182 = vadd.f32 %v4085, %v4181
          %v4183 = vpop.f32.mrf.mxu0
          %4184 = vmatprep.mubr.bf16.mxu0 %v3609
          %4185 = vmatmul.mubr.bf16.gmra.mxu0 %v3608
          %v4186 = vpop.f32.mrf.mxu0
          %v4187 = vadd.f32 %v4090, %v4186
          %v4188 = vpop.f32.mrf.mxu0
          %v4189 = vpop.f32.mrf.mxu0
          %v4190 = vadd.f32 %v4093, %v4189
          %v4191 = vpop.f32.mrf.mxu0
          %4192 = vmatprep.mubr.bf16.mxu0 %v3615
          %4193 = vmatmul.mubr.bf16.gmra.mxu0 %v3614
          %v4194 = vpop.f32.mrf.mxu0
          %v4195 = vadd.f32 %v4098, %v4194
          %v4196 = vpop.f32.mrf.mxu0
          %v4197 = vpop.f32.mrf.mxu0
          %v4198 = vadd.f32 %v4101, %v4197
          %v4199 = vpop.f32.mrf.mxu0
          %4200 = vmatprep.mubr.bf16.mxu0 %v3621
          %4201 = vmatmul.mubr.bf16.gmra.mxu0 %v3620
          %v4202 = vpop.f32.mrf.mxu0
          %v4203 = vadd.f32 %v4106, %v4202
          %v4204 = vpop.f32.mrf.mxu0
          %v4205 = vpop.f32.mrf.mxu0
          %v4206 = vadd.f32 %v4109, %v4205
          %v4207 = vpop.f32.mrf.mxu0
          %4208 = vdwg.mxu0
          %4209 = vmatprep.subr.bf16.mxu0 0
          %4210 = vmatpush1.bf16.msra.mxu0 %v3958
          %4211 = vmatprep.subr.bf16.mxu0 0
          %4212 = vmatpush1.bf16.msra.mxu0 %v3957
          %4213 = vmatprep.subr.bf16.mxu0 0
          %4214 = vmatpush1.bf16.msra.mxu0 %v3956
          %4215 = vmatprep.subr.bf16.mxu0 0
          %4216 = vmatpush1.bf16.msra.mxu0 %v3955
          %4217 = vmatprep.subr.bf16.mxu0 0
          %4218 = vmatpush1.bf16.msra.mxu0 %v3954
          %4219 = vmatprep.subr.bf16.mxu0 0
          %4220 = vmatpush1.bf16.msra.mxu0 %v3953
          %4221 = vmatprep.subr.bf16.mxu0 0
          %4222 = vmatpush1.bf16.msra.mxu0 %v3952
          %4223 = vmatprep.subr.bf16.mxu0 0
          %4224 = vmatpush1.bf16.msra.mxu0 %v3951
          %4225 = vmatprep.subr.bf16.mxu0 0
          %4226 = vmatpush2.bf16.msra.mxu0 %v3966
          %4227 = vmatprep.subr.bf16.mxu0 0
          %4228 = vmatpush2.bf16.msra.mxu0 %v3965
          %4229 = vmatprep.subr.bf16.mxu0 0
          %4230 = vmatpush2.bf16.msra.mxu0 %v3964
          %4231 = vmatprep.subr.bf16.mxu0 0
          %4232 = vmatpush2.bf16.msra.mxu0 %v3963
          %4233 = vmatprep.subr.bf16.mxu0 0
          %4234 = vmatpush2.bf16.msra.mxu0 %v3962
          %4235 = vmatprep.subr.bf16.mxu0 0
          %4236 = vmatpush2.bf16.msra.mxu0 %v3961
          %4237 = vmatprep.subr.bf16.mxu0 0
          %4238 = vmatpush2.bf16.msra.mxu0 %v3960
          %4239 = vmatprep.subr.bf16.mxu0 0
          %4240 = vmatpush2.bf16.msra.mxu0 %v3959
          %4241 = vmatprep.mubr.bf16.mxu0 %v3581
          %4242 = vmatmul.mubr.bf16.gmra.mxu0 %v3580
          %v4243 = vpop.f32.mrf.mxu0
          %v4244 = vadd.f32 %v4147, %v4243
          %v4245 = vpop.f32.mrf.mxu0
          %v4246 = vpop.f32.mrf.mxu0
          %v4247 = vadd.f32 %v4150, %v4246
          %v4248 = vpop.f32.mrf.mxu0
          %4249 = vmatprep.mubr.bf16.mxu0 %v3587
          %4250 = vmatmul.mubr.bf16.gmra.mxu0 %v3586
          %v4251 = vpop.f32.mrf.mxu0
          %v4252 = vadd.f32 %v4155, %v4251
          %v4253 = vpop.f32.mrf.mxu0
          %v4254 = vpop.f32.mrf.mxu0
          %v4255 = vadd.f32 %v4158, %v4254
          %v4256 = vpop.f32.mrf.mxu0
          %4257 = vmatprep.mubr.bf16.mxu0 %v3593
          %4258 = vmatmul.mubr.bf16.gmra.mxu0 %v3592
          %v4259 = vpop.f32.mrf.mxu0
          %v4260 = vadd.f32 %v4163, %v4259
          %v4261 = vpop.f32.mrf.mxu0
          %v4262 = vpop.f32.mrf.mxu0
          %v4263 = vadd.f32 %v4166, %v4262
          %v4264 = vpop.f32.mrf.mxu0
          %4265 = vmatprep.mubr.bf16.mxu0 %v3599
          %4266 = vmatmul.mubr.bf16.gmra.mxu0 %v3598
          %v4267 = vpop.f32.mrf.mxu0
          %v4268 = vadd.f32 %v4171, %v4267
          %v4269 = vpop.f32.mrf.mxu0
          %v4270 = vpop.f32.mrf.mxu0
          %v4271 = vadd.f32 %v4174, %v4270
          %v4272 = vpop.f32.mrf.mxu0
          %4273 = vmatprep.mubr.bf16.mxu0 %v3605
          %4274 = vmatmul.mubr.bf16.gmra.mxu0 %v3604
          %v4275 = vpop.f32.mrf.mxu0
          %v4276 = vadd.f32 %v4179, %v4275
          %v4277 = vpop.f32.mrf.mxu0
          %v4278 = vpop.f32.mrf.mxu0
          %v4279 = vadd.f32 %v4182, %v4278
          %v4280 = vpop.f32.mrf.mxu0
          %4281 = vmatprep.mubr.bf16.mxu0 %v3611
          %4282 = vmatmul.mubr.bf16.gmra.mxu0 %v3610
          %v4283 = vpop.f32.mrf.mxu0
          %v4284 = vadd.f32 %v4187, %v4283
          %v4285 = vpop.f32.mrf.mxu0
          %v4286 = vpop.f32.mrf.mxu0
          %v4287 = vadd.f32 %v4190, %v4286
          %v4288 = vpop.f32.mrf.mxu0
          %4289 = vmatprep.mubr.bf16.mxu0 %v3617
          %4290 = vmatmul.mubr.bf16.gmra.mxu0 %v3616
          %v4291 = vpop.f32.mrf.mxu0
          %v4292 = vadd.f32 %v4195, %v4291
          %v4293 = vpop.f32.mrf.mxu0
          %v4294 = vpop.f32.mrf.mxu0
          %v4295 = vadd.f32 %v4198, %v4294
          %v4296 = vpop.f32.mrf.mxu0
          %4297 = vmatprep.mubr.bf16.mxu0 %v3623
          %4298 = vmatmul.mubr.bf16.gmra.mxu0 %v3622
          %v4299 = vpop.f32.mrf.mxu0
          %v4300 = vadd.f32 %v4203, %v4299
          %v4301 = vpop.f32.mrf.mxu0
          %v4302 = vpop.f32.mrf.mxu0
          %v4303 = vadd.f32 %v4206, %v4302
          %v4304 = vpop.f32.mrf.mxu0
          %4305 = vdwg.mxu0
          %4306 = vst [vmem:[%s351] sm:$0xff] %v4244
          %4307 = vst [vmem:[%s351 + $0x8] sm:$0xff] %v4247
          %4308 = vst [vmem:[%s351 + $0x10] sm:$0xff] %v4252
          %4309 = vst [vmem:[%s351 + $0x18] sm:$0xff] %v4255
          %4310 = vst [vmem:[%s351 + $0x20] sm:$0xff] %v4260
          %4311 = vst [vmem:[%s351 + $0x28] sm:$0xff] %v4263
          %4312 = vst [vmem:[%s351 + $0x30] sm:$0xff] %v4268
          %4313 = vst [vmem:[%s351 + $0x38] sm:$0xff] %v4271
          %4314 = vst [vmem:[%s351 + $0x40] sm:$0xff] %v4276
          %4315 = vst [vmem:[%s351 + $0x48] sm:$0xff] %v4279
          %4316 = vst [vmem:[%s351 + $0x50] sm:$0xff] %v4284
          %4317 = vst [vmem:[%s351 + $0x58] sm:$0xff] %v4287
          %4318 = vst [vmem:[%s351 + $0x60] sm:$0xff] %v4292
          %4319 = vst [vmem:[%s351 + $0x68] sm:$0xff] %v4295
          %4320 = vst [vmem:[%s351 + $0x70] sm:$0xff] %v4300
          %4321 = vst [vmem:[%s351 + $0x78] sm:$0xff] %v4303
        $region72: #{auxiliary_head_imagenet.1} parent=47 // pred_fallthru
          _
        %s4322 = smul.u32 %s24, %s25
        %s4323 = ssub.s32 1, %s24
        %s4324 = sadd.s32 %s4322, %s4323
        %s4325 = smul.u32 16, %s4324
        %p4326 = scmp.lt.s32.totalorder %s4325, 31
        %s4327 = scalar_select %p4326, %s4325, 31
        %s4328 = smul.addr %s4327, 8
        %s4329 = scalar_lea.vmem %s7, %s4328
        // Predicated region
        $region73: #{auxiliary_head_imagenet.1} parent=47 // pred_check
          %p4330 = pneg %p208
        $region74: #{auxiliary_head_imagenet.1} parent=47 // pred_check_branch
          %4332 = sbr.rel (%p4330) target = $region76
        $region75: #{auxiliary_head_imagenet.1} parent=47 // pred_region
          %s4333 = smul.u32 %s24, %s25
          %s4334 = ssub.s32 1, %s24
          %s4335 = sadd.s32 %s4333, %s4334
          %s4336 = smul.u32 16, %s4335
        $region76: #{auxiliary_head_imagenet.1} parent=47 // pred_fallthru
          _
      $region48: #{auxiliary_head_imagenet.1} parent=5 // pred_fallthru
        _
      %p4337 = scmp.le.s32.totalorder 2, %s15
      // Predicated region
      $region77: #{auxiliary_head_imagenet.1} parent=5 // pred_check
        %p4338 = pneg %p4337
      $region78: #{auxiliary_head_imagenet.1} parent=5 // pred_check_branch
        %4340 = sbr.rel (%p4338) target = $region80
      $region79: #{auxiliary_head_imagenet.1} parent=5 // pred_region
        %s4341 = ssub.s32 %s15, 2
        // Predicated region
        $region81: #{auxiliary_head_imagenet.1} parent=79 // pred_check
          %p4342 = pneg %p214
        $region82: #{auxiliary_head_imagenet.1} parent=79 // pred_check_branch
          %4344 = sbr.rel (%p4342) target = $region84
        $region83: #{auxiliary_head_imagenet.1} parent=79 // pred_region
          %s4345 = smul.u32 %s26, %s27
          %s4346 = ssub.s32 1, %s26
          %s4347 = sadd.s32 %s4345, %s4346
          %s4348 = smul.u32 16, %s4347
          %p4349 = scmp.lt.s32.totalorder %s4348, 31
          %s4350 = scalar_select %p4349, %s4348, 31
          %s4351 = smul.addr %s4350, 8
          %s4352 = scalar_lea.vmem %s7, %s4351
        $region84: #{auxiliary_head_imagenet.1} parent=79 // pred_fallthru
          _
      $region80: #{auxiliary_head_imagenet.1} parent=5 // pred_fallthru
        _
    $region6: #{auxiliary_head_imagenet.1} parent=1 // loop_footer
      %s19 = sadd.s32 1, %s15
    $region7: #{auxiliary_head_imagenet.1} parent=1 // loop_footer_branch
      %14 = sbr.rel target = $region3
    $region8: #{auxiliary_head_imagenet.1} parent=1 // loop_exit
      _
    %4353 = vsyncpa [#allocation5], 1
    %s4354 = scalar_lea.sflag [#allocation5], 1
    %4355 = vsyncpa %s4354, 1
    %4356 = vsyncpa [#allocation7], 1

</llo_original>
